<compile_context>
chip_gen: v7x
topology: tpu7x:2x2x1
jax: 0.10.0
libtpu: 0.0.40
codegen_flags: <defaults>
</compile_context>

<pallas_src>
import functools

import jax
import jax.numpy as jnp
from jax import lax
from jax.experimental import pallas as pl
from jax.experimental.pallas import tpu as pltpu


# ----------------------------------------------------------------------------
# The fused kernel: conv1 -> pool1 -> conv2 -> conv3 -> fc1 -> fc2
# (pool2 / pool3 are identities on 2x2 maps and are skipped)
# ----------------------------------------------------------------------------
def _fused_forward_kernel(blocks_ref, w1_ref, b1_ref, w2_ref, b2_ref,
                          w3_ref, b3_ref, fc1_ref, fc1b_ref, fc2_ref, fc2b_ref,
                          out_ref, *, tb):
    f32 = jnp.float32
    mxu_dtype = w1_ref.dtype

    # ---- conv1 + bias + ReLU ------------------------------------------------
    # blocks_ref: (9, 9, tb, 64) = 9x9 grid of 4x4 input blocks, feature order
    # (cin, i, j).  conv1 (k=8, s=4, p=3) output position (ho, wo) reads the
    # 2x2 block neighbourhood (ho+a, wo+b), a,b in {0,1}.  Rows of the GEMM are
    # ordered (ho, wo, sample) -> every slab below is sublane-aligned (tb % 8 == 0).
    blk = [[blocks_ref[p, q].astype(f32) for q in range(9)] for p in range(9)]

    acc = jnp.zeros((64 * tb, 32), f32)
    for a in range(2):
        for b in range(2):
            s_ab = jnp.concatenate(
                [blk[a + ho][b + wo] for ho in range(8) for wo in range(8)],
                axis=0)                                        # (64*tb, 64)
            acc = acc + jnp.dot(s_ab.astype(mxu_dtype), w1_ref[a, b],
                                preferred_element_type=f32)
    a1 = jnp.maximum(acc + b1_ref[...], 0.0)                   # (64*tb, 32) f32

    # ---- pool1: 2x2 / stride 2, 8x8 -> 4x4 (VPU maxima on aligned slabs) ----
    def slab(h, w):
        k = (h * 8 + w) * tb
        return a1[k:k + tb, :]                                 # (tb, 32)

    p1 = [[jnp.maximum(
              jnp.maximum(slab(2 * ph, 2 * pw), slab(2 * ph, 2 * pw + 1)),
              jnp.maximum(slab(2 * ph + 1, 2 * pw), slab(2 * ph + 1, 2 * pw + 1)))
           for pw in range(4)] for ph in range(4)]             # 4x4 of (tb, 32)

    # ---- conv2 + bias + ReLU: ONE (tb, 512) x (512, 256) GEMM ---------------
    # K = full flattened 4x4x32 pooled map (order r, c, cin); output lanes =
    # (ho, wo, cout) over the 2x2 output; zero-padding taps are zero rows of w2.
    patch2 = jnp.concatenate([p1[r][c] for r in range(4) for c in range(4)],
                             axis=1)                           # (tb, 512)
    h2 = jnp.maximum(jnp.dot(patch2.astype(mxu_dtype), w2_ref[...],
                             preferred_element_type=f32) + b2_ref[...], 0.0)
    # pool2 (k=2, s=2, pad=1) on a 2x2 map is the identity -> nothing to do.

    # ---- conv3 + bias + ReLU: ONE (tb, 256) x (256, 256) GEMM ---------------
    # h2's lane order (position, channel) is exactly conv3's patch order.
    h3 = jnp.maximum(jnp.dot(h2.astype(mxu_dtype), w3_ref[...],
                             preferred_element_type=f32) + b3_ref[...], 0.0)
    # pool3 (k=2, s=2, pad=1) on a 2x2 map is the identity -> nothing to do.

    # ---- fc1 + ReLU, fc2 (fc1 weight pre-permuted from NCHW flatten) --------
    z = jnp.maximum(jnp.dot(h3.astype(mxu_dtype), fc1_ref[...],
                            preferred_element_type=f32) + fc1b_ref[...], 0.0)
    out = jnp.dot(z.astype(mxu_dtype), fc2_ref[...],
                  preferred_element_type=f32) + fc2b_ref[...]
    out_ref[...] = out.astype(out_ref.dtype)                   # (tb, 2)


# ----------------------------------------------------------------------------
# One-time weight re-layout into GEMM-ready (bf16) matrices
# ----------------------------------------------------------------------------
def prepare_params(params, gemm_dtype=jnp.bfloat16):
    f32 = jnp.float32

    # conv1: split the 8x8 kernel into a 2x2 grid of 4x4 quadrants -> per
    # quadrant (a, b) a (64, 32) GEMM weight with K order (cin, i, j).
    w1 = jnp.transpose(params["conv1_w"].astype(f32), (1, 2, 3, 0))  # (c,kh,kw,oc)
    w1 = w1.reshape(4, 2, 4, 2, 4, 32)                               # (c,a,i,b,j,oc)
    w1 = jnp.transpose(w1, (1, 3, 0, 2, 4, 5)).reshape(2, 2, 64, 32)

    # conv2 (k=4, s=2, p=1) on a 4x4 map as ONE GEMM:
    #   rows  = (r, c, cin) over the full 4x4x32 input,
    #   cols  = (ho, wo, cout) over the 2x2x64 output,
    #   zero-padding taps -> zero rows.
    w2 = params["conv2_w"].astype(f32)                               # (64,32,4,4)
    w2_big = jnp.zeros((16 * 32, 4 * 64), f32)
    for ho in range(2):
        for wo in range(2):
            for i in range(4):
                for j in range(4):
                    r, c = 2 * ho - 1 + i, 2 * wo - 1 + j
                    if 0 <= r < 4 and 0 <= c < 4:
                        w2_big = w2_big.at[
                            (r * 4 + c) * 32:(r * 4 + c + 1) * 32,
                            (ho * 2 + wo) * 64:(ho * 2 + wo + 1) * 64,
                        ].set(w2[:, :, i, j].T)

    # conv3 (k=3, s=1, p=1) on a 2x2 map as ONE dense GEMM.
    w3 = params["conv3_w"].astype(f32)                               # (64,64,3,3)
    w3_big = jnp.zeros((4 * 64, 4 * 64), f32)
    for ho in range(2):
        for wo in range(2):
            for r in range(2):
                for c in range(2):
                    i, j = r - ho + 1, c - wo + 1
                    w3_big = w3_big.at[
                        (r * 2 + c) * 64:(r * 2 + c + 1) * 64,
                        (ho * 2 + wo) * 64:(ho * 2 + wo + 1) * 64,
                    ].set(w3[:, :, i, j].T)

    # fc1 consumes PyTorch's NCHW flatten (c*4 + h*2 + w); re-index to our
    # (h*2 + w)*64 + c lane order.
    fc1 = params["fc1_w"].astype(f32).reshape(128, 64, 2, 2)         # (out,c,h,w)
    fc1_big = jnp.transpose(fc1, (2, 3, 1, 0)).reshape(256, 128)

    return {
        "w1": w1.astype(gemm_dtype),                                 # (2,2,64,32)
        "b1": params["conv1_b"].astype(f32).reshape(1, 32),
        "w2": w2_big.astype(gemm_dtype),                             # (512,256)
        "b2": jnp.tile(params["conv2_b"].astype(f32), 4).reshape(1, 256),
        "w3": w3_big.astype(gemm_dtype),                             # (256,256)
        "b3": jnp.tile(params["conv3_b"].astype(f32), 4).reshape(1, 256),
        "fc1": fc1_big.astype(gemm_dtype),                           # (256,128)
        "fc1b": params["fc1_b"].astype(f32).reshape(1, 128),
        "fc2": params["fc2_w"].astype(f32).T.astype(gemm_dtype),     # (128,2)
        "fc2b": params["fc2_b"].astype(f32).reshape(1, 2),
    }


# ----------------------------------------------------------------------------
# Forward wrapper: pad/bucket the batch, build the block layout, ONE pallas_call
# ----------------------------------------------------------------------------
def fused_forward(prep, x, *, batch_tile=8):
    n = x.shape[0]
    assert x.shape[1:] == (4, 32, 32), x.shape  # fc1 requires a 2x2x64 tail

    # Sublane-aligned batch bucketing: pad to a multiple of batch_tile so every
    # (batch_tile, C) slab in the kernel is whole sublane groups and batch-size
    # changes only retrace per bucket.  For large batches raise batch_tile
    # (e.g. 64-256) to better fill the MXU / v7x's 32 MiB scoped VMEM.
    n_pad = batch_tile * ((n + batch_tile - 1) // batch_tile)
    if n_pad != n:
        x = jnp.pad(x, ((0, n_pad - n), (0, 0), (0, 0), (0, 0)))

    # conv1 "block" layout: zero-pad H/W to 36 (pads (3,1)) and regroup into a
    # 9x9 grid of 4x4 blocks; per-block feature order is (cin, i, j).  This is
    # pure data movement on input-sized data (no im2col inflation).
    xp = jnp.pad(x, ((0, 0), (0, 0), (3, 1), (3, 1)))                # (N,4,36,36)
    blocks = xp.reshape(n_pad, 4, 9, 4, 9, 4)                        # (N,c,P,i,Q,j)
    blocks = jnp.transpose(blocks, (2, 4, 0, 1, 3, 5)).reshape(9, 9, n_pad, 64)
    blocks = blocks.astype(prep["w1"].dtype)                         # bf16 DMA

    grid = (n_pad // batch_tile,)
    out = pl.pallas_call(
        functools.partial(_fused_forward_kernel, tb=batch_tile),
        out_shape=jax.ShapeDtypeStruct((n_pad, 2), jnp.float32),
        grid_spec=pltpu.PrefetchScalarGridSpec(
            num_scalar_prefetch=0,
            grid=grid,
            in_specs=[
                # batch-tiled input blocks
                pl.BlockSpec((9, 9, batch_tile, 64), lambda i: (0, 0, i, 0)),
                # weights/biases: constant index maps -> stay VMEM-resident
                pl.BlockSpec(prep["w1"].shape, lambda i: (0, 0, 0, 0)),
                pl.BlockSpec(prep["b1"].shape, lambda i: (0, 0)),
                pl.BlockSpec(prep["w2"].shape, lambda i: (0, 0)),
                pl.BlockSpec(prep["b2"].shape, lambda i: (0, 0)),
                pl.BlockSpec(prep["w3"].shape, lambda i: (0, 0)),
                pl.BlockSpec(prep["b3"].shape, lambda i: (0, 0)),
                pl.BlockSpec(prep["fc1"].shape, lambda i: (0, 0)),
                pl.BlockSpec(prep["fc1b"].shape, lambda i: (0, 0)),
                pl.BlockSpec(prep["fc2"].shape, lambda i: (0, 0)),
                pl.BlockSpec(prep["fc2b"].shape, lambda i: (0, 0)),
            ],
            out_specs=pl.BlockSpec((batch_tile, 2), lambda i: (i, 0)),
        ),
        compiler_params=pltpu.CompilerParams(
            dimension_semantics=("parallel",),
            vmem_limit_bytes=32 * 1024 * 1024),
    )(blocks, prep["w1"], prep["b1"], prep["w2"], prep["b2"],
      prep["w3"], prep["b3"], prep["fc1"], prep["fc1b"],
      prep["fc2"], prep["fc2b"])
    return out[:n]


def network_forward(params, x):
    """Convenience entry point taking raw (PyTorch-layout) parameters."""
    return fused_forward(prepare_params(params), x)


# ----------------------------------------------------------------------------
# Pure-JAX reference (numerical verification)
# ----------------------------------------------------------------------------
def reference_forward(params, x):
    def conv(x, w, b, stride, pad):
        out = lax.conv_general_dilated(
            x, w, (stride, stride), [(pad, pad), (pad, pad)],
            dimension_numbers=("NCHW", "OIHW", "NCHW"))
        return out + b.reshape(1, -1, 1, 1)

    def pool(x, pad):
        return lax.reduce_window(
            x, -jnp.inf, lax.max, (1, 1, 2, 2), (1, 1, 2, 2),
            [(0, 0), (0, 0), (pad, pad), (pad, pad)])

    x = jax.nn.relu(conv(x, params["conv1_w"], params["conv1_b"], 4, 3))
    x = pool(x, 0)
    x = jax.nn.relu(conv(x, params["conv2_w"], params["conv2_b"], 2, 1))
    x = pool(x, 1)
    x = jax.nn.relu(conv(x, params["conv3_w"], params["conv3_b"], 1, 1))
    x = pool(x, 1)
    x = x.reshape(x.shape[0], -1)
    x = jax.nn.relu(x @ params["fc1_w"].T + params["fc1_b"])
    return x @ params["fc2_w"].T + params["fc2_b"]


# ----------------------------------------------------------------------------
# Deterministic parameter init (PyTorch-style uniform(-1/sqrt(fan_in), ..))
# ----------------------------------------------------------------------------
def init_params(key):
    def uni(k, shape, fan_in):
        bound = 1.0 / jnp.sqrt(fan_in)
        return jax.random.uniform(k, shape, jnp.float32, -bound, bound)

    ks = jax.random.split(key, 10)
    return {
        "conv1_w": uni(ks[0], (32, 4, 8, 8), 4 * 8 * 8),
        "conv1_b": uni(ks[1], (32,), 4 * 8 * 8),
        "conv2_w": uni(ks[2], (64, 32, 4, 4), 32 * 4 * 4),
        "conv2_b": uni(ks[3], (64,), 32 * 4 * 4),
        "conv3_w": uni(ks[4], (64, 64, 3, 3), 64 * 3 * 3),
        "conv3_b": uni(ks[5], (64,), 64 * 3 * 3),
        "fc1_w": uni(ks[6], (128, 256), 256),
        "fc1_b": uni(ks[7], (128,), 256),
        "fc2_w": uni(ks[8], (2, 128), 128),
        "fc2_b": uni(ks[9], (2,), 128),
    }


if __name__ == "__main__":
    key = jax.random.PRNGKey(0)
    kp, kx = jax.random.split(key)
    params = init_params(kp)

    # Spatial size must be 32x32 so the conv/pool stack ends at 2x2x64
    # (fc1.in_features == 256).  Batch 2, channels 4.
    x = jax.random.normal(kx, (2, 4, 32, 32), jnp.float32)

    prep = prepare_params(params)                  # one-time weight re-layout
    fwd = jax.jit(fused_forward)
    out = jax.block_until_ready(fwd(prep, x))

    ref = reference_forward(params, x)
    assert out.shape == (2, 2), out.shape
    # GEMM operands are bf16 (MXU-native); accumulation/elementwise are f32,
    # so compare against the f32 reference at bf16-appropriate tolerance.
    assert jnp.allclose(out, ref, atol=2e-2, rtol=2e-2), (out, ref)

    print("KERNEL_OK")
</pallas_src>

<mosaic_0001>
module attributes {stable_mosaic.version = 11 : i64} {
  func.func @_fused_forward_kernel(%arg0: i32, %arg1: memref<9x9x8x64xbf16, #tpu.memory_space<vmem>>, %arg2: memref<2x2x64x32xbf16, #tpu.memory_space<vmem>>, %arg3: memref<1x32xf32, #tpu.memory_space<vmem>>, %arg4: memref<512x256xbf16, #tpu.memory_space<vmem>>, %arg5: memref<1x256xf32, #tpu.memory_space<vmem>>, %arg6: memref<256x256xbf16, #tpu.memory_space<vmem>>, %arg7: memref<1x256xf32, #tpu.memory_space<vmem>>, %arg8: memref<256x128xbf16, #tpu.memory_space<vmem>>, %arg9: memref<1x128xf32, #tpu.memory_space<vmem>>, %arg10: memref<128x2xbf16, #tpu.memory_space<vmem>>, %arg11: memref<1x2xf32, #tpu.memory_space<vmem>>, %arg12: memref<8x2xf32, #tpu.memory_space<vmem>>) attributes {dimension_semantics = [#tpu.dimension_semantics<parallel>], iteration_bounds = array<i64: 1>, scalar_prefetch = 0 : i64, scratch_operands = 0 : i64, tpu.core_type = #tpu.core_type<tc>, window_params = [{transform_indices = @transform_0, window_bounds = array<i64: 9, 9, 8, 64>}, {pipeline_mode = #tpu.pipeline_mode<synchronous>, transform_indices = @transform_1, window_bounds = array<i64: 2, 2, 64, 32>}, {pipeline_mode = #tpu.pipeline_mode<synchronous>, transform_indices = @transform_2, window_bounds = array<i64: 1, 32>}, {pipeline_mode = #tpu.pipeline_mode<synchronous>, transform_indices = @transform_3, window_bounds = array<i64: 512, 256>}, {pipeline_mode = #tpu.pipeline_mode<synchronous>, transform_indices = @transform_4, window_bounds = array<i64: 1, 256>}, {pipeline_mode = #tpu.pipeline_mode<synchronous>, transform_indices = @transform_5, window_bounds = array<i64: 256, 256>}, {pipeline_mode = #tpu.pipeline_mode<synchronous>, transform_indices = @transform_6, window_bounds = array<i64: 1, 256>}, {pipeline_mode = #tpu.pipeline_mode<synchronous>, transform_indices = @transform_7, window_bounds = array<i64: 256, 128>}, {pipeline_mode = #tpu.pipeline_mode<synchronous>, transform_indices = @transform_8, window_bounds = array<i64: 1, 128>}, {pipeline_mode = #tpu.pipeline_mode<synchronous>, transform_indices = @transform_9, window_bounds = array<i64: 128, 2>}, {pipeline_mode = #tpu.pipeline_mode<synchronous>, transform_indices = @transform_10, window_bounds = array<i64: 1, 2>}, {transform_indices = @transform_11, window_bounds = array<i64: 8, 2>}]} {
    %c0 = arith.constant 0 : index
    %c0_0 = arith.constant 0 : index
    %c0_1 = arith.constant 0 : index
    %c0_2 = arith.constant 0 : index
    %0 = vector.load %arg1[%c0, %c0_0, %c0_1, %c0_2] : memref<9x9x8x64xbf16, #tpu.memory_space<vmem>>, vector<1x1x8x64xbf16>
    %1 = vector.shape_cast %0 : vector<1x1x8x64xbf16> to vector<8x64xbf16>
    %2 = arith.extf %1 : vector<8x64xbf16> to vector<8x64xf32>
    %c0_3 = arith.constant 0 : index
    %c1 = arith.constant 1 : index
    %c0_4 = arith.constant 0 : index
    %c0_5 = arith.constant 0 : index
    %3 = vector.load %arg1[%c0_3, %c1, %c0_4, %c0_5] : memref<9x9x8x64xbf16, #tpu.memory_space<vmem>>, vector<1x1x8x64xbf16>
    %4 = vector.shape_cast %3 : vector<1x1x8x64xbf16> to vector<8x64xbf16>
    %5 = arith.extf %4 : vector<8x64xbf16> to vector<8x64xf32>
    %c0_6 = arith.constant 0 : index
    %c2 = arith.constant 2 : index
    %c0_7 = arith.constant 0 : index
    %c0_8 = arith.constant 0 : index
    %6 = vector.load %arg1[%c0_6, %c2, %c0_7, %c0_8] : memref<9x9x8x64xbf16, #tpu.memory_space<vmem>>, vector<1x1x8x64xbf16>
    %7 = vector.shape_cast %6 : vector<1x1x8x64xbf16> to vector<8x64xbf16>
    %8 = arith.extf %7 : vector<8x64xbf16> to vector<8x64xf32>
    %c0_9 = arith.constant 0 : index
    %c3 = arith.constant 3 : index
    %c0_10 = arith.constant 0 : index
    %c0_11 = arith.constant 0 : index
    %9 = vector.load %arg1[%c0_9, %c3, %c0_10, %c0_11] : memref<9x9x8x64xbf16, #tpu.memory_space<vmem>>, vector<1x1x8x64xbf16>
    %10 = vector.shape_cast %9 : vector<1x1x8x64xbf16> to vector<8x64xbf16>
    %11 = arith.extf %10 : vector<8x64xbf16> to vector<8x64xf32>
    %c0_12 = arith.constant 0 : index
    %c4 = arith.constant 4 : index
    %c0_13 = arith.constant 0 : index
    %c0_14 = arith.constant 0 : index
    %12 = vector.load %arg1[%c0_12, %c4, %c0_13, %c0_14] : memref<9x9x8x64xbf16, #tpu.memory_space<vmem>>, vector<1x1x8x64xbf16>
    %13 = vector.shape_cast %12 : vector<1x1x8x64xbf16> to vector<8x64xbf16>
    %14 = arith.extf %13 : vector<8x64xbf16> to vector<8x64xf32>
    %c0_15 = arith.constant 0 : index
    %c5 = arith.constant 5 : index
    %c0_16 = arith.constant 0 : index
    %c0_17 = arith.constant 0 : index
    %15 = vector.load %arg1[%c0_15, %c5, %c0_16, %c0_17] : memref<9x9x8x64xbf16, #tpu.memory_space<vmem>>, vector<1x1x8x64xbf16>
    %16 = vector.shape_cast %15 : vector<1x1x8x64xbf16> to vector<8x64xbf16>
    %17 = arith.extf %16 : vector<8x64xbf16> to vector<8x64xf32>
    %c0_18 = arith.constant 0 : index
    %c6 = arith.constant 6 : index
    %c0_19 = arith.constant 0 : index
    %c0_20 = arith.constant 0 : index
    %18 = vector.load %arg1[%c0_18, %c6, %c0_19, %c0_20] : memref<9x9x8x64xbf16, #tpu.memory_space<vmem>>, vector<1x1x8x64xbf16>
    %19 = vector.shape_cast %18 : vector<1x1x8x64xbf16> to vector<8x64xbf16>
    %20 = arith.extf %19 : vector<8x64xbf16> to vector<8x64xf32>
    %c0_21 = arith.constant 0 : index
    %c7 = arith.constant 7 : index
    %c0_22 = arith.constant 0 : index
    %c0_23 = arith.constant 0 : index
    %21 = vector.load %arg1[%c0_21, %c7, %c0_22, %c0_23] : memref<9x9x8x64xbf16, #tpu.memory_space<vmem>>, vector<1x1x8x64xbf16>
    %22 = vector.shape_cast %21 : vector<1x1x8x64xbf16> to vector<8x64xbf16>
    %23 = arith.extf %22 : vector<8x64xbf16> to vector<8x64xf32>
    %c0_24 = arith.constant 0 : index
    %c8 = arith.constant 8 : index
    %c0_25 = arith.constant 0 : index
    %c0_26 = arith.constant 0 : index
    %24 = vector.load %arg1[%c0_24, %c8, %c0_25, %c0_26] : memref<9x9x8x64xbf16, #tpu.memory_space<vmem>>, vector<1x1x8x64xbf16>
    %25 = vector.shape_cast %24 : vector<1x1x8x64xbf16> to vector<8x64xbf16>
    %26 = arith.extf %25 : vector<8x64xbf16> to vector<8x64xf32>
    %c1_27 = arith.constant 1 : index
    %c0_28 = arith.constant 0 : index
    %c0_29 = arith.constant 0 : index
    %c0_30 = arith.constant 0 : index
    %27 = vector.load %arg1[%c1_27, %c0_28, %c0_29, %c0_30] : memref<9x9x8x64xbf16, #tpu.memory_space<vmem>>, vector<1x1x8x64xbf16>
    %28 = vector.shape_cast %27 : vector<1x1x8x64xbf16> to vector<8x64xbf16>
    %29 = arith.extf %28 : vector<8x64xbf16> to vector<8x64xf32>
    %c1_31 = arith.constant 1 : index
    %c1_32 = arith.constant 1 : index
    %c0_33 = arith.constant 0 : index
    %c0_34 = arith.constant 0 : index
    %30 = vector.load %arg1[%c1_31, %c1_32, %c0_33, %c0_34] : memref<9x9x8x64xbf16, #tpu.memory_space<vmem>>, vector<1x1x8x64xbf16>
    %31 = vector.shape_cast %30 : vector<1x1x8x64xbf16> to vector<8x64xbf16>
    %32 = arith.extf %31 : vector<8x64xbf16> to vector<8x64xf32>
    %c1_35 = arith.constant 1 : index
    %c2_36 = arith.constant 2 : index
    %c0_37 = arith.constant 0 : index
    %c0_38 = arith.constant 0 : index
    %33 = vector.load %arg1[%c1_35, %c2_36, %c0_37, %c0_38] : memref<9x9x8x64xbf16, #tpu.memory_space<vmem>>, vector<1x1x8x64xbf16>
    %34 = vector.shape_cast %33 : vector<1x1x8x64xbf16> to vector<8x64xbf16>
    %35 = arith.extf %34 : vector<8x64xbf16> to vector<8x64xf32>
    %c1_39 = arith.constant 1 : index
    %c3_40 = arith.constant 3 : index
    %c0_41 = arith.constant 0 : index
    %c0_42 = arith.constant 0 : index
    %36 = vector.load %arg1[%c1_39, %c3_40, %c0_41, %c0_42] : memref<9x9x8x64xbf16, #tpu.memory_space<vmem>>, vector<1x1x8x64xbf16>
    %37 = vector.shape_cast %36 : vector<1x1x8x64xbf16> to vector<8x64xbf16>
    %38 = arith.extf %37 : vector<8x64xbf16> to vector<8x64xf32>
    %c1_43 = arith.constant 1 : index
    %c4_44 = arith.constant 4 : index
    %c0_45 = arith.constant 0 : index
    %c0_46 = arith.constant 0 : index
    %39 = vector.load %arg1[%c1_43, %c4_44, %c0_45, %c0_46] : memref<9x9x8x64xbf16, #tpu.memory_space<vmem>>, vector<1x1x8x64xbf16>
    %40 = vector.shape_cast %39 : vector<1x1x8x64xbf16> to vector<8x64xbf16>
    %41 = arith.extf %40 : vector<8x64xbf16> to vector<8x64xf32>
    %c1_47 = arith.constant 1 : index
    %c5_48 = arith.constant 5 : index
    %c0_49 = arith.constant 0 : index
    %c0_50 = arith.constant 0 : index
    %42 = vector.load %arg1[%c1_47, %c5_48, %c0_49, %c0_50] : memref<9x9x8x64xbf16, #tpu.memory_space<vmem>>, vector<1x1x8x64xbf16>
    %43 = vector.shape_cast %42 : vector<1x1x8x64xbf16> to vector<8x64xbf16>
    %44 = arith.extf %43 : vector<8x64xbf16> to vector<8x64xf32>
    %c1_51 = arith.constant 1 : index
    %c6_52 = arith.constant 6 : index
    %c0_53 = arith.constant 0 : index
    %c0_54 = arith.constant 0 : index
    %45 = vector.load %arg1[%c1_51, %c6_52, %c0_53, %c0_54] : memref<9x9x8x64xbf16, #tpu.memory_space<vmem>>, vector<1x1x8x64xbf16>
    %46 = vector.shape_cast %45 : vector<1x1x8x64xbf16> to vector<8x64xbf16>
    %47 = arith.extf %46 : vector<8x64xbf16> to vector<8x64xf32>
    %c1_55 = arith.constant 1 : index
    %c7_56 = arith.constant 7 : index
    %c0_57 = arith.constant 0 : index
    %c0_58 = arith.constant 0 : index
    %48 = vector.load %arg1[%c1_55, %c7_56, %c0_57, %c0_58] : memref<9x9x8x64xbf16, #tpu.memory_space<vmem>>, vector<1x1x8x64xbf16>
    %49 = vector.shape_cast %48 : vector<1x1x8x64xbf16> to vector<8x64xbf16>
    %50 = arith.extf %49 : vector<8x64xbf16> to vector<8x64xf32>
    %c1_59 = arith.constant 1 : index
    %c8_60 = arith.constant 8 : index
    %c0_61 = arith.constant 0 : index
    %c0_62 = arith.constant 0 : index
    %51 = vector.load %arg1[%c1_59, %c8_60, %c0_61, %c0_62] : memref<9x9x8x64xbf16, #tpu.memory_space<vmem>>, vector<1x1x8x64xbf16>
    %52 = vector.shape_cast %51 : vector<1x1x8x64xbf16> to vector<8x64xbf16>
    %53 = arith.extf %52 : vector<8x64xbf16> to vector<8x64xf32>
    %c2_63 = arith.constant 2 : index
    %c0_64 = arith.constant 0 : index
    %c0_65 = arith.constant 0 : index
    %c0_66 = arith.constant 0 : index
    %54 = vector.load %arg1[%c2_63, %c0_64, %c0_65, %c0_66] : memref<9x9x8x64xbf16, #tpu.memory_space<vmem>>, vector<1x1x8x64xbf16>
    %55 = vector.shape_cast %54 : vector<1x1x8x64xbf16> to vector<8x64xbf16>
    %56 = arith.extf %55 : vector<8x64xbf16> to vector<8x64xf32>
    %c2_67 = arith.constant 2 : index
    %c1_68 = arith.constant 1 : index
    %c0_69 = arith.constant 0 : index
    %c0_70 = arith.constant 0 : index
    %57 = vector.load %arg1[%c2_67, %c1_68, %c0_69, %c0_70] : memref<9x9x8x64xbf16, #tpu.memory_space<vmem>>, vector<1x1x8x64xbf16>
    %58 = vector.shape_cast %57 : vector<1x1x8x64xbf16> to vector<8x64xbf16>
    %59 = arith.extf %58 : vector<8x64xbf16> to vector<8x64xf32>
    %c2_71 = arith.constant 2 : index
    %c2_72 = arith.constant 2 : index
    %c0_73 = arith.constant 0 : index
    %c0_74 = arith.constant 0 : index
    %60 = vector.load %arg1[%c2_71, %c2_72, %c0_73, %c0_74] : memref<9x9x8x64xbf16, #tpu.memory_space<vmem>>, vector<1x1x8x64xbf16>
    %61 = vector.shape_cast %60 : vector<1x1x8x64xbf16> to vector<8x64xbf16>
    %62 = arith.extf %61 : vector<8x64xbf16> to vector<8x64xf32>
    %c2_75 = arith.constant 2 : index
    %c3_76 = arith.constant 3 : index
    %c0_77 = arith.constant 0 : index
    %c0_78 = arith.constant 0 : index
    %63 = vector.load %arg1[%c2_75, %c3_76, %c0_77, %c0_78] : memref<9x9x8x64xbf16, #tpu.memory_space<vmem>>, vector<1x1x8x64xbf16>
    %64 = vector.shape_cast %63 : vector<1x1x8x64xbf16> to vector<8x64xbf16>
    %65 = arith.extf %64 : vector<8x64xbf16> to vector<8x64xf32>
    %c2_79 = arith.constant 2 : index
    %c4_80 = arith.constant 4 : index
    %c0_81 = arith.constant 0 : index
    %c0_82 = arith.constant 0 : index
    %66 = vector.load %arg1[%c2_79, %c4_80, %c0_81, %c0_82] : memref<9x9x8x64xbf16, #tpu.memory_space<vmem>>, vector<1x1x8x64xbf16>
    %67 = vector.shape_cast %66 : vector<1x1x8x64xbf16> to vector<8x64xbf16>
    %68 = arith.extf %67 : vector<8x64xbf16> to vector<8x64xf32>
    %c2_83 = arith.constant 2 : index
    %c5_84 = arith.constant 5 : index
    %c0_85 = arith.constant 0 : index
    %c0_86 = arith.constant 0 : index
    %69 = vector.load %arg1[%c2_83, %c5_84, %c0_85, %c0_86] : memref<9x9x8x64xbf16, #tpu.memory_space<vmem>>, vector<1x1x8x64xbf16>
    %70 = vector.shape_cast %69 : vector<1x1x8x64xbf16> to vector<8x64xbf16>
    %71 = arith.extf %70 : vector<8x64xbf16> to vector<8x64xf32>
    %c2_87 = arith.constant 2 : index
    %c6_88 = arith.constant 6 : index
    %c0_89 = arith.constant 0 : index
    %c0_90 = arith.constant 0 : index
    %72 = vector.load %arg1[%c2_87, %c6_88, %c0_89, %c0_90] : memref<9x9x8x64xbf16, #tpu.memory_space<vmem>>, vector<1x1x8x64xbf16>
    %73 = vector.shape_cast %72 : vector<1x1x8x64xbf16> to vector<8x64xbf16>
    %74 = arith.extf %73 : vector<8x64xbf16> to vector<8x64xf32>
    %c2_91 = arith.constant 2 : index
    %c7_92 = arith.constant 7 : index
    %c0_93 = arith.constant 0 : index
    %c0_94 = arith.constant 0 : index
    %75 = vector.load %arg1[%c2_91, %c7_92, %c0_93, %c0_94] : memref<9x9x8x64xbf16, #tpu.memory_space<vmem>>, vector<1x1x8x64xbf16>
    %76 = vector.shape_cast %75 : vector<1x1x8x64xbf16> to vector<8x64xbf16>
    %77 = arith.extf %76 : vector<8x64xbf16> to vector<8x64xf32>
    %c2_95 = arith.constant 2 : index
    %c8_96 = arith.constant 8 : index
    %c0_97 = arith.constant 0 : index
    %c0_98 = arith.constant 0 : index
    %78 = vector.load %arg1[%c2_95, %c8_96, %c0_97, %c0_98] : memref<9x9x8x64xbf16, #tpu.memory_space<vmem>>, vector<1x1x8x64xbf16>
    %79 = vector.shape_cast %78 : vector<1x1x8x64xbf16> to vector<8x64xbf16>
    %80 = arith.extf %79 : vector<8x64xbf16> to vector<8x64xf32>
    %c3_99 = arith.constant 3 : index
    %c0_100 = arith.constant 0 : index
    %c0_101 = arith.constant 0 : index
    %c0_102 = arith.constant 0 : index
    %81 = vector.load %arg1[%c3_99, %c0_100, %c0_101, %c0_102] : memref<9x9x8x64xbf16, #tpu.memory_space<vmem>>, vector<1x1x8x64xbf16>
    %82 = vector.shape_cast %81 : vector<1x1x8x64xbf16> to vector<8x64xbf16>
    %83 = arith.extf %82 : vector<8x64xbf16> to vector<8x64xf32>
    %c3_103 = arith.constant 3 : index
    %c1_104 = arith.constant 1 : index
    %c0_105 = arith.constant 0 : index
    %c0_106 = arith.constant 0 : index
    %84 = vector.load %arg1[%c3_103, %c1_104, %c0_105, %c0_106] : memref<9x9x8x64xbf16, #tpu.memory_space<vmem>>, vector<1x1x8x64xbf16>
    %85 = vector.shape_cast %84 : vector<1x1x8x64xbf16> to vector<8x64xbf16>
    %86 = arith.extf %85 : vector<8x64xbf16> to vector<8x64xf32>
    %c3_107 = arith.constant 3 : index
    %c2_108 = arith.constant 2 : index
    %c0_109 = arith.constant 0 : index
    %c0_110 = arith.constant 0 : index
    %87 = vector.load %arg1[%c3_107, %c2_108, %c0_109, %c0_110] : memref<9x9x8x64xbf16, #tpu.memory_space<vmem>>, vector<1x1x8x64xbf16>
    %88 = vector.shape_cast %87 : vector<1x1x8x64xbf16> to vector<8x64xbf16>
    %89 = arith.extf %88 : vector<8x64xbf16> to vector<8x64xf32>
    %c3_111 = arith.constant 3 : index
    %c3_112 = arith.constant 3 : index
    %c0_113 = arith.constant 0 : index
    %c0_114 = arith.constant 0 : index
    %90 = vector.load %arg1[%c3_111, %c3_112, %c0_113, %c0_114] : memref<9x9x8x64xbf16, #tpu.memory_space<vmem>>, vector<1x1x8x64xbf16>
    %91 = vector.shape_cast %90 : vector<1x1x8x64xbf16> to vector<8x64xbf16>
    %92 = arith.extf %91 : vector<8x64xbf16> to vector<8x64xf32>
    %c3_115 = arith.constant 3 : index
    %c4_116 = arith.constant 4 : index
    %c0_117 = arith.constant 0 : index
    %c0_118 = arith.constant 0 : index
    %93 = vector.load %arg1[%c3_115, %c4_116, %c0_117, %c0_118] : memref<9x9x8x64xbf16, #tpu.memory_space<vmem>>, vector<1x1x8x64xbf16>
    %94 = vector.shape_cast %93 : vector<1x1x8x64xbf16> to vector<8x64xbf16>
    %95 = arith.extf %94 : vector<8x64xbf16> to vector<8x64xf32>
    %c3_119 = arith.constant 3 : index
    %c5_120 = arith.constant 5 : index
    %c0_121 = arith.constant 0 : index
    %c0_122 = arith.constant 0 : index
    %96 = vector.load %arg1[%c3_119, %c5_120, %c0_121, %c0_122] : memref<9x9x8x64xbf16, #tpu.memory_space<vmem>>, vector<1x1x8x64xbf16>
    %97 = vector.shape_cast %96 : vector<1x1x8x64xbf16> to vector<8x64xbf16>
    %98 = arith.extf %97 : vector<8x64xbf16> to vector<8x64xf32>
    %c3_123 = arith.constant 3 : index
    %c6_124 = arith.constant 6 : index
    %c0_125 = arith.constant 0 : index
    %c0_126 = arith.constant 0 : index
    %99 = vector.load %arg1[%c3_123, %c6_124, %c0_125, %c0_126] : memref<9x9x8x64xbf16, #tpu.memory_space<vmem>>, vector<1x1x8x64xbf16>
    %100 = vector.shape_cast %99 : vector<1x1x8x64xbf16> to vector<8x64xbf16>
    %101 = arith.extf %100 : vector<8x64xbf16> to vector<8x64xf32>
    %c3_127 = arith.constant 3 : index
    %c7_128 = arith.constant 7 : index
    %c0_129 = arith.constant 0 : index
    %c0_130 = arith.constant 0 : index
    %102 = vector.load %arg1[%c3_127, %c7_128, %c0_129, %c0_130] : memref<9x9x8x64xbf16, #tpu.memory_space<vmem>>, vector<1x1x8x64xbf16>
    %103 = vector.shape_cast %102 : vector<1x1x8x64xbf16> to vector<8x64xbf16>
    %104 = arith.extf %103 : vector<8x64xbf16> to vector<8x64xf32>
    %c3_131 = arith.constant 3 : index
    %c8_132 = arith.constant 8 : index
    %c0_133 = arith.constant 0 : index
    %c0_134 = arith.constant 0 : index
    %105 = vector.load %arg1[%c3_131, %c8_132, %c0_133, %c0_134] : memref<9x9x8x64xbf16, #tpu.memory_space<vmem>>, vector<1x1x8x64xbf16>
    %106 = vector.shape_cast %105 : vector<1x1x8x64xbf16> to vector<8x64xbf16>
    %107 = arith.extf %106 : vector<8x64xbf16> to vector<8x64xf32>
    %c4_135 = arith.constant 4 : index
    %c0_136 = arith.constant 0 : index
    %c0_137 = arith.constant 0 : index
    %c0_138 = arith.constant 0 : index
    %108 = vector.load %arg1[%c4_135, %c0_136, %c0_137, %c0_138] : memref<9x9x8x64xbf16, #tpu.memory_space<vmem>>, vector<1x1x8x64xbf16>
    %109 = vector.shape_cast %108 : vector<1x1x8x64xbf16> to vector<8x64xbf16>
    %110 = arith.extf %109 : vector<8x64xbf16> to vector<8x64xf32>
    %c4_139 = arith.constant 4 : index
    %c1_140 = arith.constant 1 : index
    %c0_141 = arith.constant 0 : index
    %c0_142 = arith.constant 0 : index
    %111 = vector.load %arg1[%c4_139, %c1_140, %c0_141, %c0_142] : memref<9x9x8x64xbf16, #tpu.memory_space<vmem>>, vector<1x1x8x64xbf16>
    %112 = vector.shape_cast %111 : vector<1x1x8x64xbf16> to vector<8x64xbf16>
    %113 = arith.extf %112 : vector<8x64xbf16> to vector<8x64xf32>
    %c4_143 = arith.constant 4 : index
    %c2_144 = arith.constant 2 : index
    %c0_145 = arith.constant 0 : index
    %c0_146 = arith.constant 0 : index
    %114 = vector.load %arg1[%c4_143, %c2_144, %c0_145, %c0_146] : memref<9x9x8x64xbf16, #tpu.memory_space<vmem>>, vector<1x1x8x64xbf16>
    %115 = vector.shape_cast %114 : vector<1x1x8x64xbf16> to vector<8x64xbf16>
    %116 = arith.extf %115 : vector<8x64xbf16> to vector<8x64xf32>
    %c4_147 = arith.constant 4 : index
    %c3_148 = arith.constant 3 : index
    %c0_149 = arith.constant 0 : index
    %c0_150 = arith.constant 0 : index
    %117 = vector.load %arg1[%c4_147, %c3_148, %c0_149, %c0_150] : memref<9x9x8x64xbf16, #tpu.memory_space<vmem>>, vector<1x1x8x64xbf16>
    %118 = vector.shape_cast %117 : vector<1x1x8x64xbf16> to vector<8x64xbf16>
    %119 = arith.extf %118 : vector<8x64xbf16> to vector<8x64xf32>
    %c4_151 = arith.constant 4 : index
    %c4_152 = arith.constant 4 : index
    %c0_153 = arith.constant 0 : index
    %c0_154 = arith.constant 0 : index
    %120 = vector.load %arg1[%c4_151, %c4_152, %c0_153, %c0_154] : memref<9x9x8x64xbf16, #tpu.memory_space<vmem>>, vector<1x1x8x64xbf16>
    %121 = vector.shape_cast %120 : vector<1x1x8x64xbf16> to vector<8x64xbf16>
    %122 = arith.extf %121 : vector<8x64xbf16> to vector<8x64xf32>
    %c4_155 = arith.constant 4 : index
    %c5_156 = arith.constant 5 : index
    %c0_157 = arith.constant 0 : index
    %c0_158 = arith.constant 0 : index
    %123 = vector.load %arg1[%c4_155, %c5_156, %c0_157, %c0_158] : memref<9x9x8x64xbf16, #tpu.memory_space<vmem>>, vector<1x1x8x64xbf16>
    %124 = vector.shape_cast %123 : vector<1x1x8x64xbf16> to vector<8x64xbf16>
    %125 = arith.extf %124 : vector<8x64xbf16> to vector<8x64xf32>
    %c4_159 = arith.constant 4 : index
    %c6_160 = arith.constant 6 : index
    %c0_161 = arith.constant 0 : index
    %c0_162 = arith.constant 0 : index
    %126 = vector.load %arg1[%c4_159, %c6_160, %c0_161, %c0_162] : memref<9x9x8x64xbf16, #tpu.memory_space<vmem>>, vector<1x1x8x64xbf16>
    %127 = vector.shape_cast %126 : vector<1x1x8x64xbf16> to vector<8x64xbf16>
    %128 = arith.extf %127 : vector<8x64xbf16> to vector<8x64xf32>
    %c4_163 = arith.constant 4 : index
    %c7_164 = arith.constant 7 : index
    %c0_165 = arith.constant 0 : index
    %c0_166 = arith.constant 0 : index
    %129 = vector.load %arg1[%c4_163, %c7_164, %c0_165, %c0_166] : memref<9x9x8x64xbf16, #tpu.memory_space<vmem>>, vector<1x1x8x64xbf16>
    %130 = vector.shape_cast %129 : vector<1x1x8x64xbf16> to vector<8x64xbf16>
    %131 = arith.extf %130 : vector<8x64xbf16> to vector<8x64xf32>
    %c4_167 = arith.constant 4 : index
    %c8_168 = arith.constant 8 : index
    %c0_169 = arith.constant 0 : index
    %c0_170 = arith.constant 0 : index
    %132 = vector.load %arg1[%c4_167, %c8_168, %c0_169, %c0_170] : memref<9x9x8x64xbf16, #tpu.memory_space<vmem>>, vector<1x1x8x64xbf16>
    %133 = vector.shape_cast %132 : vector<1x1x8x64xbf16> to vector<8x64xbf16>
    %134 = arith.extf %133 : vector<8x64xbf16> to vector<8x64xf32>
    %c5_171 = arith.constant 5 : index
    %c0_172 = arith.constant 0 : index
    %c0_173 = arith.constant 0 : index
    %c0_174 = arith.constant 0 : index
    %135 = vector.load %arg1[%c5_171, %c0_172, %c0_173, %c0_174] : memref<9x9x8x64xbf16, #tpu.memory_space<vmem>>, vector<1x1x8x64xbf16>
    %136 = vector.shape_cast %135 : vector<1x1x8x64xbf16> to vector<8x64xbf16>
    %137 = arith.extf %136 : vector<8x64xbf16> to vector<8x64xf32>
    %c5_175 = arith.constant 5 : index
    %c1_176 = arith.constant 1 : index
    %c0_177 = arith.constant 0 : index
    %c0_178 = arith.constant 0 : index
    %138 = vector.load %arg1[%c5_175, %c1_176, %c0_177, %c0_178] : memref<9x9x8x64xbf16, #tpu.memory_space<vmem>>, vector<1x1x8x64xbf16>
    %139 = vector.shape_cast %138 : vector<1x1x8x64xbf16> to vector<8x64xbf16>
    %140 = arith.extf %139 : vector<8x64xbf16> to vector<8x64xf32>
    %c5_179 = arith.constant 5 : index
    %c2_180 = arith.constant 2 : index
    %c0_181 = arith.constant 0 : index
    %c0_182 = arith.constant 0 : index
    %141 = vector.load %arg1[%c5_179, %c2_180, %c0_181, %c0_182] : memref<9x9x8x64xbf16, #tpu.memory_space<vmem>>, vector<1x1x8x64xbf16>
    %142 = vector.shape_cast %141 : vector<1x1x8x64xbf16> to vector<8x64xbf16>
    %143 = arith.extf %142 : vector<8x64xbf16> to vector<8x64xf32>
    %c5_183 = arith.constant 5 : index
    %c3_184 = arith.constant 3 : index
    %c0_185 = arith.constant 0 : index
    %c0_186 = arith.constant 0 : index
    %144 = vector.load %arg1[%c5_183, %c3_184, %c0_185, %c0_186] : memref<9x9x8x64xbf16, #tpu.memory_space<vmem>>, vector<1x1x8x64xbf16>
    %145 = vector.shape_cast %144 : vector<1x1x8x64xbf16> to vector<8x64xbf16>
    %146 = arith.extf %145 : vector<8x64xbf16> to vector<8x64xf32>
    %c5_187 = arith.constant 5 : index
    %c4_188 = arith.constant 4 : index
    %c0_189 = arith.constant 0 : index
    %c0_190 = arith.constant 0 : index
    %147 = vector.load %arg1[%c5_187, %c4_188, %c0_189, %c0_190] : memref<9x9x8x64xbf16, #tpu.memory_space<vmem>>, vector<1x1x8x64xbf16>
    %148 = vector.shape_cast %147 : vector<1x1x8x64xbf16> to vector<8x64xbf16>
    %149 = arith.extf %148 : vector<8x64xbf16> to vector<8x64xf32>
    %c5_191 = arith.constant 5 : index
    %c5_192 = arith.constant 5 : index
    %c0_193 = arith.constant 0 : index
    %c0_194 = arith.constant 0 : index
    %150 = vector.load %arg1[%c5_191, %c5_192, %c0_193, %c0_194] : memref<9x9x8x64xbf16, #tpu.memory_space<vmem>>, vector<1x1x8x64xbf16>
    %151 = vector.shape_cast %150 : vector<1x1x8x64xbf16> to vector<8x64xbf16>
    %152 = arith.extf %151 : vector<8x64xbf16> to vector<8x64xf32>
    %c5_195 = arith.constant 5 : index
    %c6_196 = arith.constant 6 : index
    %c0_197 = arith.constant 0 : index
    %c0_198 = arith.constant 0 : index
    %153 = vector.load %arg1[%c5_195, %c6_196, %c0_197, %c0_198] : memref<9x9x8x64xbf16, #tpu.memory_space<vmem>>, vector<1x1x8x64xbf16>
    %154 = vector.shape_cast %153 : vector<1x1x8x64xbf16> to vector<8x64xbf16>
    %155 = arith.extf %154 : vector<8x64xbf16> to vector<8x64xf32>
    %c5_199 = arith.constant 5 : index
    %c7_200 = arith.constant 7 : index
    %c0_201 = arith.constant 0 : index
    %c0_202 = arith.constant 0 : index
    %156 = vector.load %arg1[%c5_199, %c7_200, %c0_201, %c0_202] : memref<9x9x8x64xbf16, #tpu.memory_space<vmem>>, vector<1x1x8x64xbf16>
    %157 = vector.shape_cast %156 : vector<1x1x8x64xbf16> to vector<8x64xbf16>
    %158 = arith.extf %157 : vector<8x64xbf16> to vector<8x64xf32>
    %c5_203 = arith.constant 5 : index
    %c8_204 = arith.constant 8 : index
    %c0_205 = arith.constant 0 : index
    %c0_206 = arith.constant 0 : index
    %159 = vector.load %arg1[%c5_203, %c8_204, %c0_205, %c0_206] : memref<9x9x8x64xbf16, #tpu.memory_space<vmem>>, vector<1x1x8x64xbf16>
    %160 = vector.shape_cast %159 : vector<1x1x8x64xbf16> to vector<8x64xbf16>
    %161 = arith.extf %160 : vector<8x64xbf16> to vector<8x64xf32>
    %c6_207 = arith.constant 6 : index
    %c0_208 = arith.constant 0 : index
    %c0_209 = arith.constant 0 : index
    %c0_210 = arith.constant 0 : index
    %162 = vector.load %arg1[%c6_207, %c0_208, %c0_209, %c0_210] : memref<9x9x8x64xbf16, #tpu.memory_space<vmem>>, vector<1x1x8x64xbf16>
    %163 = vector.shape_cast %162 : vector<1x1x8x64xbf16> to vector<8x64xbf16>
    %164 = arith.extf %163 : vector<8x64xbf16> to vector<8x64xf32>
    %c6_211 = arith.constant 6 : index
    %c1_212 = arith.constant 1 : index
    %c0_213 = arith.constant 0 : index
    %c0_214 = arith.constant 0 : index
    %165 = vector.load %arg1[%c6_211, %c1_212, %c0_213, %c0_214] : memref<9x9x8x64xbf16, #tpu.memory_space<vmem>>, vector<1x1x8x64xbf16>
    %166 = vector.shape_cast %165 : vector<1x1x8x64xbf16> to vector<8x64xbf16>
    %167 = arith.extf %166 : vector<8x64xbf16> to vector<8x64xf32>
    %c6_215 = arith.constant 6 : index
    %c2_216 = arith.constant 2 : index
    %c0_217 = arith.constant 0 : index
    %c0_218 = arith.constant 0 : index
    %168 = vector.load %arg1[%c6_215, %c2_216, %c0_217, %c0_218] : memref<9x9x8x64xbf16, #tpu.memory_space<vmem>>, vector<1x1x8x64xbf16>
    %169 = vector.shape_cast %168 : vector<1x1x8x64xbf16> to vector<8x64xbf16>
    %170 = arith.extf %169 : vector<8x64xbf16> to vector<8x64xf32>
    %c6_219 = arith.constant 6 : index
    %c3_220 = arith.constant 3 : index
    %c0_221 = arith.constant 0 : index
    %c0_222 = arith.constant 0 : index
    %171 = vector.load %arg1[%c6_219, %c3_220, %c0_221, %c0_222] : memref<9x9x8x64xbf16, #tpu.memory_space<vmem>>, vector<1x1x8x64xbf16>
    %172 = vector.shape_cast %171 : vector<1x1x8x64xbf16> to vector<8x64xbf16>
    %173 = arith.extf %172 : vector<8x64xbf16> to vector<8x64xf32>
    %c6_223 = arith.constant 6 : index
    %c4_224 = arith.constant 4 : index
    %c0_225 = arith.constant 0 : index
    %c0_226 = arith.constant 0 : index
    %174 = vector.load %arg1[%c6_223, %c4_224, %c0_225, %c0_226] : memref<9x9x8x64xbf16, #tpu.memory_space<vmem>>, vector<1x1x8x64xbf16>
    %175 = vector.shape_cast %174 : vector<1x1x8x64xbf16> to vector<8x64xbf16>
    %176 = arith.extf %175 : vector<8x64xbf16> to vector<8x64xf32>
    %c6_227 = arith.constant 6 : index
    %c5_228 = arith.constant 5 : index
    %c0_229 = arith.constant 0 : index
    %c0_230 = arith.constant 0 : index
    %177 = vector.load %arg1[%c6_227, %c5_228, %c0_229, %c0_230] : memref<9x9x8x64xbf16, #tpu.memory_space<vmem>>, vector<1x1x8x64xbf16>
    %178 = vector.shape_cast %177 : vector<1x1x8x64xbf16> to vector<8x64xbf16>
    %179 = arith.extf %178 : vector<8x64xbf16> to vector<8x64xf32>
    %c6_231 = arith.constant 6 : index
    %c6_232 = arith.constant 6 : index
    %c0_233 = arith.constant 0 : index
    %c0_234 = arith.constant 0 : index
    %180 = vector.load %arg1[%c6_231, %c6_232, %c0_233, %c0_234] : memref<9x9x8x64xbf16, #tpu.memory_space<vmem>>, vector<1x1x8x64xbf16>
    %181 = vector.shape_cast %180 : vector<1x1x8x64xbf16> to vector<8x64xbf16>
    %182 = arith.extf %181 : vector<8x64xbf16> to vector<8x64xf32>
    %c6_235 = arith.constant 6 : index
    %c7_236 = arith.constant 7 : index
    %c0_237 = arith.constant 0 : index
    %c0_238 = arith.constant 0 : index
    %183 = vector.load %arg1[%c6_235, %c7_236, %c0_237, %c0_238] : memref<9x9x8x64xbf16, #tpu.memory_space<vmem>>, vector<1x1x8x64xbf16>
    %184 = vector.shape_cast %183 : vector<1x1x8x64xbf16> to vector<8x64xbf16>
    %185 = arith.extf %184 : vector<8x64xbf16> to vector<8x64xf32>
    %c6_239 = arith.constant 6 : index
    %c8_240 = arith.constant 8 : index
    %c0_241 = arith.constant 0 : index
    %c0_242 = arith.constant 0 : index
    %186 = vector.load %arg1[%c6_239, %c8_240, %c0_241, %c0_242] : memref<9x9x8x64xbf16, #tpu.memory_space<vmem>>, vector<1x1x8x64xbf16>
    %187 = vector.shape_cast %186 : vector<1x1x8x64xbf16> to vector<8x64xbf16>
    %188 = arith.extf %187 : vector<8x64xbf16> to vector<8x64xf32>
    %c7_243 = arith.constant 7 : index
    %c0_244 = arith.constant 0 : index
    %c0_245 = arith.constant 0 : index
    %c0_246 = arith.constant 0 : index
    %189 = vector.load %arg1[%c7_243, %c0_244, %c0_245, %c0_246] : memref<9x9x8x64xbf16, #tpu.memory_space<vmem>>, vector<1x1x8x64xbf16>
    %190 = vector.shape_cast %189 : vector<1x1x8x64xbf16> to vector<8x64xbf16>
    %191 = arith.extf %190 : vector<8x64xbf16> to vector<8x64xf32>
    %c7_247 = arith.constant 7 : index
    %c1_248 = arith.constant 1 : index
    %c0_249 = arith.constant 0 : index
    %c0_250 = arith.constant 0 : index
    %192 = vector.load %arg1[%c7_247, %c1_248, %c0_249, %c0_250] : memref<9x9x8x64xbf16, #tpu.memory_space<vmem>>, vector<1x1x8x64xbf16>
    %193 = vector.shape_cast %192 : vector<1x1x8x64xbf16> to vector<8x64xbf16>
    %194 = arith.extf %193 : vector<8x64xbf16> to vector<8x64xf32>
    %c7_251 = arith.constant 7 : index
    %c2_252 = arith.constant 2 : index
    %c0_253 = arith.constant 0 : index
    %c0_254 = arith.constant 0 : index
    %195 = vector.load %arg1[%c7_251, %c2_252, %c0_253, %c0_254] : memref<9x9x8x64xbf16, #tpu.memory_space<vmem>>, vector<1x1x8x64xbf16>
    %196 = vector.shape_cast %195 : vector<1x1x8x64xbf16> to vector<8x64xbf16>
    %197 = arith.extf %196 : vector<8x64xbf16> to vector<8x64xf32>
    %c7_255 = arith.constant 7 : index
    %c3_256 = arith.constant 3 : index
    %c0_257 = arith.constant 0 : index
    %c0_258 = arith.constant 0 : index
    %198 = vector.load %arg1[%c7_255, %c3_256, %c0_257, %c0_258] : memref<9x9x8x64xbf16, #tpu.memory_space<vmem>>, vector<1x1x8x64xbf16>
    %199 = vector.shape_cast %198 : vector<1x1x8x64xbf16> to vector<8x64xbf16>
    %200 = arith.extf %199 : vector<8x64xbf16> to vector<8x64xf32>
    %c7_259 = arith.constant 7 : index
    %c4_260 = arith.constant 4 : index
    %c0_261 = arith.constant 0 : index
    %c0_262 = arith.constant 0 : index
    %201 = vector.load %arg1[%c7_259, %c4_260, %c0_261, %c0_262] : memref<9x9x8x64xbf16, #tpu.memory_space<vmem>>, vector<1x1x8x64xbf16>
    %202 = vector.shape_cast %201 : vector<1x1x8x64xbf16> to vector<8x64xbf16>
    %203 = arith.extf %202 : vector<8x64xbf16> to vector<8x64xf32>
    %c7_263 = arith.constant 7 : index
    %c5_264 = arith.constant 5 : index
    %c0_265 = arith.constant 0 : index
    %c0_266 = arith.constant 0 : index
    %204 = vector.load %arg1[%c7_263, %c5_264, %c0_265, %c0_266] : memref<9x9x8x64xbf16, #tpu.memory_space<vmem>>, vector<1x1x8x64xbf16>
    %205 = vector.shape_cast %204 : vector<1x1x8x64xbf16> to vector<8x64xbf16>
    %206 = arith.extf %205 : vector<8x64xbf16> to vector<8x64xf32>
    %c7_267 = arith.constant 7 : index
    %c6_268 = arith.constant 6 : index
    %c0_269 = arith.constant 0 : index
    %c0_270 = arith.constant 0 : index
    %207 = vector.load %arg1[%c7_267, %c6_268, %c0_269, %c0_270] : memref<9x9x8x64xbf16, #tpu.memory_space<vmem>>, vector<1x1x8x64xbf16>
    %208 = vector.shape_cast %207 : vector<1x1x8x64xbf16> to vector<8x64xbf16>
    %209 = arith.extf %208 : vector<8x64xbf16> to vector<8x64xf32>
    %c7_271 = arith.constant 7 : index
    %c7_272 = arith.constant 7 : index
    %c0_273 = arith.constant 0 : index
    %c0_274 = arith.constant 0 : index
    %210 = vector.load %arg1[%c7_271, %c7_272, %c0_273, %c0_274] : memref<9x9x8x64xbf16, #tpu.memory_space<vmem>>, vector<1x1x8x64xbf16>
    %211 = vector.shape_cast %210 : vector<1x1x8x64xbf16> to vector<8x64xbf16>
    %212 = arith.extf %211 : vector<8x64xbf16> to vector<8x64xf32>
    %c7_275 = arith.constant 7 : index
    %c8_276 = arith.constant 8 : index
    %c0_277 = arith.constant 0 : index
    %c0_278 = arith.constant 0 : index
    %213 = vector.load %arg1[%c7_275, %c8_276, %c0_277, %c0_278] : memref<9x9x8x64xbf16, #tpu.memory_space<vmem>>, vector<1x1x8x64xbf16>
    %214 = vector.shape_cast %213 : vector<1x1x8x64xbf16> to vector<8x64xbf16>
    %215 = arith.extf %214 : vector<8x64xbf16> to vector<8x64xf32>
    %c8_279 = arith.constant 8 : index
    %c0_280 = arith.constant 0 : index
    %c0_281 = arith.constant 0 : index
    %c0_282 = arith.constant 0 : index
    %216 = vector.load %arg1[%c8_279, %c0_280, %c0_281, %c0_282] : memref<9x9x8x64xbf16, #tpu.memory_space<vmem>>, vector<1x1x8x64xbf16>
    %217 = vector.shape_cast %216 : vector<1x1x8x64xbf16> to vector<8x64xbf16>
    %218 = arith.extf %217 : vector<8x64xbf16> to vector<8x64xf32>
    %c8_283 = arith.constant 8 : index
    %c1_284 = arith.constant 1 : index
    %c0_285 = arith.constant 0 : index
    %c0_286 = arith.constant 0 : index
    %219 = vector.load %arg1[%c8_283, %c1_284, %c0_285, %c0_286] : memref<9x9x8x64xbf16, #tpu.memory_space<vmem>>, vector<1x1x8x64xbf16>
    %220 = vector.shape_cast %219 : vector<1x1x8x64xbf16> to vector<8x64xbf16>
    %221 = arith.extf %220 : vector<8x64xbf16> to vector<8x64xf32>
    %c8_287 = arith.constant 8 : index
    %c2_288 = arith.constant 2 : index
    %c0_289 = arith.constant 0 : index
    %c0_290 = arith.constant 0 : index
    %222 = vector.load %arg1[%c8_287, %c2_288, %c0_289, %c0_290] : memref<9x9x8x64xbf16, #tpu.memory_space<vmem>>, vector<1x1x8x64xbf16>
    %223 = vector.shape_cast %222 : vector<1x1x8x64xbf16> to vector<8x64xbf16>
    %224 = arith.extf %223 : vector<8x64xbf16> to vector<8x64xf32>
    %c8_291 = arith.constant 8 : index
    %c3_292 = arith.constant 3 : index
    %c0_293 = arith.constant 0 : index
    %c0_294 = arith.constant 0 : index
    %225 = vector.load %arg1[%c8_291, %c3_292, %c0_293, %c0_294] : memref<9x9x8x64xbf16, #tpu.memory_space<vmem>>, vector<1x1x8x64xbf16>
    %226 = vector.shape_cast %225 : vector<1x1x8x64xbf16> to vector<8x64xbf16>
    %227 = arith.extf %226 : vector<8x64xbf16> to vector<8x64xf32>
    %c8_295 = arith.constant 8 : index
    %c4_296 = arith.constant 4 : index
    %c0_297 = arith.constant 0 : index
    %c0_298 = arith.constant 0 : index
    %228 = vector.load %arg1[%c8_295, %c4_296, %c0_297, %c0_298] : memref<9x9x8x64xbf16, #tpu.memory_space<vmem>>, vector<1x1x8x64xbf16>
    %229 = vector.shape_cast %228 : vector<1x1x8x64xbf16> to vector<8x64xbf16>
    %230 = arith.extf %229 : vector<8x64xbf16> to vector<8x64xf32>
    %c8_299 = arith.constant 8 : index
    %c5_300 = arith.constant 5 : index
    %c0_301 = arith.constant 0 : index
    %c0_302 = arith.constant 0 : index
    %231 = vector.load %arg1[%c8_299, %c5_300, %c0_301, %c0_302] : memref<9x9x8x64xbf16, #tpu.memory_space<vmem>>, vector<1x1x8x64xbf16>
    %232 = vector.shape_cast %231 : vector<1x1x8x64xbf16> to vector<8x64xbf16>
    %233 = arith.extf %232 : vector<8x64xbf16> to vector<8x64xf32>
    %c8_303 = arith.constant 8 : index
    %c6_304 = arith.constant 6 : index
    %c0_305 = arith.constant 0 : index
    %c0_306 = arith.constant 0 : index
    %234 = vector.load %arg1[%c8_303, %c6_304, %c0_305, %c0_306] : memref<9x9x8x64xbf16, #tpu.memory_space<vmem>>, vector<1x1x8x64xbf16>
    %235 = vector.shape_cast %234 : vector<1x1x8x64xbf16> to vector<8x64xbf16>
    %236 = arith.extf %235 : vector<8x64xbf16> to vector<8x64xf32>
    %c8_307 = arith.constant 8 : index
    %c7_308 = arith.constant 7 : index
    %c0_309 = arith.constant 0 : index
    %c0_310 = arith.constant 0 : index
    %237 = vector.load %arg1[%c8_307, %c7_308, %c0_309, %c0_310] : memref<9x9x8x64xbf16, #tpu.memory_space<vmem>>, vector<1x1x8x64xbf16>
    %238 = vector.shape_cast %237 : vector<1x1x8x64xbf16> to vector<8x64xbf16>
    %239 = arith.extf %238 : vector<8x64xbf16> to vector<8x64xf32>
    %c8_311 = arith.constant 8 : index
    %c8_312 = arith.constant 8 : index
    %c0_313 = arith.constant 0 : index
    %c0_314 = arith.constant 0 : index
    %240 = vector.load %arg1[%c8_311, %c8_312, %c0_313, %c0_314] : memref<9x9x8x64xbf16, #tpu.memory_space<vmem>>, vector<1x1x8x64xbf16>
    %241 = vector.shape_cast %240 : vector<1x1x8x64xbf16> to vector<8x64xbf16>
    %242 = arith.extf %241 : vector<8x64xbf16> to vector<8x64xf32>
    %cst = arith.constant 0.000000e+00 : f32
    %243 = vector.broadcast %cst : f32 to vector<512x32xf32>
    %244 = tpu.concatenate %2, %5, %8, %11, %14, %17, %20, %23, %29, %32, %35, %38, %41, %44, %47, %50 in 0 : vector<8x64xf32>, vector<8x64xf32>, vector<8x64xf32>, vector<8x64xf32>, vector<8x64xf32>, vector<8x64xf32>, vector<8x64xf32>, vector<8x64xf32>, vector<8x64xf32>, vector<8x64xf32>, vector<8x64xf32>, vector<8x64xf32>, vector<8x64xf32>, vector<8x64xf32>, vector<8x64xf32>, vector<8x64xf32> -> vector<128x64xf32>
    %245 = tpu.concatenate %56, %59, %62, %65, %68, %71, %74, %77, %83, %86, %89, %92, %95, %98, %101, %104 in 0 : vector<8x64xf32>, vector<8x64xf32>, vector<8x64xf32>, vector<8x64xf32>, vector<8x64xf32>, vector<8x64xf32>, vector<8x64xf32>, vector<8x64xf32>, vector<8x64xf32>, vector<8x64xf32>, vector<8x64xf32>, vector<8x64xf32>, vector<8x64xf32>, vector<8x64xf32>, vector<8x64xf32>, vector<8x64xf32> -> vector<128x64xf32>
    %246 = tpu.concatenate %110, %113, %116, %119, %122, %125, %128, %131, %137, %140, %143, %146, %149, %152, %155, %158 in 0 : vector<8x64xf32>, vector<8x64xf32>, vector<8x64xf32>, vector<8x64xf32>, vector<8x64xf32>, vector<8x64xf32>, vector<8x64xf32>, vector<8x64xf32>, vector<8x64xf32>, vector<8x64xf32>, vector<8x64xf32>, vector<8x64xf32>, vector<8x64xf32>, vector<8x64xf32>, vector<8x64xf32>, vector<8x64xf32> -> vector<128x64xf32>
    %247 = tpu.concatenate %164, %167, %170, %173, %176, %179, %182, %185, %191, %194, %197, %200, %203, %206, %209, %212 in 0 : vector<8x64xf32>, vector<8x64xf32>, vector<8x64xf32>, vector<8x64xf32>, vector<8x64xf32>, vector<8x64xf32>, vector<8x64xf32>, vector<8x64xf32>, vector<8x64xf32>, vector<8x64xf32>, vector<8x64xf32>, vector<8x64xf32>, vector<8x64xf32>, vector<8x64xf32>, vector<8x64xf32>, vector<8x64xf32> -> vector<128x64xf32>
    %248 = tpu.concatenate %244, %245, %246, %247 in 0 : vector<128x64xf32>, vector<128x64xf32>, vector<128x64xf32>, vector<128x64xf32> -> vector<512x64xf32>
    %249 = arith.truncf %248 : vector<512x64xf32> to vector<512x64xbf16>
    %c0_315 = arith.constant 0 : index
    %c0_316 = arith.constant 0 : index
    %c0_317 = arith.constant 0 : index
    %c0_318 = arith.constant 0 : index
    %250 = vector.load %arg2[%c0_315, %c0_316, %c0_317, %c0_318] : memref<2x2x64x32xbf16, #tpu.memory_space<vmem>>, vector<1x1x64x32xbf16>
    %251 = vector.shape_cast %250 : vector<1x1x64x32xbf16> to vector<64x32xbf16>
    %cst_319 = arith.constant dense<0.000000e+00> : vector<512x32xf32>
    %252 = tpu.matmul %249, %251, %cst_319 {dimension_numbers = #tpu.dot_dimension_numbers<[1], [0], [0], [1], [0, 0, 1, 1], [], []>} : vector<512x64xbf16>, vector<64x32xbf16>, vector<512x32xf32> -> vector<512x32xf32>
    %253 = arith.addf %243, %252 : vector<512x32xf32>
    %254 = tpu.concatenate %5, %8, %11, %14, %17, %20, %23, %26, %32, %35, %38, %41, %44, %47, %50, %53 in 0 : vector<8x64xf32>, vector<8x64xf32>, vector<8x64xf32>, vector<8x64xf32>, vector<8x64xf32>, vector<8x64xf32>, vector<8x64xf32>, vector<8x64xf32>, vector<8x64xf32>, vector<8x64xf32>, vector<8x64xf32>, vector<8x64xf32>, vector<8x64xf32>, vector<8x64xf32>, vector<8x64xf32>, vector<8x64xf32> -> vector<128x64xf32>
    %255 = tpu.concatenate %59, %62, %65, %68, %71, %74, %77, %80, %86, %89, %92, %95, %98, %101, %104, %107 in 0 : vector<8x64xf32>, vector<8x64xf32>, vector<8x64xf32>, vector<8x64xf32>, vector<8x64xf32>, vector<8x64xf32>, vector<8x64xf32>, vector<8x64xf32>, vector<8x64xf32>, vector<8x64xf32>, vector<8x64xf32>, vector<8x64xf32>, vector<8x64xf32>, vector<8x64xf32>, vector<8x64xf32>, vector<8x64xf32> -> vector<128x64xf32>
    %256 = tpu.concatenate %113, %116, %119, %122, %125, %128, %131, %134, %140, %143, %146, %149, %152, %155, %158, %161 in 0 : vector<8x64xf32>, vector<8x64xf32>, vector<8x64xf32>, vector<8x64xf32>, vector<8x64xf32>, vector<8x64xf32>, vector<8x64xf32>, vector<8x64xf32>, vector<8x64xf32>, vector<8x64xf32>, vector<8x64xf32>, vector<8x64xf32>, vector<8x64xf32>, vector<8x64xf32>, vector<8x64xf32>, vector<8x64xf32> -> vector<128x64xf32>
    %257 = tpu.concatenate %167, %170, %173, %176, %179, %182, %185, %188, %194, %197, %200, %203, %206, %209, %212, %215 in 0 : vector<8x64xf32>, vector<8x64xf32>, vector<8x64xf32>, vector<8x64xf32>, vector<8x64xf32>, vector<8x64xf32>, vector<8x64xf32>, vector<8x64xf32>, vector<8x64xf32>, vector<8x64xf32>, vector<8x64xf32>, vector<8x64xf32>, vector<8x64xf32>, vector<8x64xf32>, vector<8x64xf32>, vector<8x64xf32> -> vector<128x64xf32>
    %258 = tpu.concatenate %254, %255, %256, %257 in 0 : vector<128x64xf32>, vector<128x64xf32>, vector<128x64xf32>, vector<128x64xf32> -> vector<512x64xf32>
    %259 = arith.truncf %258 : vector<512x64xf32> to vector<512x64xbf16>
    %c0_320 = arith.constant 0 : index
    %c1_321 = arith.constant 1 : index
    %c0_322 = arith.constant 0 : index
    %c0_323 = arith.constant 0 : index
    %260 = vector.load %arg2[%c0_320, %c1_321, %c0_322, %c0_323] : memref<2x2x64x32xbf16, #tpu.memory_space<vmem>>, vector<1x1x64x32xbf16>
    %261 = vector.shape_cast %260 : vector<1x1x64x32xbf16> to vector<64x32xbf16>
    %cst_324 = arith.constant dense<0.000000e+00> : vector<512x32xf32>
    %262 = tpu.matmul %259, %261, %cst_324 {dimension_numbers = #tpu.dot_dimension_numbers<[1], [0], [0], [1], [0, 0, 1, 1], [], []>} : vector<512x64xbf16>, vector<64x32xbf16>, vector<512x32xf32> -> vector<512x32xf32>
    %263 = arith.addf %253, %262 : vector<512x32xf32>
    %264 = tpu.concatenate %29, %32, %35, %38, %41, %44, %47, %50, %56, %59, %62, %65, %68, %71, %74, %77 in 0 : vector<8x64xf32>, vector<8x64xf32>, vector<8x64xf32>, vector<8x64xf32>, vector<8x64xf32>, vector<8x64xf32>, vector<8x64xf32>, vector<8x64xf32>, vector<8x64xf32>, vector<8x64xf32>, vector<8x64xf32>, vector<8x64xf32>, vector<8x64xf32>, vector<8x64xf32>, vector<8x64xf32>, vector<8x64xf32> -> vector<128x64xf32>
    %265 = tpu.concatenate %83, %86, %89, %92, %95, %98, %101, %104, %110, %113, %116, %119, %122, %125, %128, %131 in 0 : vector<8x64xf32>, vector<8x64xf32>, vector<8x64xf32>, vector<8x64xf32>, vector<8x64xf32>, vector<8x64xf32>, vector<8x64xf32>, vector<8x64xf32>, vector<8x64xf32>, vector<8x64xf32>, vector<8x64xf32>, vector<8x64xf32>, vector<8x64xf32>, vector<8x64xf32>, vector<8x64xf32>, vector<8x64xf32> -> vector<128x64xf32>
    %266 = tpu.concatenate %137, %140, %143, %146, %149, %152, %155, %158, %164, %167, %170, %173, %176, %179, %182, %185 in 0 : vector<8x64xf32>, vector<8x64xf32>, vector<8x64xf32>, vector<8x64xf32>, vector<8x64xf32>, vector<8x64xf32>, vector<8x64xf32>, vector<8x64xf32>, vector<8x64xf32>, vector<8x64xf32>, vector<8x64xf32>, vector<8x64xf32>, vector<8x64xf32>, vector<8x64xf32>, vector<8x64xf32>, vector<8x64xf32> -> vector<128x64xf32>
    %267 = tpu.concatenate %191, %194, %197, %200, %203, %206, %209, %212, %218, %221, %224, %227, %230, %233, %236, %239 in 0 : vector<8x64xf32>, vector<8x64xf32>, vector<8x64xf32>, vector<8x64xf32>, vector<8x64xf32>, vector<8x64xf32>, vector<8x64xf32>, vector<8x64xf32>, vector<8x64xf32>, vector<8x64xf32>, vector<8x64xf32>, vector<8x64xf32>, vector<8x64xf32>, vector<8x64xf32>, vector<8x64xf32>, vector<8x64xf32> -> vector<128x64xf32>
    %268 = tpu.concatenate %264, %265, %266, %267 in 0 : vector<128x64xf32>, vector<128x64xf32>, vector<128x64xf32>, vector<128x64xf32> -> vector<512x64xf32>
    %269 = arith.truncf %268 : vector<512x64xf32> to vector<512x64xbf16>
    %c1_325 = arith.constant 1 : index
    %c0_326 = arith.constant 0 : index
    %c0_327 = arith.constant 0 : index
    %c0_328 = arith.constant 0 : index
    %270 = vector.load %arg2[%c1_325, %c0_326, %c0_327, %c0_328] : memref<2x2x64x32xbf16, #tpu.memory_space<vmem>>, vector<1x1x64x32xbf16>
    %271 = vector.shape_cast %270 : vector<1x1x64x32xbf16> to vector<64x32xbf16>
    %cst_329 = arith.constant dense<0.000000e+00> : vector<512x32xf32>
    %272 = tpu.matmul %269, %271, %cst_329 {dimension_numbers = #tpu.dot_dimension_numbers<[1], [0], [0], [1], [0, 0, 1, 1], [], []>} : vector<512x64xbf16>, vector<64x32xbf16>, vector<512x32xf32> -> vector<512x32xf32>
    %273 = arith.addf %263, %272 : vector<512x32xf32>
    %274 = tpu.concatenate %32, %35, %38, %41, %44, %47, %50, %53, %59, %62, %65, %68, %71, %74, %77, %80 in 0 : vector<8x64xf32>, vector<8x64xf32>, vector<8x64xf32>, vector<8x64xf32>, vector<8x64xf32>, vector<8x64xf32>, vector<8x64xf32>, vector<8x64xf32>, vector<8x64xf32>, vector<8x64xf32>, vector<8x64xf32>, vector<8x64xf32>, vector<8x64xf32>, vector<8x64xf32>, vector<8x64xf32>, vector<8x64xf32> -> vector<128x64xf32>
    %275 = tpu.concatenate %86, %89, %92, %95, %98, %101, %104, %107, %113, %116, %119, %122, %125, %128, %131, %134 in 0 : vector<8x64xf32>, vector<8x64xf32>, vector<8x64xf32>, vector<8x64xf32>, vector<8x64xf32>, vector<8x64xf32>, vector<8x64xf32>, vector<8x64xf32>, vector<8x64xf32>, vector<8x64xf32>, vector<8x64xf32>, vector<8x64xf32>, vector<8x64xf32>, vector<8x64xf32>, vector<8x64xf32>, vector<8x64xf32> -> vector<128x64xf32>
    %276 = tpu.concatenate %140, %143, %146, %149, %152, %155, %158, %161, %167, %170, %173, %176, %179, %182, %185, %188 in 0 : vector<8x64xf32>, vector<8x64xf32>, vector<8x64xf32>, vector<8x64xf32>, vector<8x64xf32>, vector<8x64xf32>, vector<8x64xf32>, vector<8x64xf32>, vector<8x64xf32>, vector<8x64xf32>, vector<8x64xf32>, vector<8x64xf32>, vector<8x64xf32>, vector<8x64xf32>, vector<8x64xf32>, vector<8x64xf32> -> vector<128x64xf32>
    %277 = tpu.concatenate %194, %197, %200, %203, %206, %209, %212, %215, %221, %224, %227, %230, %233, %236, %239, %242 in 0 : vector<8x64xf32>, vector<8x64xf32>, vector<8x64xf32>, vector<8x64xf32>, vector<8x64xf32>, vector<8x64xf32>, vector<8x64xf32>, vector<8x64xf32>, vector<8x64xf32>, vector<8x64xf32>, vector<8x64xf32>, vector<8x64xf32>, vector<8x64xf32>, vector<8x64xf32>, vector<8x64xf32>, vector<8x64xf32> -> vector<128x64xf32>
    %278 = tpu.concatenate %274, %275, %276, %277 in 0 : vector<128x64xf32>, vector<128x64xf32>, vector<128x64xf32>, vector<128x64xf32> -> vector<512x64xf32>
    %279 = arith.truncf %278 : vector<512x64xf32> to vector<512x64xbf16>
    %c1_330 = arith.constant 1 : index
    %c1_331 = arith.constant 1 : index
    %c0_332 = arith.constant 0 : index
    %c0_333 = arith.constant 0 : index
    %280 = vector.load %arg2[%c1_330, %c1_331, %c0_332, %c0_333] : memref<2x2x64x32xbf16, #tpu.memory_space<vmem>>, vector<1x1x64x32xbf16>
    %281 = vector.shape_cast %280 : vector<1x1x64x32xbf16> to vector<64x32xbf16>
    %cst_334 = arith.constant dense<0.000000e+00> : vector<512x32xf32>
    %282 = tpu.matmul %279, %281, %cst_334 {dimension_numbers = #tpu.dot_dimension_numbers<[1], [0], [0], [1], [0, 0, 1, 1], [], []>} : vector<512x64xbf16>, vector<64x32xbf16>, vector<512x32xf32> -> vector<512x32xf32>
    %283 = arith.addf %273, %282 : vector<512x32xf32>
    %c0_335 = arith.constant 0 : index
    %c0_336 = arith.constant 0 : index
    %284 = vector.load %arg3[%c0_335, %c0_336] : memref<1x32xf32, #tpu.memory_space<vmem>>, vector<1x32xf32>
    %285 = vector.broadcast %284 : vector<1x32xf32> to vector<512x32xf32>
    %286 = arith.addf %283, %285 : vector<512x32xf32>
    %cst_337 = arith.constant 0.000000e+00 : f32
    %287 = vector.broadcast %cst_337 : f32 to vector<512x32xf32>
    %288 = arith.maximumf %286, %287 : vector<512x32xf32>
    %289 = vector.extract_strided_slice %288 {offsets = [0, 0], sizes = [8, 32], strides = [1, 1]} : vector<512x32xf32> to vector<8x32xf32>
    %290 = vector.extract_strided_slice %288 {offsets = [8, 0], sizes = [8, 32], strides = [1, 1]} : vector<512x32xf32> to vector<8x32xf32>
    %291 = arith.maximumf %289, %290 : vector<8x32xf32>
    %292 = vector.extract_strided_slice %288 {offsets = [64, 0], sizes = [8, 32], strides = [1, 1]} : vector<512x32xf32> to vector<8x32xf32>
    %293 = vector.extract_strided_slice %288 {offsets = [72, 0], sizes = [8, 32], strides = [1, 1]} : vector<512x32xf32> to vector<8x32xf32>
    %294 = arith.maximumf %292, %293 : vector<8x32xf32>
    %295 = arith.maximumf %291, %294 : vector<8x32xf32>
    %296 = vector.extract_strided_slice %288 {offsets = [16, 0], sizes = [8, 32], strides = [1, 1]} : vector<512x32xf32> to vector<8x32xf32>
    %297 = vector.extract_strided_slice %288 {offsets = [24, 0], sizes = [8, 32], strides = [1, 1]} : vector<512x32xf32> to vector<8x32xf32>
    %298 = arith.maximumf %296, %297 : vector<8x32xf32>
    %299 = vector.extract_strided_slice %288 {offsets = [80, 0], sizes = [8, 32], strides = [1, 1]} : vector<512x32xf32> to vector<8x32xf32>
    %300 = vector.extract_strided_slice %288 {offsets = [88, 0], sizes = [8, 32], strides = [1, 1]} : vector<512x32xf32> to vector<8x32xf32>
    %301 = arith.maximumf %299, %300 : vector<8x32xf32>
    %302 = arith.maximumf %298, %301 : vector<8x32xf32>
    %303 = vector.extract_strided_slice %288 {offsets = [32, 0], sizes = [8, 32], strides = [1, 1]} : vector<512x32xf32> to vector<8x32xf32>
    %304 = vector.extract_strided_slice %288 {offsets = [40, 0], sizes = [8, 32], strides = [1, 1]} : vector<512x32xf32> to vector<8x32xf32>
    %305 = arith.maximumf %303, %304 : vector<8x32xf32>
    %306 = vector.extract_strided_slice %288 {offsets = [96, 0], sizes = [8, 32], strides = [1, 1]} : vector<512x32xf32> to vector<8x32xf32>
    %307 = vector.extract_strided_slice %288 {offsets = [104, 0], sizes = [8, 32], strides = [1, 1]} : vector<512x32xf32> to vector<8x32xf32>
    %308 = arith.maximumf %306, %307 : vector<8x32xf32>
    %309 = arith.maximumf %305, %308 : vector<8x32xf32>
    %310 = vector.extract_strided_slice %288 {offsets = [48, 0], sizes = [8, 32], strides = [1, 1]} : vector<512x32xf32> to vector<8x32xf32>
    %311 = vector.extract_strided_slice %288 {offsets = [56, 0], sizes = [8, 32], strides = [1, 1]} : vector<512x32xf32> to vector<8x32xf32>
    %312 = arith.maximumf %310, %311 : vector<8x32xf32>
    %313 = vector.extract_strided_slice %288 {offsets = [112, 0], sizes = [8, 32], strides = [1, 1]} : vector<512x32xf32> to vector<8x32xf32>
    %314 = vector.extract_strided_slice %288 {offsets = [120, 0], sizes = [8, 32], strides = [1, 1]} : vector<512x32xf32> to vector<8x32xf32>
    %315 = arith.maximumf %313, %314 : vector<8x32xf32>
    %316 = arith.maximumf %312, %315 : vector<8x32xf32>
    %317 = vector.extract_strided_slice %288 {offsets = [128, 0], sizes = [8, 32], strides = [1, 1]} : vector<512x32xf32> to vector<8x32xf32>
    %318 = vector.extract_strided_slice %288 {offsets = [136, 0], sizes = [8, 32], strides = [1, 1]} : vector<512x32xf32> to vector<8x32xf32>
    %319 = arith.maximumf %317, %318 : vector<8x32xf32>
    %320 = vector.extract_strided_slice %288 {offsets = [192, 0], sizes = [8, 32], strides = [1, 1]} : vector<512x32xf32> to vector<8x32xf32>
    %321 = vector.extract_strided_slice %288 {offsets = [200, 0], sizes = [8, 32], strides = [1, 1]} : vector<512x32xf32> to vector<8x32xf32>
    %322 = arith.maximumf %320, %321 : vector<8x32xf32>
    %323 = arith.maximumf %319, %322 : vector<8x32xf32>
    %324 = vector.extract_strided_slice %288 {offsets = [144, 0], sizes = [8, 32], strides = [1, 1]} : vector<512x32xf32> to vector<8x32xf32>
    %325 = vector.extract_strided_slice %288 {offsets = [152, 0], sizes = [8, 32], strides = [1, 1]} : vector<512x32xf32> to vector<8x32xf32>
    %326 = arith.maximumf %324, %325 : vector<8x32xf32>
    %327 = vector.extract_strided_slice %288 {offsets = [208, 0], sizes = [8, 32], strides = [1, 1]} : vector<512x32xf32> to vector<8x32xf32>
    %328 = vector.extract_strided_slice %288 {offsets = [216, 0], sizes = [8, 32], strides = [1, 1]} : vector<512x32xf32> to vector<8x32xf32>
    %329 = arith.maximumf %327, %328 : vector<8x32xf32>
    %330 = arith.maximumf %326, %329 : vector<8x32xf32>
    %331 = vector.extract_strided_slice %288 {offsets = [160, 0], sizes = [8, 32], strides = [1, 1]} : vector<512x32xf32> to vector<8x32xf32>
    %332 = vector.extract_strided_slice %288 {offsets = [168, 0], sizes = [8, 32], strides = [1, 1]} : vector<512x32xf32> to vector<8x32xf32>
    %333 = arith.maximumf %331, %332 : vector<8x32xf32>
    %334 = vector.extract_strided_slice %288 {offsets = [224, 0], sizes = [8, 32], strides = [1, 1]} : vector<512x32xf32> to vector<8x32xf32>
    %335 = vector.extract_strided_slice %288 {offsets = [232, 0], sizes = [8, 32], strides = [1, 1]} : vector<512x32xf32> to vector<8x32xf32>
    %336 = arith.maximumf %334, %335 : vector<8x32xf32>
    %337 = arith.maximumf %333, %336 : vector<8x32xf32>
    %338 = vector.extract_strided_slice %288 {offsets = [176, 0], sizes = [8, 32], strides = [1, 1]} : vector<512x32xf32> to vector<8x32xf32>
    %339 = vector.extract_strided_slice %288 {offsets = [184, 0], sizes = [8, 32], strides = [1, 1]} : vector<512x32xf32> to vector<8x32xf32>
    %340 = arith.maximumf %338, %339 : vector<8x32xf32>
    %341 = vector.extract_strided_slice %288 {offsets = [240, 0], sizes = [8, 32], strides = [1, 1]} : vector<512x32xf32> to vector<8x32xf32>
    %342 = vector.extract_strided_slice %288 {offsets = [248, 0], sizes = [8, 32], strides = [1, 1]} : vector<512x32xf32> to vector<8x32xf32>
    %343 = arith.maximumf %341, %342 : vector<8x32xf32>
    %344 = arith.maximumf %340, %343 : vector<8x32xf32>
    %345 = vector.extract_strided_slice %288 {offsets = [256, 0], sizes = [8, 32], strides = [1, 1]} : vector<512x32xf32> to vector<8x32xf32>
    %346 = vector.extract_strided_slice %288 {offsets = [264, 0], sizes = [8, 32], strides = [1, 1]} : vector<512x32xf32> to vector<8x32xf32>
    %347 = arith.maximumf %345, %346 : vector<8x32xf32>
    %348 = vector.extract_strided_slice %288 {offsets = [320, 0], sizes = [8, 32], strides = [1, 1]} : vector<512x32xf32> to vector<8x32xf32>
    %349 = vector.extract_strided_slice %288 {offsets = [328, 0], sizes = [8, 32], strides = [1, 1]} : vector<512x32xf32> to vector<8x32xf32>
    %350 = arith.maximumf %348, %349 : vector<8x32xf32>
    %351 = arith.maximumf %347, %350 : vector<8x32xf32>
    %352 = vector.extract_strided_slice %288 {offsets = [272, 0], sizes = [8, 32], strides = [1, 1]} : vector<512x32xf32> to vector<8x32xf32>
    %353 = vector.extract_strided_slice %288 {offsets = [280, 0], sizes = [8, 32], strides = [1, 1]} : vector<512x32xf32> to vector<8x32xf32>
    %354 = arith.maximumf %352, %353 : vector<8x32xf32>
    %355 = vector.extract_strided_slice %288 {offsets = [336, 0], sizes = [8, 32], strides = [1, 1]} : vector<512x32xf32> to vector<8x32xf32>
    %356 = vector.extract_strided_slice %288 {offsets = [344, 0], sizes = [8, 32], strides = [1, 1]} : vector<512x32xf32> to vector<8x32xf32>
    %357 = arith.maximumf %355, %356 : vector<8x32xf32>
    %358 = arith.maximumf %354, %357 : vector<8x32xf32>
    %359 = vector.extract_strided_slice %288 {offsets = [288, 0], sizes = [8, 32], strides = [1, 1]} : vector<512x32xf32> to vector<8x32xf32>
    %360 = vector.extract_strided_slice %288 {offsets = [296, 0], sizes = [8, 32], strides = [1, 1]} : vector<512x32xf32> to vector<8x32xf32>
    %361 = arith.maximumf %359, %360 : vector<8x32xf32>
    %362 = vector.extract_strided_slice %288 {offsets = [352, 0], sizes = [8, 32], strides = [1, 1]} : vector<512x32xf32> to vector<8x32xf32>
    %363 = vector.extract_strided_slice %288 {offsets = [360, 0], sizes = [8, 32], strides = [1, 1]} : vector<512x32xf32> to vector<8x32xf32>
    %364 = arith.maximumf %362, %363 : vector<8x32xf32>
    %365 = arith.maximumf %361, %364 : vector<8x32xf32>
    %366 = vector.extract_strided_slice %288 {offsets = [304, 0], sizes = [8, 32], strides = [1, 1]} : vector<512x32xf32> to vector<8x32xf32>
    %367 = vector.extract_strided_slice %288 {offsets = [312, 0], sizes = [8, 32], strides = [1, 1]} : vector<512x32xf32> to vector<8x32xf32>
    %368 = arith.maximumf %366, %367 : vector<8x32xf32>
    %369 = vector.extract_strided_slice %288 {offsets = [368, 0], sizes = [8, 32], strides = [1, 1]} : vector<512x32xf32> to vector<8x32xf32>
    %370 = vector.extract_strided_slice %288 {offsets = [376, 0], sizes = [8, 32], strides = [1, 1]} : vector<512x32xf32> to vector<8x32xf32>
    %371 = arith.maximumf %369, %370 : vector<8x32xf32>
    %372 = arith.maximumf %368, %371 : vector<8x32xf32>
    %373 = vector.extract_strided_slice %288 {offsets = [384, 0], sizes = [8, 32], strides = [1, 1]} : vector<512x32xf32> to vector<8x32xf32>
    %374 = vector.extract_strided_slice %288 {offsets = [392, 0], sizes = [8, 32], strides = [1, 1]} : vector<512x32xf32> to vector<8x32xf32>
    %375 = arith.maximumf %373, %374 : vector<8x32xf32>
    %376 = vector.extract_strided_slice %288 {offsets = [448, 0], sizes = [8, 32], strides = [1, 1]} : vector<512x32xf32> to vector<8x32xf32>
    %377 = vector.extract_strided_slice %288 {offsets = [456, 0], sizes = [8, 32], strides = [1, 1]} : vector<512x32xf32> to vector<8x32xf32>
    %378 = arith.maximumf %376, %377 : vector<8x32xf32>
    %379 = arith.maximumf %375, %378 : vector<8x32xf32>
    %380 = vector.extract_strided_slice %288 {offsets = [400, 0], sizes = [8, 32], strides = [1, 1]} : vector<512x32xf32> to vector<8x32xf32>
    %381 = vector.extract_strided_slice %288 {offsets = [408, 0], sizes = [8, 32], strides = [1, 1]} : vector<512x32xf32> to vector<8x32xf32>
    %382 = arith.maximumf %380, %381 : vector<8x32xf32>
    %383 = vector.extract_strided_slice %288 {offsets = [464, 0], sizes = [8, 32], strides = [1, 1]} : vector<512x32xf32> to vector<8x32xf32>
    %384 = vector.extract_strided_slice %288 {offsets = [472, 0], sizes = [8, 32], strides = [1, 1]} : vector<512x32xf32> to vector<8x32xf32>
    %385 = arith.maximumf %383, %384 : vector<8x32xf32>
    %386 = arith.maximumf %382, %385 : vector<8x32xf32>
    %387 = vector.extract_strided_slice %288 {offsets = [416, 0], sizes = [8, 32], strides = [1, 1]} : vector<512x32xf32> to vector<8x32xf32>
    %388 = vector.extract_strided_slice %288 {offsets = [424, 0], sizes = [8, 32], strides = [1, 1]} : vector<512x32xf32> to vector<8x32xf32>
    %389 = arith.maximumf %387, %388 : vector<8x32xf32>
    %390 = vector.extract_strided_slice %288 {offsets = [480, 0], sizes = [8, 32], strides = [1, 1]} : vector<512x32xf32> to vector<8x32xf32>
    %391 = vector.extract_strided_slice %288 {offsets = [488, 0], sizes = [8, 32], strides = [1, 1]} : vector<512x32xf32> to vector<8x32xf32>
    %392 = arith.maximumf %390, %391 : vector<8x32xf32>
    %393 = arith.maximumf %389, %392 : vector<8x32xf32>
    %394 = vector.extract_strided_slice %288 {offsets = [432, 0], sizes = [8, 32], strides = [1, 1]} : vector<512x32xf32> to vector<8x32xf32>
    %395 = vector.extract_strided_slice %288 {offsets = [440, 0], sizes = [8, 32], strides = [1, 1]} : vector<512x32xf32> to vector<8x32xf32>
    %396 = arith.maximumf %394, %395 : vector<8x32xf32>
    %397 = vector.extract_strided_slice %288 {offsets = [496, 0], sizes = [8, 32], strides = [1, 1]} : vector<512x32xf32> to vector<8x32xf32>
    %398 = vector.extract_strided_slice %288 {offsets = [504, 0], sizes = [8, 32], strides = [1, 1]} : vector<512x32xf32> to vector<8x32xf32>
    %399 = arith.maximumf %397, %398 : vector<8x32xf32>
    %400 = arith.maximumf %396, %399 : vector<8x32xf32>
    %401 = tpu.concatenate %295, %302, %309, %316, %323, %330, %337, %344, %351, %358, %365, %372, %379, %386, %393, %400 in 1 : vector<8x32xf32>, vector<8x32xf32>, vector<8x32xf32>, vector<8x32xf32>, vector<8x32xf32>, vector<8x32xf32>, vector<8x32xf32>, vector<8x32xf32>, vector<8x32xf32>, vector<8x32xf32>, vector<8x32xf32>, vector<8x32xf32>, vector<8x32xf32>, vector<8x32xf32>, vector<8x32xf32>, vector<8x32xf32> -> vector<8x512xf32>
    %402 = arith.truncf %401 : vector<8x512xf32> to vector<8x512xbf16>
    %c0_338 = arith.constant 0 : index
    %c0_339 = arith.constant 0 : index
    %403 = vector.load %arg4[%c0_338, %c0_339] : memref<512x256xbf16, #tpu.memory_space<vmem>>, vector<512x256xbf16>
    %cst_340 = arith.constant dense<0.000000e+00> : vector<8x256xf32>
    %404 = tpu.matmul %402, %403, %cst_340 {dimension_numbers = #tpu.dot_dimension_numbers<[1], [0], [0], [1], [0, 0, 1, 1], [], []>} : vector<8x512xbf16>, vector<512x256xbf16>, vector<8x256xf32> -> vector<8x256xf32>
    %c0_341 = arith.constant 0 : index
    %c0_342 = arith.constant 0 : index
    %405 = vector.load %arg5[%c0_341, %c0_342] : memref<1x256xf32, #tpu.memory_space<vmem>>, vector<1x256xf32>
    %406 = vector.broadcast %405 : vector<1x256xf32> to vector<8x256xf32>
    %407 = arith.addf %404, %406 : vector<8x256xf32>
    %cst_343 = arith.constant 0.000000e+00 : f32
    %408 = vector.broadcast %cst_343 : f32 to vector<8x256xf32>
    %409 = arith.maximumf %407, %408 : vector<8x256xf32>
    %410 = arith.truncf %409 : vector<8x256xf32> to vector<8x256xbf16>
    %c0_344 = arith.constant 0 : index
    %c0_345 = arith.constant 0 : index
    %411 = vector.load %arg6[%c0_344, %c0_345] : memref<256x256xbf16, #tpu.memory_space<vmem>>, vector<256x256xbf16>
    %cst_346 = arith.constant dense<0.000000e+00> : vector<8x256xf32>
    %412 = tpu.matmul %410, %411, %cst_346 {dimension_numbers = #tpu.dot_dimension_numbers<[1], [0], [0], [1], [0, 0, 1, 1], [], []>} : vector<8x256xbf16>, vector<256x256xbf16>, vector<8x256xf32> -> vector<8x256xf32>
    %c0_347 = arith.constant 0 : index
    %c0_348 = arith.constant 0 : index
    %413 = vector.load %arg7[%c0_347, %c0_348] : memref<1x256xf32, #tpu.memory_space<vmem>>, vector<1x256xf32>
    %414 = vector.broadcast %413 : vector<1x256xf32> to vector<8x256xf32>
    %415 = arith.addf %412, %414 : vector<8x256xf32>
    %cst_349 = arith.constant 0.000000e+00 : f32
    %416 = vector.broadcast %cst_349 : f32 to vector<8x256xf32>
    %417 = arith.maximumf %415, %416 : vector<8x256xf32>
    %418 = arith.truncf %417 : vector<8x256xf32> to vector<8x256xbf16>
    %c0_350 = arith.constant 0 : index
    %c0_351 = arith.constant 0 : index
    %419 = vector.load %arg8[%c0_350, %c0_351] : memref<256x128xbf16, #tpu.memory_space<vmem>>, vector<256x128xbf16>
    %cst_352 = arith.constant dense<0.000000e+00> : vector<8x128xf32>
    %420 = tpu.matmul %418, %419, %cst_352 {dimension_numbers = #tpu.dot_dimension_numbers<[1], [0], [0], [1], [0, 0, 1, 1], [], []>} : vector<8x256xbf16>, vector<256x128xbf16>, vector<8x128xf32> -> vector<8x128xf32>
    %c0_353 = arith.constant 0 : index
    %c0_354 = arith.constant 0 : index
    %421 = vector.load %arg9[%c0_353, %c0_354] : memref<1x128xf32, #tpu.memory_space<vmem>>, vector<1x128xf32>
    %422 = vector.broadcast %421 : vector<1x128xf32> to vector<8x128xf32>
    %423 = arith.addf %420, %422 : vector<8x128xf32>
    %cst_355 = arith.constant 0.000000e+00 : f32
    %424 = vector.broadcast %cst_355 : f32 to vector<8x128xf32>
    %425 = arith.maximumf %423, %424 : vector<8x128xf32>
    %426 = arith.truncf %425 : vector<8x128xf32> to vector<8x128xbf16>
    %c0_356 = arith.constant 0 : index
    %c0_357 = arith.constant 0 : index
    %427 = vector.load %arg10[%c0_356, %c0_357] : memref<128x2xbf16, #tpu.memory_space<vmem>>, vector<128x2xbf16>
    %cst_358 = arith.constant dense<0.000000e+00> : vector<8x2xf32>
    %428 = tpu.matmul %426, %427, %cst_358 {dimension_numbers = #tpu.dot_dimension_numbers<[1], [0], [0], [1], [0, 0, 1, 1], [], []>} : vector<8x128xbf16>, vector<128x2xbf16>, vector<8x2xf32> -> vector<8x2xf32>
    %c0_359 = arith.constant 0 : index
    %c0_360 = arith.constant 0 : index
    %429 = vector.load %arg11[%c0_359, %c0_360] : memref<1x2xf32, #tpu.memory_space<vmem>>, vector<1x2xf32>
    %430 = vector.broadcast %429 : vector<1x2xf32> to vector<8x2xf32>
    %431 = arith.addf %428, %430 : vector<8x2xf32>
    %c0_361 = arith.constant 0 : index
    %c0_362 = arith.constant 0 : index
    %432 = vector.load %arg12[%c0_361, %c0_362] : memref<8x2xf32, #tpu.memory_space<vmem>>, vector<8x2xf32>
    tpu.vector_store %arg12[%c0_361, %c0_362], %431 {strides = array<i32>} : memref<8x2xf32, #tpu.memory_space<vmem>>, vector<8x2xf32>,
    return
  }
  func.func @transform_0(%arg0: i32) -> (i32, i32, i32, i32) {
    %c0_i32 = arith.constant 0 : i32
    %c0_i32_0 = arith.constant 0 : i32
    %c0_i32_1 = arith.constant 0 : i32
    %c0_i32_2 = arith.constant 0 : i32
    return %c0_i32, %c0_i32_0, %arg0, %c0_i32_1 : i32, i32, i32, i32
  }
  func.func @transform_1(%arg0: i32) -> (i32, i32, i32, i32) {
    %c0_i32 = arith.constant 0 : i32
    %c0_i32_0 = arith.constant 0 : i32
    %c0_i32_1 = arith.constant 0 : i32
    %c0_i32_2 = arith.constant 0 : i32
    %c0_i32_3 = arith.constant 0 : i32
    return %c0_i32, %c0_i32_0, %c0_i32_1, %c0_i32_2 : i32, i32, i32, i32
  }
  func.func @transform_2(%arg0: i32) -> (i32, i32) {
    %c0_i32 = arith.constant 0 : i32
    %c0_i32_0 = arith.constant 0 : i32
    %c0_i32_1 = arith.constant 0 : i32
    return %c0_i32, %c0_i32_0 : i32, i32
  }
  func.func @transform_3(%arg0: i32) -> (i32, i32) {
    %c0_i32 = arith.constant 0 : i32
    %c0_i32_0 = arith.constant 0 : i32
    %c0_i32_1 = arith.constant 0 : i32
    return %c0_i32, %c0_i32_0 : i32, i32
  }
  func.func @transform_4(%arg0: i32) -> (i32, i32) {
    %c0_i32 = arith.constant 0 : i32
    %c0_i32_0 = arith.constant 0 : i32
    %c0_i32_1 = arith.constant 0 : i32
    return %c0_i32, %c0_i32_0 : i32, i32
  }
  func.func @transform_5(%arg0: i32) -> (i32, i32) {
    %c0_i32 = arith.constant 0 : i32
    %c0_i32_0 = arith.constant 0 : i32
    %c0_i32_1 = arith.constant 0 : i32
    return %c0_i32, %c0_i32_0 : i32, i32
  }
  func.func @transform_6(%arg0: i32) -> (i32, i32) {
    %c0_i32 = arith.constant 0 : i32
    %c0_i32_0 = arith.constant 0 : i32
    %c0_i32_1 = arith.constant 0 : i32
    return %c0_i32, %c0_i32_0 : i32, i32
  }
  func.func @transform_7(%arg0: i32) -> (i32, i32) {
    %c0_i32 = arith.constant 0 : i32
    %c0_i32_0 = arith.constant 0 : i32
    %c0_i32_1 = arith.constant 0 : i32
    return %c0_i32, %c0_i32_0 : i32, i32
  }
  func.func @transform_8(%arg0: i32) -> (i32, i32) {
    %c0_i32 = arith.constant 0 : i32
    %c0_i32_0 = arith.constant 0 : i32
    %c0_i32_1 = arith.constant 0 : i32
    return %c0_i32, %c0_i32_0 : i32, i32
  }
  func.func @transform_9(%arg0: i32) -> (i32, i32) {
    %c0_i32 = arith.constant 0 : i32
    %c0_i32_0 = arith.constant 0 : i32
    %c0_i32_1 = arith.constant 0 : i32
    return %c0_i32, %c0_i32_0 : i32, i32
  }
  func.func @transform_10(%arg0: i32) -> (i32, i32) {
    %c0_i32 = arith.constant 0 : i32
    %c0_i32_0 = arith.constant 0 : i32
    %c0_i32_1 = arith.constant 0 : i32
    return %c0_i32, %c0_i32_0 : i32, i32
  }
  func.func @transform_11(%arg0: i32) -> (i32, i32) {
    %c0_i32 = arith.constant 0 : i32
    %c0_i32_0 = arith.constant 0 : i32
    return %arg0, %c0_i32 : i32, i32
  }
}

</mosaic_0001>

<llo_original>
// kernel: fused_forward.1
$region0: #{fused_forward.1}
  #allocation0 [shape = 'u32[]', space=smem, size = 0x4, offset = 0x4, fixed_abs, tag = 'smem constant byte address 0x4 - core index']
  #allocation1 [shape = 'u32[144,128]{1,0:T(1,128)}', space=vmem, size = 0x12000, scoped, tag = 'internal scratch']
  %s0 = inlined_call_operand.vmem [shape: bf16[9,9,8,64], index: 0, kind: input, shape index: {}]
  %s1 = inlined_call_operand.vmem [shape: bf16[2,2,64,32], index: 1, kind: input, shape index: {}]
  %s2 = inlined_call_operand.vmem [shape: f32[1,32], index: 2, kind: input, shape index: {}]
  %s3 = inlined_call_operand.vmem [shape: bf16[512,256], index: 3, kind: input, shape index: {}]
  %s4 = inlined_call_operand.vmem [shape: f32[1,256], index: 4, kind: input, shape index: {}]
  %s5 = inlined_call_operand.vmem [shape: bf16[256,256], index: 5, kind: input, shape index: {}]
  %s6 = inlined_call_operand.vmem [shape: f32[1,256], index: 6, kind: input, shape index: {}]
  %s7 = inlined_call_operand.vmem [shape: bf16[256,128], index: 7, kind: input, shape index: {}]
  %s8 = inlined_call_operand.vmem [shape: f32[1,128], index: 8, kind: input, shape index: {}]
  %s9 = inlined_call_operand.vmem [shape: bf16[128,2], index: 9, kind: input, shape index: {}]
  %s10 = inlined_call_operand.vmem [shape: f32[1,2], index: 10, kind: input, shape index: {}]
  %s11 = inlined_call_operand.vmem [shape: f32[8,2], index: 11, kind: output, shape index: {}]
  %s12 = sld [smem:[#allocation0]]
  $region54: #{fused_forward.1} parent=0
    _
  %s14 = ssub.s32 1, %s12
  %s15 = scalar_select 0, %s14, %s12
  // Predicated region
  $region2: #{fused_forward.1} parent=0 // pred_check
    _
  $region3: #{fused_forward.1} parent=0 // pred_check_branch
    %17 = sbr.rel (0) target = $region5
  $region4: #{fused_forward.1} parent=0 // pred_region
    _
  $region5: #{fused_forward.1} parent=0 // pred_fallthru
    _
  // Predicated region
  $region6: #{fused_forward.1} parent=0 // pred_check
    _
  $region7: #{fused_forward.1} parent=0 // pred_check_branch
    %19 = sbr.rel (0) target = $region9
  $region8: #{fused_forward.1} parent=0 // pred_region
    _
  $region9: #{fused_forward.1} parent=0 // pred_fallthru
    _
  // Predicated region
  $region10: #{fused_forward.1} parent=0 // pred_check
    _
  $region11: #{fused_forward.1} parent=0 // pred_check_branch
    %21 = sbr.rel (0) target = $region13
  $region12: #{fused_forward.1} parent=0 // pred_region
    _
  $region13: #{fused_forward.1} parent=0 // pred_fallthru
    _
  // Predicated region
  $region14: #{fused_forward.1} parent=0 // pred_check
    _
  $region15: #{fused_forward.1} parent=0 // pred_check_branch
    %23 = sbr.rel (0) target = $region17
  $region16: #{fused_forward.1} parent=0 // pred_region
    _
  $region17: #{fused_forward.1} parent=0 // pred_fallthru
    _
  // Predicated region
  $region18: #{fused_forward.1} parent=0 // pred_check
    _
  $region19: #{fused_forward.1} parent=0 // pred_check_branch
    %25 = sbr.rel (0) target = $region21
  $region20: #{fused_forward.1} parent=0 // pred_region
    _
  $region21: #{fused_forward.1} parent=0 // pred_fallthru
    _
  // Predicated region
  $region22: #{fused_forward.1} parent=0 // pred_check
    _
  $region23: #{fused_forward.1} parent=0 // pred_check_branch
    %27 = sbr.rel (0) target = $region25
  $region24: #{fused_forward.1} parent=0 // pred_region
    _
  $region25: #{fused_forward.1} parent=0 // pred_fallthru
    _
  // Predicated region
  $region26: #{fused_forward.1} parent=0 // pred_check
    _
  $region27: #{fused_forward.1} parent=0 // pred_check_branch
    %29 = sbr.rel (0) target = $region29
  $region28: #{fused_forward.1} parent=0 // pred_region
    _
  $region29: #{fused_forward.1} parent=0 // pred_fallthru
    _
  // Predicated region
  $region30: #{fused_forward.1} parent=0 // pred_check
    _
  $region31: #{fused_forward.1} parent=0 // pred_check_branch
    %31 = sbr.rel (0) target = $region33
  $region32: #{fused_forward.1} parent=0 // pred_region
    _
  $region33: #{fused_forward.1} parent=0 // pred_fallthru
    _
  // Predicated region
  $region34: #{fused_forward.1} parent=0 // pred_check
    _
  $region35: #{fused_forward.1} parent=0 // pred_check_branch
    %33 = sbr.rel (0) target = $region37
  $region36: #{fused_forward.1} parent=0 // pred_region
    _
  $region37: #{fused_forward.1} parent=0 // pred_fallthru
    _
  // Predicated region
  $region38: #{fused_forward.1} parent=0 // pred_check
    _
  $region39: #{fused_forward.1} parent=0 // pred_check_branch
    %35 = sbr.rel (0) target = $region41
  $region40: #{fused_forward.1} parent=0 // pred_region
    _
  $region41: #{fused_forward.1} parent=0 // pred_fallthru
    _
  // Predicated region
  $region42: #{fused_forward.1} parent=0 // pred_check
    _
  $region43: #{fused_forward.1} parent=0 // pred_check_branch
    %37 = sbr.rel (0) target = $region45
  $region44: #{fused_forward.1} parent=0 // pred_region
    _
  $region45: #{fused_forward.1} parent=0 // pred_fallthru
    _
  %v39 = vld [vmem:[%s0] sm:$0xf]
  %v40 = vunpack.c.l.bf16 %v39
  %s41 = scalar_lea.vmem %s0, 4
  %v42 = vld [vmem:[%s41] sm:$0xf]
  %v43 = vunpack.c.l.bf16 %v42
  %s44 = scalar_lea.vmem %s0, 8
  %v45 = vld [vmem:[%s44] sm:$0xf]
  %v46 = vunpack.c.l.bf16 %v45
  %s47 = scalar_lea.vmem %s0, 12
  %v48 = vld [vmem:[%s47] sm:$0xf]
  %v49 = vunpack.c.l.bf16 %v48
  %s50 = scalar_lea.vmem %s0, 16
  %v51 = vld [vmem:[%s50] sm:$0xf]
  %v52 = vunpack.c.l.bf16 %v51
  %s53 = scalar_lea.vmem %s0, 20
  %v54 = vld [vmem:[%s53] sm:$0xf]
  %v55 = vunpack.c.l.bf16 %v54
  %s56 = scalar_lea.vmem %s0, 24
  %v57 = vld [vmem:[%s56] sm:$0xf]
  %v58 = vunpack.c.l.bf16 %v57
  %s59 = scalar_lea.vmem %s0, 28
  %v60 = vld [vmem:[%s59] sm:$0xf]
  %v61 = vunpack.c.l.bf16 %v60
  %s62 = scalar_lea.vmem %s0, 32
  %v63 = vld [vmem:[%s62] sm:$0xf]
  %v64 = vunpack.c.l.bf16 %v63
  %s65 = scalar_lea.vmem %s0, 36
  %v66 = vld [vmem:[%s65] sm:$0xf]
  %v67 = vunpack.c.l.bf16 %v66
  %s68 = scalar_lea.vmem %s0, 40
  %v69 = vld [vmem:[%s68] sm:$0xf]
  %v70 = vunpack.c.l.bf16 %v69
  %s71 = scalar_lea.vmem %s0, 44
  %v72 = vld [vmem:[%s71] sm:$0xf]
  %v73 = vunpack.c.l.bf16 %v72
  %s74 = scalar_lea.vmem %s0, 48
  %v75 = vld [vmem:[%s74] sm:$0xf]
  %v76 = vunpack.c.l.bf16 %v75
  %s77 = scalar_lea.vmem %s0, 52
  %v78 = vld [vmem:[%s77] sm:$0xf]
  %v79 = vunpack.c.l.bf16 %v78
  %s80 = scalar_lea.vmem %s0, 56
  %v81 = vld [vmem:[%s80] sm:$0xf]
  %v82 = vunpack.c.l.bf16 %v81
  %s83 = scalar_lea.vmem %s0, 60
  %v84 = vld [vmem:[%s83] sm:$0xf]
  %v85 = vunpack.c.l.bf16 %v84
  %s86 = scalar_lea.vmem %s0, 64
  %v87 = vld [vmem:[%s86] sm:$0xf]
  %v88 = vunpack.c.l.bf16 %v87
  %s89 = scalar_lea.vmem %s0, 68
  %v90 = vld [vmem:[%s89] sm:$0xf]
  %v91 = vunpack.c.l.bf16 %v90
  %s92 = scalar_lea.vmem %s0, 72
  %v93 = vld [vmem:[%s92] sm:$0xf]
  %v94 = vunpack.c.l.bf16 %v93
  %s95 = scalar_lea.vmem %s0, 76
  %v96 = vld [vmem:[%s95] sm:$0xf]
  %v97 = vunpack.c.l.bf16 %v96
  %s98 = scalar_lea.vmem %s0, 80
  %v99 = vld [vmem:[%s98] sm:$0xf]
  %v100 = vunpack.c.l.bf16 %v99
  %s101 = scalar_lea.vmem %s0, 84
  %v102 = vld [vmem:[%s101] sm:$0xf]
  %v103 = vunpack.c.l.bf16 %v102
  %s104 = scalar_lea.vmem %s0, 88
  %v105 = vld [vmem:[%s104] sm:$0xf]
  %v106 = vunpack.c.l.bf16 %v105
  %s107 = scalar_lea.vmem %s0, 92
  %v108 = vld [vmem:[%s107] sm:$0xf]
  %v109 = vunpack.c.l.bf16 %v108
  %s110 = scalar_lea.vmem %s0, 96
  %v111 = vld [vmem:[%s110] sm:$0xf]
  %v112 = vunpack.c.l.bf16 %v111
  %s113 = scalar_lea.vmem %s0, 100
  %v114 = vld [vmem:[%s113] sm:$0xf]
  %v115 = vunpack.c.l.bf16 %v114
  %s116 = scalar_lea.vmem %s0, 104
  %v117 = vld [vmem:[%s116] sm:$0xf]
  %v118 = vunpack.c.l.bf16 %v117
  %s119 = scalar_lea.vmem %s0, 108
  %v120 = vld [vmem:[%s119] sm:$0xf]
  %v121 = vunpack.c.l.bf16 %v120
  %s122 = scalar_lea.vmem %s0, 112
  %v123 = vld [vmem:[%s122] sm:$0xf]
  %v124 = vunpack.c.l.bf16 %v123
  %s125 = scalar_lea.vmem %s0, 116
  %v126 = vld [vmem:[%s125] sm:$0xf]
  %v127 = vunpack.c.l.bf16 %v126
  %s128 = scalar_lea.vmem %s0, 120
  %v129 = vld [vmem:[%s128] sm:$0xf]
  %v130 = vunpack.c.l.bf16 %v129
  %s131 = scalar_lea.vmem %s0, 124
  %v132 = vld [vmem:[%s131] sm:$0xf]
  %v133 = vunpack.c.l.bf16 %v132
  %s134 = scalar_lea.vmem %s0, 128
  %v135 = vld [vmem:[%s134] sm:$0xf]
  %v136 = vunpack.c.l.bf16 %v135
  %s137 = scalar_lea.vmem %s0, 132
  %v138 = vld [vmem:[%s137] sm:$0xf]
  %v139 = vunpack.c.l.bf16 %v138
  %s140 = scalar_lea.vmem %s0, 136
  %v141 = vld [vmem:[%s140] sm:$0xf]
  %v142 = vunpack.c.l.bf16 %v141
  %s143 = scalar_lea.vmem %s0, 140
  %v144 = vld [vmem:[%s143] sm:$0xf]
  %v145 = vunpack.c.l.bf16 %v144
  %s146 = scalar_lea.vmem %s0, 144
  %v147 = vld [vmem:[%s146] sm:$0xf]
  %v148 = vunpack.c.l.bf16 %v147
  %s149 = scalar_lea.vmem %s0, 148
  %v150 = vld [vmem:[%s149] sm:$0xf]
  %v151 = vunpack.c.l.bf16 %v150
  %s152 = scalar_lea.vmem %s0, 152
  %v153 = vld [vmem:[%s152] sm:$0xf]
  %v154 = vunpack.c.l.bf16 %v153
  %s155 = scalar_lea.vmem %s0, 156
  %v156 = vld [vmem:[%s155] sm:$0xf]
  %v157 = vunpack.c.l.bf16 %v156
  %s158 = scalar_lea.vmem %s0, 160
  %v159 = vld [vmem:[%s158] sm:$0xf]
  %v160 = vunpack.c.l.bf16 %v159
  %s161 = scalar_lea.vmem %s0, 164
  %v162 = vld [vmem:[%s161] sm:$0xf]
  %v163 = vunpack.c.l.bf16 %v162
  %s164 = scalar_lea.vmem %s0, 168
  %v165 = vld [vmem:[%s164] sm:$0xf]
  %v166 = vunpack.c.l.bf16 %v165
  %s167 = scalar_lea.vmem %s0, 172
  %v168 = vld [vmem:[%s167] sm:$0xf]
  %v169 = vunpack.c.l.bf16 %v168
  %s170 = scalar_lea.vmem %s0, 176
  %v171 = vld [vmem:[%s170] sm:$0xf]
  %v172 = vunpack.c.l.bf16 %v171
  %s173 = scalar_lea.vmem %s0, 180
  %v174 = vld [vmem:[%s173] sm:$0xf]
  %v175 = vunpack.c.l.bf16 %v174
  %s176 = scalar_lea.vmem %s0, 184
  %v177 = vld [vmem:[%s176] sm:$0xf]
  %v178 = vunpack.c.l.bf16 %v177
  %s179 = scalar_lea.vmem %s0, 188
  %v180 = vld [vmem:[%s179] sm:$0xf]
  %v181 = vunpack.c.l.bf16 %v180
  %s182 = scalar_lea.vmem %s0, 192
  %v183 = vld [vmem:[%s182] sm:$0xf]
  %v184 = vunpack.c.l.bf16 %v183
  %s185 = scalar_lea.vmem %s0, 196
  %v186 = vld [vmem:[%s185] sm:$0xf]
  %v187 = vunpack.c.l.bf16 %v186
  %s188 = scalar_lea.vmem %s0, 200
  %v189 = vld [vmem:[%s188] sm:$0xf]
  %v190 = vunpack.c.l.bf16 %v189
  %s191 = scalar_lea.vmem %s0, 204
  %v192 = vld [vmem:[%s191] sm:$0xf]
  %v193 = vunpack.c.l.bf16 %v192
  %s194 = scalar_lea.vmem %s0, 208
  %v195 = vld [vmem:[%s194] sm:$0xf]
  %v196 = vunpack.c.l.bf16 %v195
  %s197 = scalar_lea.vmem %s0, 212
  %v198 = vld [vmem:[%s197] sm:$0xf]
  %v199 = vunpack.c.l.bf16 %v198
  %s200 = scalar_lea.vmem %s0, 216
  %v201 = vld [vmem:[%s200] sm:$0xf]
  %v202 = vunpack.c.l.bf16 %v201
  %s203 = scalar_lea.vmem %s0, 220
  %v204 = vld [vmem:[%s203] sm:$0xf]
  %v205 = vunpack.c.l.bf16 %v204
  %s206 = scalar_lea.vmem %s0, 224
  %v207 = vld [vmem:[%s206] sm:$0xf]
  %v208 = vunpack.c.l.bf16 %v207
  %s209 = scalar_lea.vmem %s0, 228
  %v210 = vld [vmem:[%s209] sm:$0xf]
  %v211 = vunpack.c.l.bf16 %v210
  %s212 = scalar_lea.vmem %s0, 232
  %v213 = vld [vmem:[%s212] sm:$0xf]
  %v214 = vunpack.c.l.bf16 %v213
  %s215 = scalar_lea.vmem %s0, 236
  %v216 = vld [vmem:[%s215] sm:$0xf]
  %v217 = vunpack.c.l.bf16 %v216
  %s218 = scalar_lea.vmem %s0, 240
  %v219 = vld [vmem:[%s218] sm:$0xf]
  %v220 = vunpack.c.l.bf16 %v219
  %s221 = scalar_lea.vmem %s0, 244
  %v222 = vld [vmem:[%s221] sm:$0xf]
  %v223 = vunpack.c.l.bf16 %v222
  %s224 = scalar_lea.vmem %s0, 248
  %v225 = vld [vmem:[%s224] sm:$0xf]
  %v226 = vunpack.c.l.bf16 %v225
  %s227 = scalar_lea.vmem %s0, 252
  %v228 = vld [vmem:[%s227] sm:$0xf]
  %v229 = vunpack.c.l.bf16 %v228
  %s230 = scalar_lea.vmem %s0, 256
  %v231 = vld [vmem:[%s230] sm:$0xf]
  %v232 = vunpack.c.l.bf16 %v231
  %s233 = scalar_lea.vmem %s0, 260
  %v234 = vld [vmem:[%s233] sm:$0xf]
  %v235 = vunpack.c.l.bf16 %v234
  %s236 = scalar_lea.vmem %s0, 264
  %v237 = vld [vmem:[%s236] sm:$0xf]
  %v238 = vunpack.c.l.bf16 %v237
  %s239 = scalar_lea.vmem %s0, 268
  %v240 = vld [vmem:[%s239] sm:$0xf]
  %v241 = vunpack.c.l.bf16 %v240
  %s242 = scalar_lea.vmem %s0, 272
  %v243 = vld [vmem:[%s242] sm:$0xf]
  %v244 = vunpack.c.l.bf16 %v243
  %s245 = scalar_lea.vmem %s0, 276
  %v246 = vld [vmem:[%s245] sm:$0xf]
  %v247 = vunpack.c.l.bf16 %v246
  %s248 = scalar_lea.vmem %s0, 280
  %v249 = vld [vmem:[%s248] sm:$0xf]
  %v250 = vunpack.c.l.bf16 %v249
  %s251 = scalar_lea.vmem %s0, 284
  %v252 = vld [vmem:[%s251] sm:$0xf]
  %v253 = vunpack.c.l.bf16 %v252
  %s254 = scalar_lea.vmem %s0, 288
  %v255 = vld [vmem:[%s254] sm:$0xf]
  %v256 = vunpack.c.l.bf16 %v255
  %s257 = scalar_lea.vmem %s0, 292
  %v258 = vld [vmem:[%s257] sm:$0xf]
  %v259 = vunpack.c.l.bf16 %v258
  %s260 = scalar_lea.vmem %s0, 296
  %v261 = vld [vmem:[%s260] sm:$0xf]
  %v262 = vunpack.c.l.bf16 %v261
  %s263 = scalar_lea.vmem %s0, 300
  %v264 = vld [vmem:[%s263] sm:$0xf]
  %v265 = vunpack.c.l.bf16 %v264
  %s266 = scalar_lea.vmem %s0, 304
  %v267 = vld [vmem:[%s266] sm:$0xf]
  %v268 = vunpack.c.l.bf16 %v267
  %s269 = scalar_lea.vmem %s0, 308
  %v270 = vld [vmem:[%s269] sm:$0xf]
  %v271 = vunpack.c.l.bf16 %v270
  %s272 = scalar_lea.vmem %s0, 312
  %v273 = vld [vmem:[%s272] sm:$0xf]
  %v274 = vunpack.c.l.bf16 %v273
  %s275 = scalar_lea.vmem %s0, 316
  %v276 = vld [vmem:[%s275] sm:$0xf]
  %v277 = vunpack.c.l.bf16 %v276
  %s278 = scalar_lea.vmem %s0, 320
  %v279 = vld [vmem:[%s278] sm:$0xf]
  %v280 = vunpack.c.l.bf16 %v279
  %v281 = vpack.c.bf16 %v43, %v40
  %v282 = vpack.c.bf16 %v49, %v46
  %v283 = vpack.c.bf16 %v55, %v52
  %v284 = vpack.c.bf16 %v61, %v58
  %v285 = vpack.c.bf16 %v70, %v67
  %v286 = vpack.c.bf16 %v76, %v73
  %v287 = vpack.c.bf16 %v82, %v79
  %v288 = vpack.c.bf16 %v88, %v85
  %v289 = vpack.c.bf16 %v97, %v94
  %v290 = vpack.c.bf16 %v103, %v100
  %v291 = vpack.c.bf16 %v109, %v106
  %v292 = vpack.c.bf16 %v115, %v112
  %v293 = vpack.c.bf16 %v124, %v121
  %v294 = vpack.c.bf16 %v130, %v127
  %v295 = vpack.c.bf16 %v136, %v133
  %v296 = vpack.c.bf16 %v142, %v139
  %v297 = vpack.c.bf16 %v151, %v148
  %v298 = vpack.c.bf16 %v157, %v154
  %v299 = vpack.c.bf16 %v163, %v160
  %v300 = vpack.c.bf16 %v169, %v166
  %v301 = vpack.c.bf16 %v178, %v175
  %v302 = vpack.c.bf16 %v184, %v181
  %v303 = vpack.c.bf16 %v190, %v187
  %v304 = vpack.c.bf16 %v196, %v193
  %v305 = vpack.c.bf16 %v205, %v202
  %v306 = vpack.c.bf16 %v211, %v208
  %v307 = vpack.c.bf16 %v217, %v214
  %v308 = vpack.c.bf16 %v223, %v220
  %v309 = vpack.c.bf16 %v232, %v229
  %v310 = vpack.c.bf16 %v238, %v235
  %v311 = vpack.c.bf16 %v244, %v241
  %v312 = vpack.c.bf16 %v250, %v247
  %v313 = vld [vmem:[%s1] sm:$0xf]
  %v314 = vld [vmem:[%s1 + $0x4] sm:$0xf]
  %v315 = vld [vmem:[%s1 + $0x8] sm:$0xf]
  %v316 = vld [vmem:[%s1 + $0xc] sm:$0xf]
  %v317 = vld [vmem:[%s1 + $0x10] sm:$0xf]
  %v318 = vld [vmem:[%s1 + $0x14] sm:$0xf]
  %v319 = vld [vmem:[%s1 + $0x18] sm:$0xf]
  %v320 = vld [vmem:[%s1 + $0x1c] sm:$0xf]
  %v321 = vpack.c.bf16 %v46, %v43
  %v322 = vpack.c.bf16 %v52, %v49
  %v323 = vpack.c.bf16 %v58, %v55
  %v324 = vpack.c.bf16 %v64, %v61
  %v325 = vpack.c.bf16 %v73, %v70
  %v326 = vpack.c.bf16 %v79, %v76
  %v327 = vpack.c.bf16 %v85, %v82
  %v328 = vpack.c.bf16 %v91, %v88
  %v329 = vpack.c.bf16 %v100, %v97
  %v330 = vpack.c.bf16 %v106, %v103
  %v331 = vpack.c.bf16 %v112, %v109
  %v332 = vpack.c.bf16 %v118, %v115
  %v333 = vpack.c.bf16 %v127, %v124
  %v334 = vpack.c.bf16 %v133, %v130
  %v335 = vpack.c.bf16 %v139, %v136
  %v336 = vpack.c.bf16 %v145, %v142
  %v337 = vpack.c.bf16 %v154, %v151
  %v338 = vpack.c.bf16 %v160, %v157
  %v339 = vpack.c.bf16 %v166, %v163
  %v340 = vpack.c.bf16 %v172, %v169
  %v341 = vpack.c.bf16 %v181, %v178
  %v342 = vpack.c.bf16 %v187, %v184
  %v343 = vpack.c.bf16 %v193, %v190
  %v344 = vpack.c.bf16 %v199, %v196
  %v345 = vpack.c.bf16 %v208, %v205
  %v346 = vpack.c.bf16 %v214, %v211
  %v347 = vpack.c.bf16 %v220, %v217
  %v348 = vpack.c.bf16 %v226, %v223
  %v349 = vpack.c.bf16 %v235, %v232
  %v350 = vpack.c.bf16 %v241, %v238
  %v351 = vpack.c.bf16 %v247, %v244
  %v352 = vpack.c.bf16 %v253, %v250
  %s353 = scalar_lea.vmem %s1, 32
  %v354 = vld [vmem:[%s353] sm:$0xf]
  %v355 = vld [vmem:[%s353 + $0x4] sm:$0xf]
  %v356 = vld [vmem:[%s353 + $0x8] sm:$0xf]
  %v357 = vld [vmem:[%s353 + $0xc] sm:$0xf]
  %v358 = vld [vmem:[%s353 + $0x10] sm:$0xf]
  %v359 = vld [vmem:[%s353 + $0x14] sm:$0xf]
  %v360 = vld [vmem:[%s353 + $0x18] sm:$0xf]
  %v361 = vld [vmem:[%s353 + $0x1c] sm:$0xf]
  %v370 = vunpack.c.l.b16 %v354
  %v371 = vunpack.c.l.b16 %v355
  %v372 = vunpack.c.l.b16 %v356
  %v373 = vunpack.c.l.b16 %v357
  %v374 = vunpack.c.l.b16 %v358
  %v375 = vunpack.c.l.b16 %v359
  %v376 = vunpack.c.l.b16 %v360
  %v377 = vunpack.c.l.b16 %v361
  %v378 = vpack.c.b16 %v371, %v370
  %v379 = vpack.c.b16 %v373, %v372
  %v380 = vpack.c.b16 %v375, %v374
  %v381 = vpack.c.b16 %v377, %v376
  %vm386 = vcmask 523264
  %v388 = vsel %vm386, %v321, 0
  %v391 = vsel %vm386, %v322, 0
  %v394 = vsel %vm386, %v323, 0
  %v397 = vsel %vm386, %v324, 0
  %v400 = vsel %vm386, %v325, 0
  %v403 = vsel %vm386, %v326, 0
  %v406 = vsel %vm386, %v327, 0
  %v409 = vsel %vm386, %v328, 0
  %v412 = vsel %vm386, %v329, 0
  %v415 = vsel %vm386, %v330, 0
  %v418 = vsel %vm386, %v331, 0
  %v421 = vsel %vm386, %v332, 0
  %v424 = vsel %vm386, %v333, 0
  %v427 = vsel %vm386, %v334, 0
  %v430 = vsel %vm386, %v335, 0
  %v433 = vsel %vm386, %v336, 0
  %v436 = vsel %vm386, %v337, 0
  %v439 = vsel %vm386, %v338, 0
  %v442 = vsel %vm386, %v339, 0
  %v445 = vsel %vm386, %v340, 0
  %v448 = vsel %vm386, %v341, 0
  %v451 = vsel %vm386, %v342, 0
  %v454 = vsel %vm386, %v343, 0
  %v457 = vsel %vm386, %v344, 0
  %v460 = vsel %vm386, %v345, 0
  %v463 = vsel %vm386, %v346, 0
  %v466 = vsel %vm386, %v347, 0
  %v469 = vsel %vm386, %v348, 0
  %v472 = vsel %vm386, %v349, 0
  %v475 = vsel %vm386, %v350, 0
  %v478 = vsel %vm386, %v351, 0
  %v481 = vsel %vm386, %v352, 0
  %483 = vmatprep.subr.bf16.mxu0 0
  %484 = vmatpush1.bf16.msra.mxu0 %v378
  %485 = vmatprep.subr.bf16.mxu0 0
  %486 = vmatpush1.bf16.msra.mxu0 %v379
  %487 = vmatprep.subr.bf16.mxu0 0
  %488 = vmatpush1.bf16.msra.mxu0 %v380
  %489 = vmatprep.subr.bf16.mxu0 0
  %490 = vmatpush1.bf16.msra.mxu0 %v381
  %491 = vmatprep.subr.bf16.mxu0 0
  %492 = vmatpush1.bf16.msra.mxu0 0
  %493 = vmatprep.subr.bf16.mxu0 0
  %494 = vmatpush1.bf16.msra.mxu0 0
  %495 = vmatprep.subr.bf16.mxu0 0
  %496 = vmatpush1.bf16.msra.mxu0 0
  %497 = vmatprep.subr.bf16.mxu0 0
  %498 = vmatpush1.bf16.msra.mxu0 0
  %499 = vmatprep.subr.bf16.mxu0 0
  %500 = vmatpush1.bf16.msra.mxu0 0
  %501 = vmatprep.subr.bf16.mxu0 0
  %502 = vmatpush1.bf16.msra.mxu0 0
  %503 = vmatprep.subr.bf16.mxu0 0
  %504 = vmatpush1.bf16.msra.mxu0 0
  %505 = vmatprep.subr.bf16.mxu0 0
  %506 = vmatpush1.bf16.msra.mxu0 0
  %507 = vmatprep.subr.bf16.mxu0 0
  %508 = vmatpush1.bf16.msra.mxu0 0
  %509 = vmatprep.subr.bf16.mxu0 0
  %510 = vmatpush1.bf16.msra.mxu0 0
  %511 = vmatprep.subr.bf16.mxu0 0
  %512 = vmatpush1.bf16.msra.mxu0 0
  %513 = vmatprep.subr.bf16.mxu0 0
  %514 = vmatpush1.bf16.msra.mxu0 0
  %515 = vmatprep.mubr.bf16.mxu0 0
  %516 = vmatmul.mubr.bf16.gmra.mrb[0].mxu0 %v388
  %v517 = vpop.f32.mrb[0].mxu0
  %v518 = vadd.f32 0.0, %v517
  %v519 = vpop.f32.mrb[0].mxu0
  %v520 = vpop.f32.mrb[0].mxu0
  %v521 = vadd.f32 0.0, %v520
  %v522 = vpop.f32.mrb[0].mxu0
  %523 = vmatprep.mubr.bf16.mxu0 0
  %524 = vmatmul.mubr.bf16.gmra.mrb[0].mxu0 %v391
  %v525 = vpop.f32.mrb[0].mxu0
  %v526 = vadd.f32 0.0, %v525
  %v527 = vpop.f32.mrb[0].mxu0
  %v528 = vpop.f32.mrb[0].mxu0
  %v529 = vadd.f32 0.0, %v528
  %v530 = vpop.f32.mrb[0].mxu0
  %531 = vmatprep.mubr.bf16.mxu0 0
  %532 = vmatmul.mubr.bf16.gmra.mrb[0].mxu0 %v394
  %v533 = vpop.f32.mrb[0].mxu0
  %v534 = vadd.f32 0.0, %v533
  %v535 = vpop.f32.mrb[0].mxu0
  %v536 = vpop.f32.mrb[0].mxu0
  %v537 = vadd.f32 0.0, %v536
  %v538 = vpop.f32.mrb[0].mxu0
  %539 = vmatprep.mubr.bf16.mxu0 0
  %540 = vmatmul.mubr.bf16.gmra.mrb[0].mxu0 %v397
  %v541 = vpop.f32.mrb[0].mxu0
  %v542 = vadd.f32 0.0, %v541
  %v543 = vpop.f32.mrb[0].mxu0
  %v544 = vpop.f32.mrb[0].mxu0
  %v545 = vadd.f32 0.0, %v544
  %v546 = vpop.f32.mrb[0].mxu0
  %547 = vmatprep.mubr.bf16.mxu0 0
  %548 = vmatmul.mubr.bf16.gmra.mrb[0].mxu0 %v400
  %v549 = vpop.f32.mrb[0].mxu0
  %v550 = vadd.f32 0.0, %v549
  %v551 = vpop.f32.mrb[0].mxu0
  %v552 = vpop.f32.mrb[0].mxu0
  %v553 = vadd.f32 0.0, %v552
  %v554 = vpop.f32.mrb[0].mxu0
  %555 = vmatprep.mubr.bf16.mxu0 0
  %556 = vmatmul.mubr.bf16.gmra.mrb[0].mxu0 %v403
  %v557 = vpop.f32.mrb[0].mxu0
  %v558 = vadd.f32 0.0, %v557
  %v559 = vpop.f32.mrb[0].mxu0
  %v560 = vpop.f32.mrb[0].mxu0
  %v561 = vadd.f32 0.0, %v560
  %v562 = vpop.f32.mrb[0].mxu0
  %563 = vmatprep.mubr.bf16.mxu0 0
  %564 = vmatmul.mubr.bf16.gmra.mrb[0].mxu0 %v406
  %v565 = vpop.f32.mrb[0].mxu0
  %v566 = vadd.f32 0.0, %v565
  %v567 = vpop.f32.mrb[0].mxu0
  %v568 = vpop.f32.mrb[0].mxu0
  %v569 = vadd.f32 0.0, %v568
  %v570 = vpop.f32.mrb[0].mxu0
  %571 = vmatprep.mubr.bf16.mxu0 0
  %572 = vmatmul.mubr.bf16.gmra.mrb[0].mxu0 %v409
  %v573 = vpop.f32.mrb[0].mxu0
  %v574 = vadd.f32 0.0, %v573
  %v575 = vpop.f32.mrb[0].mxu0
  %v576 = vpop.f32.mrb[0].mxu0
  %v577 = vadd.f32 0.0, %v576
  %v578 = vpop.f32.mrb[0].mxu0
  %579 = vmatprep.mubr.bf16.mxu0 0
  %580 = vmatmul.mubr.bf16.gmra.mrb[0].mxu0 %v412
  %v581 = vpop.f32.mrb[0].mxu0
  %v582 = vadd.f32 0.0, %v581
  %v583 = vpop.f32.mrb[0].mxu0
  %v584 = vpop.f32.mrb[0].mxu0
  %v585 = vadd.f32 0.0, %v584
  %v586 = vpop.f32.mrb[0].mxu0
  %587 = vmatprep.mubr.bf16.mxu0 0
  %588 = vmatmul.mubr.bf16.gmra.mrb[0].mxu0 %v415
  %v589 = vpop.f32.mrb[0].mxu0
  %v590 = vadd.f32 0.0, %v589
  %v591 = vpop.f32.mrb[0].mxu0
  %v592 = vpop.f32.mrb[0].mxu0
  %v593 = vadd.f32 0.0, %v592
  %v594 = vpop.f32.mrb[0].mxu0
  %595 = vmatprep.mubr.bf16.mxu0 0
  %596 = vmatmul.mubr.bf16.gmra.mrb[0].mxu0 %v418
  %v597 = vpop.f32.mrb[0].mxu0
  %v598 = vadd.f32 0.0, %v597
  %v599 = vpop.f32.mrb[0].mxu0
  %v600 = vpop.f32.mrb[0].mxu0
  %v601 = vadd.f32 0.0, %v600
  %v602 = vpop.f32.mrb[0].mxu0
  %603 = vmatprep.mubr.bf16.mxu0 0
  %604 = vmatmul.mubr.bf16.gmra.mrb[0].mxu0 %v421
  %v605 = vpop.f32.mrb[0].mxu0
  %v606 = vadd.f32 0.0, %v605
  %v607 = vpop.f32.mrb[0].mxu0
  %v608 = vpop.f32.mrb[0].mxu0
  %v609 = vadd.f32 0.0, %v608
  %v610 = vpop.f32.mrb[0].mxu0
  %611 = vmatprep.mubr.bf16.mxu0 0
  %612 = vmatmul.mubr.bf16.gmra.mrb[0].mxu0 %v424
  %v613 = vpop.f32.mrb[0].mxu0
  %v614 = vadd.f32 0.0, %v613
  %v615 = vpop.f32.mrb[0].mxu0
  %v616 = vpop.f32.mrb[0].mxu0
  %v617 = vadd.f32 0.0, %v616
  %v618 = vpop.f32.mrb[0].mxu0
  %619 = vmatprep.mubr.bf16.mxu0 0
  %620 = vmatmul.mubr.bf16.gmra.mrb[0].mxu0 %v427
  %v621 = vpop.f32.mrb[0].mxu0
  %v622 = vadd.f32 0.0, %v621
  %v623 = vpop.f32.mrb[0].mxu0
  %v624 = vpop.f32.mrb[0].mxu0
  %v625 = vadd.f32 0.0, %v624
  %v626 = vpop.f32.mrb[0].mxu0
  %627 = vmatprep.mubr.bf16.mxu0 0
  %628 = vmatmul.mubr.bf16.gmra.mrb[0].mxu0 %v430
  %v629 = vpop.f32.mrb[0].mxu0
  %v630 = vadd.f32 0.0, %v629
  %v631 = vpop.f32.mrb[0].mxu0
  %v632 = vpop.f32.mrb[0].mxu0
  %v633 = vadd.f32 0.0, %v632
  %v634 = vpop.f32.mrb[0].mxu0
  %635 = vmatprep.mubr.bf16.mxu0 0
  %636 = vmatmul.mubr.bf16.gmra.mrb[0].mxu0 %v433
  %v637 = vpop.f32.mrb[0].mxu0
  %v638 = vadd.f32 0.0, %v637
  %v639 = vpop.f32.mrb[0].mxu0
  %v640 = vpop.f32.mrb[0].mxu0
  %v641 = vadd.f32 0.0, %v640
  %v642 = vpop.f32.mrb[0].mxu0
  %643 = vmatprep.mubr.bf16.mxu0 0
  %644 = vmatmul.mubr.bf16.gmra.mrb[0].mxu0 %v436
  %v645 = vpop.f32.mrb[0].mxu0
  %v646 = vadd.f32 0.0, %v645
  %v647 = vpop.f32.mrb[0].mxu0
  %v648 = vpop.f32.mrb[0].mxu0
  %v649 = vadd.f32 0.0, %v648
  %v650 = vpop.f32.mrb[0].mxu0
  %651 = vmatprep.mubr.bf16.mxu0 0
  %652 = vmatmul.mubr.bf16.gmra.mrb[0].mxu0 %v439
  %v653 = vpop.f32.mrb[0].mxu0
  %v654 = vadd.f32 0.0, %v653
  %v655 = vpop.f32.mrb[0].mxu0
  %v656 = vpop.f32.mrb[0].mxu0
  %v657 = vadd.f32 0.0, %v656
  %v658 = vpop.f32.mrb[0].mxu0
  %659 = vmatprep.mubr.bf16.mxu0 0
  %660 = vmatmul.mubr.bf16.gmra.mrb[0].mxu0 %v442
  %v661 = vpop.f32.mrb[0].mxu0
  %v662 = vadd.f32 0.0, %v661
  %v663 = vpop.f32.mrb[0].mxu0
  %v664 = vpop.f32.mrb[0].mxu0
  %v665 = vadd.f32 0.0, %v664
  %v666 = vpop.f32.mrb[0].mxu0
  %667 = vmatprep.mubr.bf16.mxu0 0
  %668 = vmatmul.mubr.bf16.gmra.mrb[0].mxu0 %v445
  %v669 = vpop.f32.mrb[0].mxu0
  %v670 = vadd.f32 0.0, %v669
  %v671 = vpop.f32.mrb[0].mxu0
  %v672 = vpop.f32.mrb[0].mxu0
  %v673 = vadd.f32 0.0, %v672
  %v674 = vpop.f32.mrb[0].mxu0
  %675 = vmatprep.mubr.bf16.mxu0 0
  %676 = vmatmul.mubr.bf16.gmra.mrb[0].mxu0 %v448
  %v677 = vpop.f32.mrb[0].mxu0
  %v678 = vadd.f32 0.0, %v677
  %v679 = vpop.f32.mrb[0].mxu0
  %v680 = vpop.f32.mrb[0].mxu0
  %v681 = vadd.f32 0.0, %v680
  %v682 = vpop.f32.mrb[0].mxu0
  %683 = vmatprep.mubr.bf16.mxu0 0
  %684 = vmatmul.mubr.bf16.gmra.mrb[0].mxu0 %v451
  %v685 = vpop.f32.mrb[0].mxu0
  %v686 = vadd.f32 0.0, %v685
  %v687 = vpop.f32.mrb[0].mxu0
  %v688 = vpop.f32.mrb[0].mxu0
  %v689 = vadd.f32 0.0, %v688
  %v690 = vpop.f32.mrb[0].mxu0
  %691 = vmatprep.mubr.bf16.mxu0 0
  %692 = vmatmul.mubr.bf16.gmra.mrb[0].mxu0 %v454
  %v693 = vpop.f32.mrb[0].mxu0
  %v694 = vadd.f32 0.0, %v693
  %v695 = vpop.f32.mrb[0].mxu0
  %v696 = vpop.f32.mrb[0].mxu0
  %v697 = vadd.f32 0.0, %v696
  %v698 = vpop.f32.mrb[0].mxu0
  %699 = vmatprep.mubr.bf16.mxu0 0
  %700 = vmatmul.mubr.bf16.gmra.mrb[0].mxu0 %v457
  %v701 = vpop.f32.mrb[0].mxu0
  %v702 = vadd.f32 0.0, %v701
  %v703 = vpop.f32.mrb[0].mxu0
  %v704 = vpop.f32.mrb[0].mxu0
  %v705 = vadd.f32 0.0, %v704
  %v706 = vpop.f32.mrb[0].mxu0
  %707 = vmatprep.mubr.bf16.mxu0 0
  %708 = vmatmul.mubr.bf16.gmra.mrb[0].mxu0 %v460
  %v709 = vpop.f32.mrb[0].mxu0
  %v710 = vadd.f32 0.0, %v709
  %v711 = vpop.f32.mrb[0].mxu0
  %v712 = vpop.f32.mrb[0].mxu0
  %v713 = vadd.f32 0.0, %v712
  %v714 = vpop.f32.mrb[0].mxu0
  %715 = vmatprep.mubr.bf16.mxu0 0
  %716 = vmatmul.mubr.bf16.gmra.mrb[0].mxu0 %v463
  %v717 = vpop.f32.mrb[0].mxu0
  %v718 = vadd.f32 0.0, %v717
  %v719 = vpop.f32.mrb[0].mxu0
  %v720 = vpop.f32.mrb[0].mxu0
  %v721 = vadd.f32 0.0, %v720
  %v722 = vpop.f32.mrb[0].mxu0
  %723 = vmatprep.mubr.bf16.mxu0 0
  %724 = vmatmul.mubr.bf16.gmra.mrb[0].mxu0 %v466
  %v725 = vpop.f32.mrb[0].mxu0
  %v726 = vadd.f32 0.0, %v725
  %v727 = vpop.f32.mrb[0].mxu0
  %v728 = vpop.f32.mrb[0].mxu0
  %v729 = vadd.f32 0.0, %v728
  %v730 = vpop.f32.mrb[0].mxu0
  %731 = vmatprep.mubr.bf16.mxu0 0
  %732 = vmatmul.mubr.bf16.gmra.mrb[0].mxu0 %v469
  %v733 = vpop.f32.mrb[0].mxu0
  %v734 = vadd.f32 0.0, %v733
  %v735 = vpop.f32.mrb[0].mxu0
  %v736 = vpop.f32.mrb[0].mxu0
  %v737 = vadd.f32 0.0, %v736
  %v738 = vpop.f32.mrb[0].mxu0
  %739 = vmatprep.mubr.bf16.mxu0 0
  %740 = vmatmul.mubr.bf16.gmra.mrb[0].mxu0 %v472
  %v741 = vpop.f32.mrb[0].mxu0
  %v742 = vadd.f32 0.0, %v741
  %v743 = vpop.f32.mrb[0].mxu0
  %v744 = vpop.f32.mrb[0].mxu0
  %v745 = vadd.f32 0.0, %v744
  %v746 = vpop.f32.mrb[0].mxu0
  %747 = vmatprep.mubr.bf16.mxu0 0
  %748 = vmatmul.mubr.bf16.gmra.mrb[0].mxu0 %v475
  %v749 = vpop.f32.mrb[0].mxu0
  %v750 = vadd.f32 0.0, %v749
  %v751 = vpop.f32.mrb[0].mxu0
  %v752 = vpop.f32.mrb[0].mxu0
  %v753 = vadd.f32 0.0, %v752
  %v754 = vpop.f32.mrb[0].mxu0
  %755 = vmatprep.mubr.bf16.mxu0 0
  %756 = vmatmul.mubr.bf16.gmra.mrb[0].mxu0 %v478
  %v757 = vpop.f32.mrb[0].mxu0
  %v758 = vadd.f32 0.0, %v757
  %v759 = vpop.f32.mrb[0].mxu0
  %v760 = vpop.f32.mrb[0].mxu0
  %v761 = vadd.f32 0.0, %v760
  %v762 = vpop.f32.mrb[0].mxu0
  %763 = vmatprep.mubr.bf16.mxu0 0
  %764 = vmatmul.mubr.bf16.gmra.mrb[0].mxu0 %v481
  %v765 = vpop.f32.mrb[0].mxu0
  %v766 = vadd.f32 0.0, %v765
  %v767 = vpop.f32.mrb[0].mxu0
  %v768 = vpop.f32.mrb[0].mxu0
  %v769 = vadd.f32 0.0, %v768
  %v770 = vpop.f32.mrb[0].mxu0
  %771 = vdwg.mxu0
  %v780 = vunpack.c.l.b16 %v313
  %v781 = vunpack.c.l.b16 %v314
  %v782 = vunpack.c.l.b16 %v315
  %v783 = vunpack.c.l.b16 %v316
  %v784 = vunpack.c.l.b16 %v317
  %v785 = vunpack.c.l.b16 %v318
  %v786 = vunpack.c.l.b16 %v319
  %v787 = vunpack.c.l.b16 %v320
  %v788 = vpack.c.b16 %v781, %v780
  %v789 = vpack.c.b16 %v783, %v782
  %v790 = vpack.c.b16 %v785, %v784
  %v791 = vpack.c.b16 %v787, %v786
  %v797 = vsel %vm386, %v281, 0
  %v800 = vsel %vm386, %v282, 0
  %v803 = vsel %vm386, %v283, 0
  %v806 = vsel %vm386, %v284, 0
  %v809 = vsel %vm386, %v285, 0
  %v812 = vsel %vm386, %v286, 0
  %v815 = vsel %vm386, %v287, 0
  %v818 = vsel %vm386, %v288, 0
  %v821 = vsel %vm386, %v289, 0
  %v824 = vsel %vm386, %v290, 0
  %v827 = vsel %vm386, %v291, 0
  %v830 = vsel %vm386, %v292, 0
  %v833 = vsel %vm386, %v293, 0
  %v836 = vsel %vm386, %v294, 0
  %v839 = vsel %vm386, %v295, 0
  %v842 = vsel %vm386, %v296, 0
  %v845 = vsel %vm386, %v297, 0
  %v848 = vsel %vm386, %v298, 0
  %v851 = vsel %vm386, %v299, 0
  %v854 = vsel %vm386, %v300, 0
  %v857 = vsel %vm386, %v301, 0
  %v860 = vsel %vm386, %v302, 0
  %v863 = vsel %vm386, %v303, 0
  %v866 = vsel %vm386, %v304, 0
  %v869 = vsel %vm386, %v305, 0
  %v872 = vsel %vm386, %v306, 0
  %v875 = vsel %vm386, %v307, 0
  %v878 = vsel %vm386, %v308, 0
  %v881 = vsel %vm386, %v309, 0
  %v884 = vsel %vm386, %v310, 0
  %v887 = vsel %vm386, %v311, 0
  %v890 = vsel %vm386, %v312, 0
  %892 = vmatprep.subr.bf16.mxu0 0
  %893 = vmatpush1.bf16.msra.mxu0 %v788
  %894 = vmatprep.subr.bf16.mxu0 0
  %895 = vmatpush1.bf16.msra.mxu0 %v789
  %896 = vmatprep.subr.bf16.mxu0 0
  %897 = vmatpush1.bf16.msra.mxu0 %v790
  %898 = vmatprep.subr.bf16.mxu0 0
  %899 = vmatpush1.bf16.msra.mxu0 %v791
  %900 = vmatprep.subr.bf16.mxu0 0
  %901 = vmatpush1.bf16.msra.mxu0 0
  %902 = vmatprep.subr.bf16.mxu0 0
  %903 = vmatpush1.bf16.msra.mxu0 0
  %904 = vmatprep.subr.bf16.mxu0 0
  %905 = vmatpush1.bf16.msra.mxu0 0
  %906 = vmatprep.subr.bf16.mxu0 0
  %907 = vmatpush1.bf16.msra.mxu0 0
  %908 = vmatprep.subr.bf16.mxu0 0
  %909 = vmatpush1.bf16.msra.mxu0 0
  %910 = vmatprep.subr.bf16.mxu0 0
  %911 = vmatpush1.bf16.msra.mxu0 0
  %912 = vmatprep.subr.bf16.mxu0 0
  %913 = vmatpush1.bf16.msra.mxu0 0
  %914 = vmatprep.subr.bf16.mxu0 0
  %915 = vmatpush1.bf16.msra.mxu0 0
  %916 = vmatprep.subr.bf16.mxu0 0
  %917 = vmatpush1.bf16.msra.mxu0 0
  %918 = vmatprep.subr.bf16.mxu0 0
  %919 = vmatpush1.bf16.msra.mxu0 0
  %920 = vmatprep.subr.bf16.mxu0 0
  %921 = vmatpush1.bf16.msra.mxu0 0
  %922 = vmatprep.subr.bf16.mxu0 0
  %923 = vmatpush1.bf16.msra.mxu0 0
  %924 = vmatprep.mubr.bf16.mxu0 0
  %925 = vmatmul.mubr.bf16.gmra.mrb[0].mxu0 %v797
  %v926 = vpop.f32.mrb[0].mxu0
  %v927 = vadd.f32 %v518, %v926
  %v928 = vpop.f32.mrb[0].mxu0
  %v929 = vpop.f32.mrb[0].mxu0
  %v930 = vadd.f32 %v521, %v929
  %v931 = vpop.f32.mrb[0].mxu0
  %932 = vmatprep.mubr.bf16.mxu0 0
  %933 = vmatmul.mubr.bf16.gmra.mrb[0].mxu0 %v800
  %v934 = vpop.f32.mrb[0].mxu0
  %v935 = vadd.f32 %v526, %v934
  %v936 = vpop.f32.mrb[0].mxu0
  %v937 = vpop.f32.mrb[0].mxu0
  %v938 = vadd.f32 %v529, %v937
  %v939 = vpop.f32.mrb[0].mxu0
  %940 = vmatprep.mubr.bf16.mxu0 0
  %941 = vmatmul.mubr.bf16.gmra.mrb[0].mxu0 %v803
  %v942 = vpop.f32.mrb[0].mxu0
  %v943 = vadd.f32 %v534, %v942
  %v944 = vpop.f32.mrb[0].mxu0
  %v945 = vpop.f32.mrb[0].mxu0
  %v946 = vadd.f32 %v537, %v945
  %v947 = vpop.f32.mrb[0].mxu0
  %948 = vmatprep.mubr.bf16.mxu0 0
  %949 = vmatmul.mubr.bf16.gmra.mrb[0].mxu0 %v806
  %v950 = vpop.f32.mrb[0].mxu0
  %v951 = vadd.f32 %v542, %v950
  %v952 = vpop.f32.mrb[0].mxu0
  %v953 = vpop.f32.mrb[0].mxu0
  %v954 = vadd.f32 %v545, %v953
  %v955 = vpop.f32.mrb[0].mxu0
  %956 = vmatprep.mubr.bf16.mxu0 0
  %957 = vmatmul.mubr.bf16.gmra.mrb[0].mxu0 %v809
  %v958 = vpop.f32.mrb[0].mxu0
  %v959 = vadd.f32 %v550, %v958
  %v960 = vpop.f32.mrb[0].mxu0
  %v961 = vpop.f32.mrb[0].mxu0
  %v962 = vadd.f32 %v553, %v961
  %v963 = vpop.f32.mrb[0].mxu0
  %964 = vmatprep.mubr.bf16.mxu0 0
  %965 = vmatmul.mubr.bf16.gmra.mrb[0].mxu0 %v812
  %v966 = vpop.f32.mrb[0].mxu0
  %v967 = vadd.f32 %v558, %v966
  %v968 = vpop.f32.mrb[0].mxu0
  %v969 = vpop.f32.mrb[0].mxu0
  %v970 = vadd.f32 %v561, %v969
  %v971 = vpop.f32.mrb[0].mxu0
  %972 = vmatprep.mubr.bf16.mxu0 0
  %973 = vmatmul.mubr.bf16.gmra.mrb[0].mxu0 %v815
  %v974 = vpop.f32.mrb[0].mxu0
  %v975 = vadd.f32 %v566, %v974
  %v976 = vpop.f32.mrb[0].mxu0
  %v977 = vpop.f32.mrb[0].mxu0
  %v978 = vadd.f32 %v569, %v977
  %v979 = vpop.f32.mrb[0].mxu0
  %980 = vmatprep.mubr.bf16.mxu0 0
  %981 = vmatmul.mubr.bf16.gmra.mrb[0].mxu0 %v818
  %v982 = vpop.f32.mrb[0].mxu0
  %v983 = vadd.f32 %v574, %v982
  %v984 = vpop.f32.mrb[0].mxu0
  %v985 = vpop.f32.mrb[0].mxu0
  %v986 = vadd.f32 %v577, %v985
  %v987 = vpop.f32.mrb[0].mxu0
  %988 = vmatprep.mubr.bf16.mxu0 0
  %989 = vmatmul.mubr.bf16.gmra.mrb[0].mxu0 %v821
  %v990 = vpop.f32.mrb[0].mxu0
  %v991 = vadd.f32 %v582, %v990
  %v992 = vpop.f32.mrb[0].mxu0
  %v993 = vpop.f32.mrb[0].mxu0
  %v994 = vadd.f32 %v585, %v993
  %v995 = vpop.f32.mrb[0].mxu0
  %996 = vmatprep.mubr.bf16.mxu0 0
  %997 = vmatmul.mubr.bf16.gmra.mrb[0].mxu0 %v824
  %v998 = vpop.f32.mrb[0].mxu0
  %v999 = vadd.f32 %v590, %v998
  %v1000 = vpop.f32.mrb[0].mxu0
  %v1001 = vpop.f32.mrb[0].mxu0
  %v1002 = vadd.f32 %v593, %v1001
  %v1003 = vpop.f32.mrb[0].mxu0
  %1004 = vmatprep.mubr.bf16.mxu0 0
  %1005 = vmatmul.mubr.bf16.gmra.mrb[0].mxu0 %v827
  %v1006 = vpop.f32.mrb[0].mxu0
  %v1007 = vadd.f32 %v598, %v1006
  %v1008 = vpop.f32.mrb[0].mxu0
  %v1009 = vpop.f32.mrb[0].mxu0
  %v1010 = vadd.f32 %v601, %v1009
  %v1011 = vpop.f32.mrb[0].mxu0
  %1012 = vmatprep.mubr.bf16.mxu0 0
  %1013 = vmatmul.mubr.bf16.gmra.mrb[0].mxu0 %v830
  %v1014 = vpop.f32.mrb[0].mxu0
  %v1015 = vadd.f32 %v606, %v1014
  %v1016 = vpop.f32.mrb[0].mxu0
  %v1017 = vpop.f32.mrb[0].mxu0
  %v1018 = vadd.f32 %v609, %v1017
  %v1019 = vpop.f32.mrb[0].mxu0
  %1020 = vmatprep.mubr.bf16.mxu0 0
  %1021 = vmatmul.mubr.bf16.gmra.mrb[0].mxu0 %v833
  %v1022 = vpop.f32.mrb[0].mxu0
  %v1023 = vadd.f32 %v614, %v1022
  %v1024 = vpop.f32.mrb[0].mxu0
  %v1025 = vpop.f32.mrb[0].mxu0
  %v1026 = vadd.f32 %v617, %v1025
  %v1027 = vpop.f32.mrb[0].mxu0
  %1028 = vmatprep.mubr.bf16.mxu0 0
  %1029 = vmatmul.mubr.bf16.gmra.mrb[0].mxu0 %v836
  %v1030 = vpop.f32.mrb[0].mxu0
  %v1031 = vadd.f32 %v622, %v1030
  %v1032 = vpop.f32.mrb[0].mxu0
  %v1033 = vpop.f32.mrb[0].mxu0
  %v1034 = vadd.f32 %v625, %v1033
  %v1035 = vpop.f32.mrb[0].mxu0
  %1036 = vmatprep.mubr.bf16.mxu0 0
  %1037 = vmatmul.mubr.bf16.gmra.mrb[0].mxu0 %v839
  %v1038 = vpop.f32.mrb[0].mxu0
  %v1039 = vadd.f32 %v630, %v1038
  %v1040 = vpop.f32.mrb[0].mxu0
  %v1041 = vpop.f32.mrb[0].mxu0
  %v1042 = vadd.f32 %v633, %v1041
  %v1043 = vpop.f32.mrb[0].mxu0
  %1044 = vmatprep.mubr.bf16.mxu0 0
  %1045 = vmatmul.mubr.bf16.gmra.mrb[0].mxu0 %v842
  %v1046 = vpop.f32.mrb[0].mxu0
  %v1047 = vadd.f32 %v638, %v1046
  %v1048 = vpop.f32.mrb[0].mxu0
  %v1049 = vpop.f32.mrb[0].mxu0
  %v1050 = vadd.f32 %v641, %v1049
  %v1051 = vpop.f32.mrb[0].mxu0
  %1052 = vmatprep.mubr.bf16.mxu0 0
  %1053 = vmatmul.mubr.bf16.gmra.mrb[0].mxu0 %v845
  %v1054 = vpop.f32.mrb[0].mxu0
  %v1055 = vadd.f32 %v646, %v1054
  %v1056 = vpop.f32.mrb[0].mxu0
  %v1057 = vpop.f32.mrb[0].mxu0
  %v1058 = vadd.f32 %v649, %v1057
  %v1059 = vpop.f32.mrb[0].mxu0
  %1060 = vmatprep.mubr.bf16.mxu0 0
  %1061 = vmatmul.mubr.bf16.gmra.mrb[0].mxu0 %v848
  %v1062 = vpop.f32.mrb[0].mxu0
  %v1063 = vadd.f32 %v654, %v1062
  %v1064 = vpop.f32.mrb[0].mxu0
  %v1065 = vpop.f32.mrb[0].mxu0
  %v1066 = vadd.f32 %v657, %v1065
  %v1067 = vpop.f32.mrb[0].mxu0
  %1068 = vmatprep.mubr.bf16.mxu0 0
  %1069 = vmatmul.mubr.bf16.gmra.mrb[0].mxu0 %v851
  %v1070 = vpop.f32.mrb[0].mxu0
  %v1071 = vadd.f32 %v662, %v1070
  %v1072 = vpop.f32.mrb[0].mxu0
  %v1073 = vpop.f32.mrb[0].mxu0
  %v1074 = vadd.f32 %v665, %v1073
  %v1075 = vpop.f32.mrb[0].mxu0
  %1076 = vmatprep.mubr.bf16.mxu0 0
  %1077 = vmatmul.mubr.bf16.gmra.mrb[0].mxu0 %v854
  %v1078 = vpop.f32.mrb[0].mxu0
  %v1079 = vadd.f32 %v670, %v1078
  %v1080 = vpop.f32.mrb[0].mxu0
  %v1081 = vpop.f32.mrb[0].mxu0
  %v1082 = vadd.f32 %v673, %v1081
  %v1083 = vpop.f32.mrb[0].mxu0
  %1084 = vmatprep.mubr.bf16.mxu0 0
  %1085 = vmatmul.mubr.bf16.gmra.mrb[0].mxu0 %v857
  %v1086 = vpop.f32.mrb[0].mxu0
  %v1087 = vadd.f32 %v678, %v1086
  %v1088 = vpop.f32.mrb[0].mxu0
  %v1089 = vpop.f32.mrb[0].mxu0
  %v1090 = vadd.f32 %v681, %v1089
  %v1091 = vpop.f32.mrb[0].mxu0
  %1092 = vmatprep.mubr.bf16.mxu0 0
  %1093 = vmatmul.mubr.bf16.gmra.mrb[0].mxu0 %v860
  %v1094 = vpop.f32.mrb[0].mxu0
  %v1095 = vadd.f32 %v686, %v1094
  %v1096 = vpop.f32.mrb[0].mxu0
  %v1097 = vpop.f32.mrb[0].mxu0
  %v1098 = vadd.f32 %v689, %v1097
  %v1099 = vpop.f32.mrb[0].mxu0
  %1100 = vmatprep.mubr.bf16.mxu0 0
  %1101 = vmatmul.mubr.bf16.gmra.mrb[0].mxu0 %v863
  %v1102 = vpop.f32.mrb[0].mxu0
  %v1103 = vadd.f32 %v694, %v1102
  %v1104 = vpop.f32.mrb[0].mxu0
  %v1105 = vpop.f32.mrb[0].mxu0
  %v1106 = vadd.f32 %v697, %v1105
  %v1107 = vpop.f32.mrb[0].mxu0
  %1108 = vmatprep.mubr.bf16.mxu0 0
  %1109 = vmatmul.mubr.bf16.gmra.mrb[0].mxu0 %v866
  %v1110 = vpop.f32.mrb[0].mxu0
  %v1111 = vadd.f32 %v702, %v1110
  %v1112 = vpop.f32.mrb[0].mxu0
  %v1113 = vpop.f32.mrb[0].mxu0
  %v1114 = vadd.f32 %v705, %v1113
  %v1115 = vpop.f32.mrb[0].mxu0
  %1116 = vmatprep.mubr.bf16.mxu0 0
  %1117 = vmatmul.mubr.bf16.gmra.mrb[0].mxu0 %v869
  %v1118 = vpop.f32.mrb[0].mxu0
  %v1119 = vadd.f32 %v710, %v1118
  %v1120 = vpop.f32.mrb[0].mxu0
  %v1121 = vpop.f32.mrb[0].mxu0
  %v1122 = vadd.f32 %v713, %v1121
  %v1123 = vpop.f32.mrb[0].mxu0
  %1124 = vmatprep.mubr.bf16.mxu0 0
  %1125 = vmatmul.mubr.bf16.gmra.mrb[0].mxu0 %v872
  %v1126 = vpop.f32.mrb[0].mxu0
  %v1127 = vadd.f32 %v718, %v1126
  %v1128 = vpop.f32.mrb[0].mxu0
  %v1129 = vpop.f32.mrb[0].mxu0
  %v1130 = vadd.f32 %v721, %v1129
  %v1131 = vpop.f32.mrb[0].mxu0
  %1132 = vmatprep.mubr.bf16.mxu0 0
  %1133 = vmatmul.mubr.bf16.gmra.mrb[0].mxu0 %v875
  %v1134 = vpop.f32.mrb[0].mxu0
  %v1135 = vadd.f32 %v726, %v1134
  %v1136 = vpop.f32.mrb[0].mxu0
  %v1137 = vpop.f32.mrb[0].mxu0
  %v1138 = vadd.f32 %v729, %v1137
  %v1139 = vpop.f32.mrb[0].mxu0
  %1140 = vmatprep.mubr.bf16.mxu0 0
  %1141 = vmatmul.mubr.bf16.gmra.mrb[0].mxu0 %v878
  %v1142 = vpop.f32.mrb[0].mxu0
  %v1143 = vadd.f32 %v734, %v1142
  %v1144 = vpop.f32.mrb[0].mxu0
  %v1145 = vpop.f32.mrb[0].mxu0
  %v1146 = vadd.f32 %v737, %v1145
  %v1147 = vpop.f32.mrb[0].mxu0
  %1148 = vmatprep.mubr.bf16.mxu0 0
  %1149 = vmatmul.mubr.bf16.gmra.mrb[0].mxu0 %v881
  %v1150 = vpop.f32.mrb[0].mxu0
  %v1151 = vadd.f32 %v742, %v1150
  %v1152 = vpop.f32.mrb[0].mxu0
  %v1153 = vpop.f32.mrb[0].mxu0
  %v1154 = vadd.f32 %v745, %v1153
  %v1155 = vpop.f32.mrb[0].mxu0
  %1156 = vmatprep.mubr.bf16.mxu0 0
  %1157 = vmatmul.mubr.bf16.gmra.mrb[0].mxu0 %v884
  %v1158 = vpop.f32.mrb[0].mxu0
  %v1159 = vadd.f32 %v750, %v1158
  %v1160 = vpop.f32.mrb[0].mxu0
  %v1161 = vpop.f32.mrb[0].mxu0
  %v1162 = vadd.f32 %v753, %v1161
  %v1163 = vpop.f32.mrb[0].mxu0
  %1164 = vmatprep.mubr.bf16.mxu0 0
  %1165 = vmatmul.mubr.bf16.gmra.mrb[0].mxu0 %v887
  %v1166 = vpop.f32.mrb[0].mxu0
  %v1167 = vadd.f32 %v758, %v1166
  %v1168 = vpop.f32.mrb[0].mxu0
  %v1169 = vpop.f32.mrb[0].mxu0
  %v1170 = vadd.f32 %v761, %v1169
  %v1171 = vpop.f32.mrb[0].mxu0
  %1172 = vmatprep.mubr.bf16.mxu0 0
  %1173 = vmatmul.mubr.bf16.gmra.mrb[0].mxu0 %v890
  %v1174 = vpop.f32.mrb[0].mxu0
  %v1175 = vadd.f32 %v766, %v1174
  %v1176 = vpop.f32.mrb[0].mxu0
  %v1177 = vpop.f32.mrb[0].mxu0
  %v1178 = vadd.f32 %v769, %v1177
  %v1179 = vpop.f32.mrb[0].mxu0
  %1180 = vdwg.mxu0
  %v1181 = vpack.c.bf16 %v259, %v256
  %v1182 = vpack.c.bf16 %v265, %v262
  %v1183 = vpack.c.bf16 %v271, %v268
  %v1184 = vpack.c.bf16 %v277, %v274
  %s1185 = scalar_lea.vmem %s1, 64
  %v1186 = vld [vmem:[%s1185] sm:$0xf]
  %v1187 = vld [vmem:[%s1185 + $0x4] sm:$0xf]
  %v1188 = vld [vmem:[%s1185 + $0x8] sm:$0xf]
  %v1189 = vld [vmem:[%s1185 + $0xc] sm:$0xf]
  %v1190 = vld [vmem:[%s1185 + $0x10] sm:$0xf]
  %v1191 = vld [vmem:[%s1185 + $0x14] sm:$0xf]
  %v1192 = vld [vmem:[%s1185 + $0x18] sm:$0xf]
  %v1193 = vld [vmem:[%s1185 + $0x1c] sm:$0xf]
  %v1202 = vunpack.c.l.b16 %v1186
  %v1203 = vunpack.c.l.b16 %v1187
  %v1204 = vunpack.c.l.b16 %v1188
  %v1205 = vunpack.c.l.b16 %v1189
  %v1206 = vunpack.c.l.b16 %v1190
  %v1207 = vunpack.c.l.b16 %v1191
  %v1208 = vunpack.c.l.b16 %v1192
  %v1209 = vunpack.c.l.b16 %v1193
  %v1210 = vpack.c.b16 %v1203, %v1202
  %v1211 = vpack.c.b16 %v1205, %v1204
  %v1212 = vpack.c.b16 %v1207, %v1206
  %v1213 = vpack.c.b16 %v1209, %v1208
  %v1219 = vsel %vm386, %v1181, 0
  %v1222 = vsel %vm386, %v1182, 0
  %v1225 = vsel %vm386, %v1183, 0
  %v1228 = vsel %vm386, %v1184, 0
  %1230 = vmatprep.subr.bf16.mxu0 0
  %1231 = vmatpush1.bf16.msra.mxu0 %v1210
  %1232 = vmatprep.subr.bf16.mxu0 0
  %1233 = vmatpush1.bf16.msra.mxu0 %v1211
  %1234 = vmatprep.subr.bf16.mxu0 0
  %1235 = vmatpush1.bf16.msra.mxu0 %v1212
  %1236 = vmatprep.subr.bf16.mxu0 0
  %1237 = vmatpush1.bf16.msra.mxu0 %v1213
  %1238 = vmatprep.subr.bf16.mxu0 0
  %1239 = vmatpush1.bf16.msra.mxu0 0
  %1240 = vmatprep.subr.bf16.mxu0 0
  %1241 = vmatpush1.bf16.msra.mxu0 0
  %1242 = vmatprep.subr.bf16.mxu0 0
  %1243 = vmatpush1.bf16.msra.mxu0 0
  %1244 = vmatprep.subr.bf16.mxu0 0
  %1245 = vmatpush1.bf16.msra.mxu0 0
  %1246 = vmatprep.subr.bf16.mxu0 0
  %1247 = vmatpush1.bf16.msra.mxu0 0
  %1248 = vmatprep.subr.bf16.mxu0 0
  %1249 = vmatpush1.bf16.msra.mxu0 0
  %1250 = vmatprep.subr.bf16.mxu0 0
  %1251 = vmatpush1.bf16.msra.mxu0 0
  %1252 = vmatprep.subr.bf16.mxu0 0
  %1253 = vmatpush1.bf16.msra.mxu0 0
  %1254 = vmatprep.subr.bf16.mxu0 0
  %1255 = vmatpush1.bf16.msra.mxu0 0
  %1256 = vmatprep.subr.bf16.mxu0 0
  %1257 = vmatpush1.bf16.msra.mxu0 0
  %1258 = vmatprep.subr.bf16.mxu0 0
  %1259 = vmatpush1.bf16.msra.mxu0 0
  %1260 = vmatprep.subr.bf16.mxu0 0
  %1261 = vmatpush1.bf16.msra.mxu0 0
  %1262 = vmatprep.mubr.bf16.mxu0 0
  %1263 = vmatmul.mubr.bf16.gmra.mrb[0].mxu0 %v809
  %v1264 = vpop.f32.mrb[0].mxu0
  %v1265 = vadd.f32 0.0, %v1264
  %v1266 = vpop.f32.mrb[0].mxu0
  %v1267 = vpop.f32.mrb[0].mxu0
  %v1268 = vadd.f32 0.0, %v1267
  %v1269 = vpop.f32.mrb[0].mxu0
  %1270 = vmatprep.mubr.bf16.mxu0 0
  %1271 = vmatmul.mubr.bf16.gmra.mrb[0].mxu0 %v812
  %v1272 = vpop.f32.mrb[0].mxu0
  %v1273 = vadd.f32 0.0, %v1272
  %v1274 = vpop.f32.mrb[0].mxu0
  %v1275 = vpop.f32.mrb[0].mxu0
  %v1276 = vadd.f32 0.0, %v1275
  %v1277 = vpop.f32.mrb[0].mxu0
  %1278 = vmatprep.mubr.bf16.mxu0 0
  %1279 = vmatmul.mubr.bf16.gmra.mrb[0].mxu0 %v815
  %v1280 = vpop.f32.mrb[0].mxu0
  %v1281 = vadd.f32 0.0, %v1280
  %v1282 = vpop.f32.mrb[0].mxu0
  %v1283 = vpop.f32.mrb[0].mxu0
  %v1284 = vadd.f32 0.0, %v1283
  %v1285 = vpop.f32.mrb[0].mxu0
  %1286 = vmatprep.mubr.bf16.mxu0 0
  %1287 = vmatmul.mubr.bf16.gmra.mrb[0].mxu0 %v818
  %v1288 = vpop.f32.mrb[0].mxu0
  %v1289 = vadd.f32 0.0, %v1288
  %v1290 = vpop.f32.mrb[0].mxu0
  %v1291 = vpop.f32.mrb[0].mxu0
  %v1292 = vadd.f32 0.0, %v1291
  %v1293 = vpop.f32.mrb[0].mxu0
  %1294 = vmatprep.mubr.bf16.mxu0 0
  %1295 = vmatmul.mubr.bf16.gmra.mrb[0].mxu0 %v821
  %v1296 = vpop.f32.mrb[0].mxu0
  %v1297 = vadd.f32 0.0, %v1296
  %v1298 = vpop.f32.mrb[0].mxu0
  %v1299 = vpop.f32.mrb[0].mxu0
  %v1300 = vadd.f32 0.0, %v1299
  %v1301 = vpop.f32.mrb[0].mxu0
  %1302 = vmatprep.mubr.bf16.mxu0 0
  %1303 = vmatmul.mubr.bf16.gmra.mrb[0].mxu0 %v824
  %v1304 = vpop.f32.mrb[0].mxu0
  %v1305 = vadd.f32 0.0, %v1304
  %v1306 = vpop.f32.mrb[0].mxu0
  %v1307 = vpop.f32.mrb[0].mxu0
  %v1308 = vadd.f32 0.0, %v1307
  %v1309 = vpop.f32.mrb[0].mxu0
  %1310 = vmatprep.mubr.bf16.mxu0 0
  %1311 = vmatmul.mubr.bf16.gmra.mrb[0].mxu0 %v827
  %v1312 = vpop.f32.mrb[0].mxu0
  %v1313 = vadd.f32 0.0, %v1312
  %v1314 = vpop.f32.mrb[0].mxu0
  %v1315 = vpop.f32.mrb[0].mxu0
  %v1316 = vadd.f32 0.0, %v1315
  %v1317 = vpop.f32.mrb[0].mxu0
  %1318 = vmatprep.mubr.bf16.mxu0 0
  %1319 = vmatmul.mubr.bf16.gmra.mrb[0].mxu0 %v830
  %v1320 = vpop.f32.mrb[0].mxu0
  %v1321 = vadd.f32 0.0, %v1320
  %v1322 = vpop.f32.mrb[0].mxu0
  %v1323 = vpop.f32.mrb[0].mxu0
  %v1324 = vadd.f32 0.0, %v1323
  %v1325 = vpop.f32.mrb[0].mxu0
  %1326 = vmatprep.mubr.bf16.mxu0 0
  %1327 = vmatmul.mubr.bf16.gmra.mrb[0].mxu0 %v833
  %v1328 = vpop.f32.mrb[0].mxu0
  %v1329 = vadd.f32 0.0, %v1328
  %v1330 = vpop.f32.mrb[0].mxu0
  %v1331 = vpop.f32.mrb[0].mxu0
  %v1332 = vadd.f32 0.0, %v1331
  %v1333 = vpop.f32.mrb[0].mxu0
  %1334 = vmatprep.mubr.bf16.mxu0 0
  %1335 = vmatmul.mubr.bf16.gmra.mrb[0].mxu0 %v836
  %v1336 = vpop.f32.mrb[0].mxu0
  %v1337 = vadd.f32 0.0, %v1336
  %v1338 = vpop.f32.mrb[0].mxu0
  %v1339 = vpop.f32.mrb[0].mxu0
  %v1340 = vadd.f32 0.0, %v1339
  %v1341 = vpop.f32.mrb[0].mxu0
  %1342 = vmatprep.mubr.bf16.mxu0 0
  %1343 = vmatmul.mubr.bf16.gmra.mrb[0].mxu0 %v839
  %v1344 = vpop.f32.mrb[0].mxu0
  %v1345 = vadd.f32 0.0, %v1344
  %v1346 = vpop.f32.mrb[0].mxu0
  %v1347 = vpop.f32.mrb[0].mxu0
  %v1348 = vadd.f32 0.0, %v1347
  %v1349 = vpop.f32.mrb[0].mxu0
  %1350 = vmatprep.mubr.bf16.mxu0 0
  %1351 = vmatmul.mubr.bf16.gmra.mrb[0].mxu0 %v842
  %v1352 = vpop.f32.mrb[0].mxu0
  %v1353 = vadd.f32 0.0, %v1352
  %v1354 = vpop.f32.mrb[0].mxu0
  %v1355 = vpop.f32.mrb[0].mxu0
  %v1356 = vadd.f32 0.0, %v1355
  %v1357 = vpop.f32.mrb[0].mxu0
  %1358 = vmatprep.mubr.bf16.mxu0 0
  %1359 = vmatmul.mubr.bf16.gmra.mrb[0].mxu0 %v845
  %v1360 = vpop.f32.mrb[0].mxu0
  %v1361 = vadd.f32 0.0, %v1360
  %v1362 = vpop.f32.mrb[0].mxu0
  %v1363 = vpop.f32.mrb[0].mxu0
  %v1364 = vadd.f32 0.0, %v1363
  %v1365 = vpop.f32.mrb[0].mxu0
  %1366 = vmatprep.mubr.bf16.mxu0 0
  %1367 = vmatmul.mubr.bf16.gmra.mrb[0].mxu0 %v848
  %v1368 = vpop.f32.mrb[0].mxu0
  %v1369 = vadd.f32 0.0, %v1368
  %v1370 = vpop.f32.mrb[0].mxu0
  %v1371 = vpop.f32.mrb[0].mxu0
  %v1372 = vadd.f32 0.0, %v1371
  %v1373 = vpop.f32.mrb[0].mxu0
  %1374 = vmatprep.mubr.bf16.mxu0 0
  %1375 = vmatmul.mubr.bf16.gmra.mrb[0].mxu0 %v851
  %v1376 = vpop.f32.mrb[0].mxu0
  %v1377 = vadd.f32 0.0, %v1376
  %v1378 = vpop.f32.mrb[0].mxu0
  %v1379 = vpop.f32.mrb[0].mxu0
  %v1380 = vadd.f32 0.0, %v1379
  %v1381 = vpop.f32.mrb[0].mxu0
  %1382 = vmatprep.mubr.bf16.mxu0 0
  %1383 = vmatmul.mubr.bf16.gmra.mrb[0].mxu0 %v854
  %v1384 = vpop.f32.mrb[0].mxu0
  %v1385 = vadd.f32 0.0, %v1384
  %v1386 = vpop.f32.mrb[0].mxu0
  %v1387 = vpop.f32.mrb[0].mxu0
  %v1388 = vadd.f32 0.0, %v1387
  %v1389 = vpop.f32.mrb[0].mxu0
  %1390 = vmatprep.mubr.bf16.mxu0 0
  %1391 = vmatmul.mubr.bf16.gmra.mrb[0].mxu0 %v857
  %v1392 = vpop.f32.mrb[0].mxu0
  %v1393 = vadd.f32 0.0, %v1392
  %v1394 = vpop.f32.mrb[0].mxu0
  %v1395 = vpop.f32.mrb[0].mxu0
  %v1396 = vadd.f32 0.0, %v1395
  %v1397 = vpop.f32.mrb[0].mxu0
  %1398 = vmatprep.mubr.bf16.mxu0 0
  %1399 = vmatmul.mubr.bf16.gmra.mrb[0].mxu0 %v860
  %v1400 = vpop.f32.mrb[0].mxu0
  %v1401 = vadd.f32 0.0, %v1400
  %v1402 = vpop.f32.mrb[0].mxu0
  %v1403 = vpop.f32.mrb[0].mxu0
  %v1404 = vadd.f32 0.0, %v1403
  %v1405 = vpop.f32.mrb[0].mxu0
  %1406 = vmatprep.mubr.bf16.mxu0 0
  %1407 = vmatmul.mubr.bf16.gmra.mrb[0].mxu0 %v863
  %v1408 = vpop.f32.mrb[0].mxu0
  %v1409 = vadd.f32 0.0, %v1408
  %v1410 = vpop.f32.mrb[0].mxu0
  %v1411 = vpop.f32.mrb[0].mxu0
  %v1412 = vadd.f32 0.0, %v1411
  %v1413 = vpop.f32.mrb[0].mxu0
  %1414 = vmatprep.mubr.bf16.mxu0 0
  %1415 = vmatmul.mubr.bf16.gmra.mrb[0].mxu0 %v866
  %v1416 = vpop.f32.mrb[0].mxu0
  %v1417 = vadd.f32 0.0, %v1416
  %v1418 = vpop.f32.mrb[0].mxu0
  %v1419 = vpop.f32.mrb[0].mxu0
  %v1420 = vadd.f32 0.0, %v1419
  %v1421 = vpop.f32.mrb[0].mxu0
  %1422 = vmatprep.mubr.bf16.mxu0 0
  %1423 = vmatmul.mubr.bf16.gmra.mrb[0].mxu0 %v869
  %v1424 = vpop.f32.mrb[0].mxu0
  %v1425 = vadd.f32 0.0, %v1424
  %v1426 = vpop.f32.mrb[0].mxu0
  %v1427 = vpop.f32.mrb[0].mxu0
  %v1428 = vadd.f32 0.0, %v1427
  %v1429 = vpop.f32.mrb[0].mxu0
  %1430 = vmatprep.mubr.bf16.mxu0 0
  %1431 = vmatmul.mubr.bf16.gmra.mrb[0].mxu0 %v872
  %v1432 = vpop.f32.mrb[0].mxu0
  %v1433 = vadd.f32 0.0, %v1432
  %v1434 = vpop.f32.mrb[0].mxu0
  %v1435 = vpop.f32.mrb[0].mxu0
  %v1436 = vadd.f32 0.0, %v1435
  %v1437 = vpop.f32.mrb[0].mxu0
  %1438 = vmatprep.mubr.bf16.mxu0 0
  %1439 = vmatmul.mubr.bf16.gmra.mrb[0].mxu0 %v875
  %v1440 = vpop.f32.mrb[0].mxu0
  %v1441 = vadd.f32 0.0, %v1440
  %v1442 = vpop.f32.mrb[0].mxu0
  %v1443 = vpop.f32.mrb[0].mxu0
  %v1444 = vadd.f32 0.0, %v1443
  %v1445 = vpop.f32.mrb[0].mxu0
  %1446 = vmatprep.mubr.bf16.mxu0 0
  %1447 = vmatmul.mubr.bf16.gmra.mrb[0].mxu0 %v878
  %v1448 = vpop.f32.mrb[0].mxu0
  %v1449 = vadd.f32 0.0, %v1448
  %v1450 = vpop.f32.mrb[0].mxu0
  %v1451 = vpop.f32.mrb[0].mxu0
  %v1452 = vadd.f32 0.0, %v1451
  %v1453 = vpop.f32.mrb[0].mxu0
  %1454 = vmatprep.mubr.bf16.mxu0 0
  %1455 = vmatmul.mubr.bf16.gmra.mrb[0].mxu0 %v881
  %v1456 = vpop.f32.mrb[0].mxu0
  %v1457 = vadd.f32 0.0, %v1456
  %v1458 = vpop.f32.mrb[0].mxu0
  %v1459 = vpop.f32.mrb[0].mxu0
  %v1460 = vadd.f32 0.0, %v1459
  %v1461 = vpop.f32.mrb[0].mxu0
  %1462 = vmatprep.mubr.bf16.mxu0 0
  %1463 = vmatmul.mubr.bf16.gmra.mrb[0].mxu0 %v884
  %v1464 = vpop.f32.mrb[0].mxu0
  %v1465 = vadd.f32 0.0, %v1464
  %v1466 = vpop.f32.mrb[0].mxu0
  %v1467 = vpop.f32.mrb[0].mxu0
  %v1468 = vadd.f32 0.0, %v1467
  %v1469 = vpop.f32.mrb[0].mxu0
  %1470 = vmatprep.mubr.bf16.mxu0 0
  %1471 = vmatmul.mubr.bf16.gmra.mrb[0].mxu0 %v887
  %v1472 = vpop.f32.mrb[0].mxu0
  %v1473 = vadd.f32 0.0, %v1472
  %v1474 = vpop.f32.mrb[0].mxu0
  %v1475 = vpop.f32.mrb[0].mxu0
  %v1476 = vadd.f32 0.0, %v1475
  %v1477 = vpop.f32.mrb[0].mxu0
  %1478 = vmatprep.mubr.bf16.mxu0 0
  %1479 = vmatmul.mubr.bf16.gmra.mrb[0].mxu0 %v890
  %v1480 = vpop.f32.mrb[0].mxu0
  %v1481 = vadd.f32 0.0, %v1480
  %v1482 = vpop.f32.mrb[0].mxu0
  %v1483 = vpop.f32.mrb[0].mxu0
  %v1484 = vadd.f32 0.0, %v1483
  %v1485 = vpop.f32.mrb[0].mxu0
  %1486 = vmatprep.mubr.bf16.mxu0 0
  %1487 = vmatmul.mubr.bf16.gmra.mrb[0].mxu0 %v1219
  %v1488 = vpop.f32.mrb[0].mxu0
  %v1489 = vadd.f32 0.0, %v1488
  %v1490 = vpop.f32.mrb[0].mxu0
  %v1491 = vpop.f32.mrb[0].mxu0
  %v1492 = vadd.f32 0.0, %v1491
  %v1493 = vpop.f32.mrb[0].mxu0
  %1494 = vmatprep.mubr.bf16.mxu0 0
  %1495 = vmatmul.mubr.bf16.gmra.mrb[0].mxu0 %v1222
  %v1496 = vpop.f32.mrb[0].mxu0
  %v1497 = vadd.f32 0.0, %v1496
  %v1498 = vpop.f32.mrb[0].mxu0
  %v1499 = vpop.f32.mrb[0].mxu0
  %v1500 = vadd.f32 0.0, %v1499
  %v1501 = vpop.f32.mrb[0].mxu0
  %1502 = vmatprep.mubr.bf16.mxu0 0
  %1503 = vmatmul.mubr.bf16.gmra.mrb[0].mxu0 %v1225
  %v1504 = vpop.f32.mrb[0].mxu0
  %v1505 = vadd.f32 0.0, %v1504
  %v1506 = vpop.f32.mrb[0].mxu0
  %v1507 = vpop.f32.mrb[0].mxu0
  %v1508 = vadd.f32 0.0, %v1507
  %v1509 = vpop.f32.mrb[0].mxu0
  %1510 = vmatprep.mubr.bf16.mxu0 0
  %1511 = vmatmul.mubr.bf16.gmra.mrb[0].mxu0 %v1228
  %v1512 = vpop.f32.mrb[0].mxu0
  %v1513 = vadd.f32 0.0, %v1512
  %v1514 = vpop.f32.mrb[0].mxu0
  %v1515 = vpop.f32.mrb[0].mxu0
  %v1516 = vadd.f32 0.0, %v1515
  %v1517 = vpop.f32.mrb[0].mxu0
  %1518 = vdwg.mxu0
  %v1519 = vadd.f32 %v927, %v1265
  %v1520 = vadd.f32 %v930, %v1268
  %v1521 = vadd.f32 %v935, %v1273
  %v1522 = vadd.f32 %v938, %v1276
  %v1523 = vadd.f32 %v943, %v1281
  %v1524 = vadd.f32 %v946, %v1284
  %v1525 = vadd.f32 %v951, %v1289
  %v1526 = vadd.f32 %v954, %v1292
  %v1527 = vadd.f32 %v959, %v1297
  %v1528 = vadd.f32 %v962, %v1300
  %v1529 = vadd.f32 %v967, %v1305
  %v1530 = vadd.f32 %v970, %v1308
  %v1531 = vadd.f32 %v975, %v1313
  %v1532 = vadd.f32 %v978, %v1316
  %v1533 = vadd.f32 %v983, %v1321
  %v1534 = vadd.f32 %v986, %v1324
  %v1535 = vadd.f32 %v991, %v1329
  %v1536 = vadd.f32 %v994, %v1332
  %v1537 = vadd.f32 %v999, %v1337
  %v1538 = vadd.f32 %v1002, %v1340
  %v1539 = vadd.f32 %v1007, %v1345
  %v1540 = vadd.f32 %v1010, %v1348
  %v1541 = vadd.f32 %v1015, %v1353
  %v1542 = vadd.f32 %v1018, %v1356
  %v1543 = vadd.f32 %v1023, %v1361
  %v1544 = vadd.f32 %v1026, %v1364
  %v1545 = vadd.f32 %v1031, %v1369
  %v1546 = vadd.f32 %v1034, %v1372
  %v1547 = vadd.f32 %v1039, %v1377
  %v1548 = vadd.f32 %v1042, %v1380
  %v1549 = vadd.f32 %v1047, %v1385
  %v1550 = vadd.f32 %v1050, %v1388
  %v1551 = vadd.f32 %v1055, %v1393
  %v1552 = vadd.f32 %v1058, %v1396
  %v1553 = vadd.f32 %v1063, %v1401
  %v1554 = vadd.f32 %v1066, %v1404
  %v1555 = vadd.f32 %v1071, %v1409
  %v1556 = vadd.f32 %v1074, %v1412
  %v1557 = vadd.f32 %v1079, %v1417
  %v1558 = vadd.f32 %v1082, %v1420
  %v1559 = vadd.f32 %v1087, %v1425
  %v1560 = vadd.f32 %v1090, %v1428
  %v1561 = vadd.f32 %v1095, %v1433
  %v1562 = vadd.f32 %v1098, %v1436
  %v1563 = vadd.f32 %v1103, %v1441
  %v1564 = vadd.f32 %v1106, %v1444
  %v1565 = vadd.f32 %v1111, %v1449
  %v1566 = vadd.f32 %v1114, %v1452
  %v1567 = vadd.f32 %v1119, %v1457
  %v1568 = vadd.f32 %v1122, %v1460
  %v1569 = vadd.f32 %v1127, %v1465
  %v1570 = vadd.f32 %v1130, %v1468
  %v1571 = vadd.f32 %v1135, %v1473
  %v1572 = vadd.f32 %v1138, %v1476
  %v1573 = vadd.f32 %v1143, %v1481
  %v1574 = vadd.f32 %v1146, %v1484
  %v1575 = vadd.f32 %v1151, %v1489
  %v1576 = vadd.f32 %v1154, %v1492
  %v1577 = vadd.f32 %v1159, %v1497
  %v1578 = vadd.f32 %v1162, %v1500
  %v1579 = vadd.f32 %v1167, %v1505
  %v1580 = vadd.f32 %v1170, %v1508
  %v1581 = vadd.f32 %v1175, %v1513
  %v1582 = vadd.f32 %v1178, %v1516
  %v1583 = vpack.c.bf16 %v262, %v259
  %v1584 = vpack.c.bf16 %v268, %v265
  %v1585 = vpack.c.bf16 %v274, %v271
  %v1586 = vpack.c.bf16 %v280, %v277
  %s1587 = scalar_lea.vmem %s1, 96
  %v1588 = vld [vmem:[%s1587] sm:$0xf]
  %v1589 = vld [vmem:[%s1587 + $0x4] sm:$0xf]
  %v1590 = vld [vmem:[%s1587 + $0x8] sm:$0xf]
  %v1591 = vld [vmem:[%s1587 + $0xc] sm:$0xf]
  %v1592 = vld [vmem:[%s1587 + $0x10] sm:$0xf]
  %v1593 = vld [vmem:[%s1587 + $0x14] sm:$0xf]
  %v1594 = vld [vmem:[%s1587 + $0x18] sm:$0xf]
  %v1595 = vld [vmem:[%s1587 + $0x1c] sm:$0xf]
  %v1604 = vunpack.c.l.b16 %v1588
  %v1605 = vunpack.c.l.b16 %v1589
  %v1606 = vunpack.c.l.b16 %v1590
  %v1607 = vunpack.c.l.b16 %v1591
  %v1608 = vunpack.c.l.b16 %v1592
  %v1609 = vunpack.c.l.b16 %v1593
  %v1610 = vunpack.c.l.b16 %v1594
  %v1611 = vunpack.c.l.b16 %v1595
  %v1612 = vpack.c.b16 %v1605, %v1604
  %v1613 = vpack.c.b16 %v1607, %v1606
  %v1614 = vpack.c.b16 %v1609, %v1608
  %v1615 = vpack.c.b16 %v1611, %v1610
  %v1621 = vsel %vm386, %v1583, 0
  %v1624 = vsel %vm386, %v1584, 0
  %v1627 = vsel %vm386, %v1585, 0
  %v1630 = vsel %vm386, %v1586, 0
  %1632 = vmatprep.subr.bf16.mxu0 0
  %1633 = vmatpush1.bf16.msra.mxu0 %v1612
  %1634 = vmatprep.subr.bf16.mxu0 0
  %1635 = vmatpush1.bf16.msra.mxu0 %v1613
  %1636 = vmatprep.subr.bf16.mxu0 0
  %1637 = vmatpush1.bf16.msra.mxu0 %v1614
  %1638 = vmatprep.subr.bf16.mxu0 0
  %1639 = vmatpush1.bf16.msra.mxu0 %v1615
  %1640 = vmatprep.subr.bf16.mxu0 0
  %1641 = vmatpush1.bf16.msra.mxu0 0
  %1642 = vmatprep.subr.bf16.mxu0 0
  %1643 = vmatpush1.bf16.msra.mxu0 0
  %1644 = vmatprep.subr.bf16.mxu0 0
  %1645 = vmatpush1.bf16.msra.mxu0 0
  %1646 = vmatprep.subr.bf16.mxu0 0
  %1647 = vmatpush1.bf16.msra.mxu0 0
  %1648 = vmatprep.subr.bf16.mxu0 0
  %1649 = vmatpush1.bf16.msra.mxu0 0
  %1650 = vmatprep.subr.bf16.mxu0 0
  %1651 = vmatpush1.bf16.msra.mxu0 0
  %1652 = vmatprep.subr.bf16.mxu0 0
  %1653 = vmatpush1.bf16.msra.mxu0 0
  %1654 = vmatprep.subr.bf16.mxu0 0
  %1655 = vmatpush1.bf16.msra.mxu0 0
  %1656 = vmatprep.subr.bf16.mxu0 0
  %1657 = vmatpush1.bf16.msra.mxu0 0
  %1658 = vmatprep.subr.bf16.mxu0 0
  %1659 = vmatpush1.bf16.msra.mxu0 0
  %1660 = vmatprep.subr.bf16.mxu0 0
  %1661 = vmatpush1.bf16.msra.mxu0 0
  %1662 = vmatprep.subr.bf16.mxu0 0
  %1663 = vmatpush1.bf16.msra.mxu0 0
  %1664 = vmatprep.mubr.bf16.mxu0 0
  %1665 = vmatmul.mubr.bf16.gmra.mrb[0].mxu0 %v400
  %v1666 = vpop.f32.mrb[0].mxu0
  %v1667 = vadd.f32 0.0, %v1666
  %v1668 = vpop.f32.mrb[0].mxu0
  %v1669 = vpop.f32.mrb[0].mxu0
  %v1670 = vadd.f32 0.0, %v1669
  %v1671 = vpop.f32.mrb[0].mxu0
  %1672 = vmatprep.mubr.bf16.mxu0 0
  %1673 = vmatmul.mubr.bf16.gmra.mrb[0].mxu0 %v403
  %v1674 = vpop.f32.mrb[0].mxu0
  %v1675 = vadd.f32 0.0, %v1674
  %v1676 = vpop.f32.mrb[0].mxu0
  %v1677 = vpop.f32.mrb[0].mxu0
  %v1678 = vadd.f32 0.0, %v1677
  %v1679 = vpop.f32.mrb[0].mxu0
  %1680 = vmatprep.mubr.bf16.mxu0 0
  %1681 = vmatmul.mubr.bf16.gmra.mrb[0].mxu0 %v406
  %v1682 = vpop.f32.mrb[0].mxu0
  %v1683 = vadd.f32 0.0, %v1682
  %v1684 = vpop.f32.mrb[0].mxu0
  %v1685 = vpop.f32.mrb[0].mxu0
  %v1686 = vadd.f32 0.0, %v1685
  %v1687 = vpop.f32.mrb[0].mxu0
  %1688 = vmatprep.mubr.bf16.mxu0 0
  %1689 = vmatmul.mubr.bf16.gmra.mrb[0].mxu0 %v409
  %v1690 = vpop.f32.mrb[0].mxu0
  %v1691 = vadd.f32 0.0, %v1690
  %v1692 = vpop.f32.mrb[0].mxu0
  %v1693 = vpop.f32.mrb[0].mxu0
  %v1694 = vadd.f32 0.0, %v1693
  %v1695 = vpop.f32.mrb[0].mxu0
  %1696 = vmatprep.mubr.bf16.mxu0 0
  %1697 = vmatmul.mubr.bf16.gmra.mrb[0].mxu0 %v412
  %v1698 = vpop.f32.mrb[0].mxu0
  %v1699 = vadd.f32 0.0, %v1698
  %v1700 = vpop.f32.mrb[0].mxu0
  %v1701 = vpop.f32.mrb[0].mxu0
  %v1702 = vadd.f32 0.0, %v1701
  %v1703 = vpop.f32.mrb[0].mxu0
  %1704 = vmatprep.mubr.bf16.mxu0 0
  %1705 = vmatmul.mubr.bf16.gmra.mrb[0].mxu0 %v415
  %v1706 = vpop.f32.mrb[0].mxu0
  %v1707 = vadd.f32 0.0, %v1706
  %v1708 = vpop.f32.mrb[0].mxu0
  %v1709 = vpop.f32.mrb[0].mxu0
  %v1710 = vadd.f32 0.0, %v1709
  %v1711 = vpop.f32.mrb[0].mxu0
  %1712 = vmatprep.mubr.bf16.mxu0 0
  %1713 = vmatmul.mubr.bf16.gmra.mrb[0].mxu0 %v418
  %v1714 = vpop.f32.mrb[0].mxu0
  %v1715 = vadd.f32 0.0, %v1714
  %v1716 = vpop.f32.mrb[0].mxu0
  %v1717 = vpop.f32.mrb[0].mxu0
  %v1718 = vadd.f32 0.0, %v1717
  %v1719 = vpop.f32.mrb[0].mxu0
  %1720 = vmatprep.mubr.bf16.mxu0 0
  %1721 = vmatmul.mubr.bf16.gmra.mrb[0].mxu0 %v421
  %v1722 = vpop.f32.mrb[0].mxu0
  %v1723 = vadd.f32 0.0, %v1722
  %v1724 = vpop.f32.mrb[0].mxu0
  %v1725 = vpop.f32.mrb[0].mxu0
  %v1726 = vadd.f32 0.0, %v1725
  %v1727 = vpop.f32.mrb[0].mxu0
  %1728 = vmatprep.mubr.bf16.mxu0 0
  %1729 = vmatmul.mubr.bf16.gmra.mrb[0].mxu0 %v424
  %v1730 = vpop.f32.mrb[0].mxu0
  %v1731 = vadd.f32 0.0, %v1730
  %v1732 = vpop.f32.mrb[0].mxu0
  %v1733 = vpop.f32.mrb[0].mxu0
  %v1734 = vadd.f32 0.0, %v1733
  %v1735 = vpop.f32.mrb[0].mxu0
  %1736 = vmatprep.mubr.bf16.mxu0 0
  %1737 = vmatmul.mubr.bf16.gmra.mrb[0].mxu0 %v427
  %v1738 = vpop.f32.mrb[0].mxu0
  %v1739 = vadd.f32 0.0, %v1738
  %v1740 = vpop.f32.mrb[0].mxu0
  %v1741 = vpop.f32.mrb[0].mxu0
  %v1742 = vadd.f32 0.0, %v1741
  %v1743 = vpop.f32.mrb[0].mxu0
  %1744 = vmatprep.mubr.bf16.mxu0 0
  %1745 = vmatmul.mubr.bf16.gmra.mrb[0].mxu0 %v430
  %v1746 = vpop.f32.mrb[0].mxu0
  %v1747 = vadd.f32 0.0, %v1746
  %v1748 = vpop.f32.mrb[0].mxu0
  %v1749 = vpop.f32.mrb[0].mxu0
  %v1750 = vadd.f32 0.0, %v1749
  %v1751 = vpop.f32.mrb[0].mxu0
  %1752 = vmatprep.mubr.bf16.mxu0 0
  %1753 = vmatmul.mubr.bf16.gmra.mrb[0].mxu0 %v433
  %v1754 = vpop.f32.mrb[0].mxu0
  %v1755 = vadd.f32 0.0, %v1754
  %v1756 = vpop.f32.mrb[0].mxu0
  %v1757 = vpop.f32.mrb[0].mxu0
  %v1758 = vadd.f32 0.0, %v1757
  %v1759 = vpop.f32.mrb[0].mxu0
  %1760 = vmatprep.mubr.bf16.mxu0 0
  %1761 = vmatmul.mubr.bf16.gmra.mrb[0].mxu0 %v436
  %v1762 = vpop.f32.mrb[0].mxu0
  %v1763 = vadd.f32 0.0, %v1762
  %v1764 = vpop.f32.mrb[0].mxu0
  %v1765 = vpop.f32.mrb[0].mxu0
  %v1766 = vadd.f32 0.0, %v1765
  %v1767 = vpop.f32.mrb[0].mxu0
  %1768 = vmatprep.mubr.bf16.mxu0 0
  %1769 = vmatmul.mubr.bf16.gmra.mrb[0].mxu0 %v439
  %v1770 = vpop.f32.mrb[0].mxu0
  %v1771 = vadd.f32 0.0, %v1770
  %v1772 = vpop.f32.mrb[0].mxu0
  %v1773 = vpop.f32.mrb[0].mxu0
  %v1774 = vadd.f32 0.0, %v1773
  %v1775 = vpop.f32.mrb[0].mxu0
  %1776 = vmatprep.mubr.bf16.mxu0 0
  %1777 = vmatmul.mubr.bf16.gmra.mrb[0].mxu0 %v442
  %v1778 = vpop.f32.mrb[0].mxu0
  %v1779 = vadd.f32 0.0, %v1778
  %v1780 = vpop.f32.mrb[0].mxu0
  %v1781 = vpop.f32.mrb[0].mxu0
  %v1782 = vadd.f32 0.0, %v1781
  %v1783 = vpop.f32.mrb[0].mxu0
  %1784 = vmatprep.mubr.bf16.mxu0 0
  %1785 = vmatmul.mubr.bf16.gmra.mrb[0].mxu0 %v445
  %v1786 = vpop.f32.mrb[0].mxu0
  %v1787 = vadd.f32 0.0, %v1786
  %v1788 = vpop.f32.mrb[0].mxu0
  %v1789 = vpop.f32.mrb[0].mxu0
  %v1790 = vadd.f32 0.0, %v1789
  %v1791 = vpop.f32.mrb[0].mxu0
  %1792 = vmatprep.mubr.bf16.mxu0 0
  %1793 = vmatmul.mubr.bf16.gmra.mrb[0].mxu0 %v448
  %v1794 = vpop.f32.mrb[0].mxu0
  %v1795 = vadd.f32 0.0, %v1794
  %v1796 = vpop.f32.mrb[0].mxu0
  %v1797 = vpop.f32.mrb[0].mxu0
  %v1798 = vadd.f32 0.0, %v1797
  %v1799 = vpop.f32.mrb[0].mxu0
  %1800 = vmatprep.mubr.bf16.mxu0 0
  %1801 = vmatmul.mubr.bf16.gmra.mrb[0].mxu0 %v451
  %v1802 = vpop.f32.mrb[0].mxu0
  %v1803 = vadd.f32 0.0, %v1802
  %v1804 = vpop.f32.mrb[0].mxu0
  %v1805 = vpop.f32.mrb[0].mxu0
  %v1806 = vadd.f32 0.0, %v1805
  %v1807 = vpop.f32.mrb[0].mxu0
  %1808 = vmatprep.mubr.bf16.mxu0 0
  %1809 = vmatmul.mubr.bf16.gmra.mrb[0].mxu0 %v454
  %v1810 = vpop.f32.mrb[0].mxu0
  %v1811 = vadd.f32 0.0, %v1810
  %v1812 = vpop.f32.mrb[0].mxu0
  %v1813 = vpop.f32.mrb[0].mxu0
  %v1814 = vadd.f32 0.0, %v1813
  %v1815 = vpop.f32.mrb[0].mxu0
  %1816 = vmatprep.mubr.bf16.mxu0 0
  %1817 = vmatmul.mubr.bf16.gmra.mrb[0].mxu0 %v457
  %v1818 = vpop.f32.mrb[0].mxu0
  %v1819 = vadd.f32 0.0, %v1818
  %v1820 = vpop.f32.mrb[0].mxu0
  %v1821 = vpop.f32.mrb[0].mxu0
  %v1822 = vadd.f32 0.0, %v1821
  %v1823 = vpop.f32.mrb[0].mxu0
  %1824 = vmatprep.mubr.bf16.mxu0 0
  %1825 = vmatmul.mubr.bf16.gmra.mrb[0].mxu0 %v460
  %v1826 = vpop.f32.mrb[0].mxu0
  %v1827 = vadd.f32 0.0, %v1826
  %v1828 = vpop.f32.mrb[0].mxu0
  %v1829 = vpop.f32.mrb[0].mxu0
  %v1830 = vadd.f32 0.0, %v1829
  %v1831 = vpop.f32.mrb[0].mxu0
  %1832 = vmatprep.mubr.bf16.mxu0 0
  %1833 = vmatmul.mubr.bf16.gmra.mrb[0].mxu0 %v463
  %v1834 = vpop.f32.mrb[0].mxu0
  %v1835 = vadd.f32 0.0, %v1834
  %v1836 = vpop.f32.mrb[0].mxu0
  %v1837 = vpop.f32.mrb[0].mxu0
  %v1838 = vadd.f32 0.0, %v1837
  %v1839 = vpop.f32.mrb[0].mxu0
  %1840 = vmatprep.mubr.bf16.mxu0 0
  %1841 = vmatmul.mubr.bf16.gmra.mrb[0].mxu0 %v466
  %v1842 = vpop.f32.mrb[0].mxu0
  %v1843 = vadd.f32 0.0, %v1842
  %v1844 = vpop.f32.mrb[0].mxu0
  %v1845 = vpop.f32.mrb[0].mxu0
  %v1846 = vadd.f32 0.0, %v1845
  %v1847 = vpop.f32.mrb[0].mxu0
  %1848 = vmatprep.mubr.bf16.mxu0 0
  %1849 = vmatmul.mubr.bf16.gmra.mrb[0].mxu0 %v469
  %v1850 = vpop.f32.mrb[0].mxu0
  %v1851 = vadd.f32 0.0, %v1850
  %v1852 = vpop.f32.mrb[0].mxu0
  %v1853 = vpop.f32.mrb[0].mxu0
  %v1854 = vadd.f32 0.0, %v1853
  %v1855 = vpop.f32.mrb[0].mxu0
  %1856 = vmatprep.mubr.bf16.mxu0 0
  %1857 = vmatmul.mubr.bf16.gmra.mrb[0].mxu0 %v472
  %v1858 = vpop.f32.mrb[0].mxu0
  %v1859 = vadd.f32 0.0, %v1858
  %v1860 = vpop.f32.mrb[0].mxu0
  %v1861 = vpop.f32.mrb[0].mxu0
  %v1862 = vadd.f32 0.0, %v1861
  %v1863 = vpop.f32.mrb[0].mxu0
  %1864 = vmatprep.mubr.bf16.mxu0 0
  %1865 = vmatmul.mubr.bf16.gmra.mrb[0].mxu0 %v475
  %v1866 = vpop.f32.mrb[0].mxu0
  %v1867 = vadd.f32 0.0, %v1866
  %v1868 = vpop.f32.mrb[0].mxu0
  %v1869 = vpop.f32.mrb[0].mxu0
  %v1870 = vadd.f32 0.0, %v1869
  %v1871 = vpop.f32.mrb[0].mxu0
  %1872 = vmatprep.mubr.bf16.mxu0 0
  %1873 = vmatmul.mubr.bf16.gmra.mrb[0].mxu0 %v478
  %v1874 = vpop.f32.mrb[0].mxu0
  %v1875 = vadd.f32 0.0, %v1874
  %v1876 = vpop.f32.mrb[0].mxu0
  %v1877 = vpop.f32.mrb[0].mxu0
  %v1878 = vadd.f32 0.0, %v1877
  %v1879 = vpop.f32.mrb[0].mxu0
  %1880 = vmatprep.mubr.bf16.mxu0 0
  %1881 = vmatmul.mubr.bf16.gmra.mrb[0].mxu0 %v481
  %v1882 = vpop.f32.mrb[0].mxu0
  %v1883 = vadd.f32 0.0, %v1882
  %v1884 = vpop.f32.mrb[0].mxu0
  %v1885 = vpop.f32.mrb[0].mxu0
  %v1886 = vadd.f32 0.0, %v1885
  %v1887 = vpop.f32.mrb[0].mxu0
  %1888 = vmatprep.mubr.bf16.mxu0 0
  %1889 = vmatmul.mubr.bf16.gmra.mrb[0].mxu0 %v1621
  %v1890 = vpop.f32.mrb[0].mxu0
  %v1891 = vadd.f32 0.0, %v1890
  %v1892 = vpop.f32.mrb[0].mxu0
  %v1893 = vpop.f32.mrb[0].mxu0
  %v1894 = vadd.f32 0.0, %v1893
  %v1895 = vpop.f32.mrb[0].mxu0
  %1896 = vmatprep.mubr.bf16.mxu0 0
  %1897 = vmatmul.mubr.bf16.gmra.mrb[0].mxu0 %v1624
  %v1898 = vpop.f32.mrb[0].mxu0
  %v1899 = vadd.f32 0.0, %v1898
  %v1900 = vpop.f32.mrb[0].mxu0
  %v1901 = vpop.f32.mrb[0].mxu0
  %v1902 = vadd.f32 0.0, %v1901
  %v1903 = vpop.f32.mrb[0].mxu0
  %1904 = vmatprep.mubr.bf16.mxu0 0
  %1905 = vmatmul.mubr.bf16.gmra.mrb[0].mxu0 %v1627
  %v1906 = vpop.f32.mrb[0].mxu0
  %v1907 = vadd.f32 0.0, %v1906
  %v1908 = vpop.f32.mrb[0].mxu0
  %v1909 = vpop.f32.mrb[0].mxu0
  %v1910 = vadd.f32 0.0, %v1909
  %v1911 = vpop.f32.mrb[0].mxu0
  %1912 = vmatprep.mubr.bf16.mxu0 0
  %1913 = vmatmul.mubr.bf16.gmra.mrb[0].mxu0 %v1630
  %v1914 = vpop.f32.mrb[0].mxu0
  %v1915 = vadd.f32 0.0, %v1914
  %v1916 = vpop.f32.mrb[0].mxu0
  %v1917 = vpop.f32.mrb[0].mxu0
  %v1918 = vadd.f32 0.0, %v1917
  %v1919 = vpop.f32.mrb[0].mxu0
  %1920 = vdwg.mxu0
  %v1921 = vadd.f32 %v1519, %v1667
  %v1922 = vadd.f32 %v1520, %v1670
  %v1923 = vadd.f32 %v1521, %v1675
  %v1924 = vadd.f32 %v1522, %v1678
  %v1925 = vadd.f32 %v1523, %v1683
  %v1926 = vadd.f32 %v1524, %v1686
  %v1927 = vadd.f32 %v1525, %v1691
  %v1928 = vadd.f32 %v1526, %v1694
  %v1929 = vadd.f32 %v1527, %v1699
  %v1930 = vadd.f32 %v1528, %v1702
  %v1931 = vadd.f32 %v1529, %v1707
  %v1932 = vadd.f32 %v1530, %v1710
  %v1933 = vadd.f32 %v1531, %v1715
  %v1934 = vadd.f32 %v1532, %v1718
  %v1935 = vadd.f32 %v1533, %v1723
  %v1936 = vadd.f32 %v1534, %v1726
  %v1937 = vadd.f32 %v1535, %v1731
  %v1938 = vadd.f32 %v1536, %v1734
  %v1939 = vadd.f32 %v1537, %v1739
  %v1940 = vadd.f32 %v1538, %v1742
  %v1941 = vadd.f32 %v1539, %v1747
  %v1942 = vadd.f32 %v1540, %v1750
  %v1943 = vadd.f32 %v1541, %v1755
  %v1944 = vadd.f32 %v1542, %v1758
  %v1945 = vadd.f32 %v1543, %v1763
  %v1946 = vadd.f32 %v1544, %v1766
  %v1947 = vadd.f32 %v1545, %v1771
  %v1948 = vadd.f32 %v1546, %v1774
  %v1949 = vadd.f32 %v1547, %v1779
  %v1950 = vadd.f32 %v1548, %v1782
  %v1951 = vadd.f32 %v1549, %v1787
  %v1952 = vadd.f32 %v1550, %v1790
  %v1953 = vadd.f32 %v1551, %v1795
  %v1954 = vadd.f32 %v1552, %v1798
  %v1955 = vadd.f32 %v1553, %v1803
  %v1956 = vadd.f32 %v1554, %v1806
  %v1957 = vadd.f32 %v1555, %v1811
  %v1958 = vadd.f32 %v1556, %v1814
  %v1959 = vadd.f32 %v1557, %v1819
  %v1960 = vadd.f32 %v1558, %v1822
  %v1961 = vadd.f32 %v1559, %v1827
  %v1962 = vadd.f32 %v1560, %v1830
  %v1963 = vadd.f32 %v1561, %v1835
  %v1964 = vadd.f32 %v1562, %v1838
  %v1965 = vadd.f32 %v1563, %v1843
  %v1966 = vadd.f32 %v1564, %v1846
  %v1967 = vadd.f32 %v1565, %v1851
  %v1968 = vadd.f32 %v1566, %v1854
  %v1969 = vadd.f32 %v1567, %v1859
  %v1970 = vadd.f32 %v1568, %v1862
  %v1971 = vadd.f32 %v1569, %v1867
  %v1972 = vadd.f32 %v1570, %v1870
  %v1973 = vadd.f32 %v1571, %v1875
  %v1974 = vadd.f32 %v1572, %v1878
  %v1975 = vadd.f32 %v1573, %v1883
  %v1976 = vadd.f32 %v1574, %v1886
  %v1977 = vadd.f32 %v1575, %v1891
  %v1978 = vadd.f32 %v1576, %v1894
  %v1979 = vadd.f32 %v1577, %v1899
  %v1980 = vadd.f32 %v1578, %v1902
  %v1981 = vadd.f32 %v1579, %v1907
  %v1982 = vadd.f32 %v1580, %v1910
  %v1983 = vadd.f32 %v1581, %v1915
  %v1984 = vadd.f32 %v1582, %v1918
  %v1985 = vld [vmem:[%s2] sm:$0x1]
  %v1987 = vlaneseq
  %v1988 = vshrl.u32 %v1987, 7
  %v1989 = vsub.s32 0, %v1988
  %v1990 = vrot.slane %v1985, %v1989
  %v1992 = vadd.f32 %v1921, %v1990
  %v1993 = vadd.f32 %v1922, %v1990
  %v1994 = vadd.f32 %v1923, %v1990
  %v1995 = vadd.f32 %v1924, %v1990
  %v1996 = vadd.f32 %v1925, %v1990
  %v1997 = vadd.f32 %v1926, %v1990
  %v1998 = vadd.f32 %v1927, %v1990
  %v1999 = vadd.f32 %v1928, %v1990
  %v2000 = vadd.f32 %v1929, %v1990
  %v2001 = vadd.f32 %v1930, %v1990
  %v2002 = vadd.f32 %v1931, %v1990
  %v2003 = vadd.f32 %v1932, %v1990
  %v2004 = vadd.f32 %v1933, %v1990
  %v2005 = vadd.f32 %v1934, %v1990
  %v2006 = vadd.f32 %v1935, %v1990
  %v2007 = vadd.f32 %v1936, %v1990
  %v2008 = vadd.f32 %v1937, %v1990
  %v2009 = vadd.f32 %v1938, %v1990
  %v2010 = vadd.f32 %v1939, %v1990
  %v2011 = vadd.f32 %v1940, %v1990
  %v2012 = vadd.f32 %v1941, %v1990
  %v2013 = vadd.f32 %v1942, %v1990
  %v2014 = vadd.f32 %v1943, %v1990
  %v2015 = vadd.f32 %v1944, %v1990
  %v2016 = vadd.f32 %v1945, %v1990
  %v2017 = vadd.f32 %v1946, %v1990
  %v2018 = vadd.f32 %v1947, %v1990
  %v2019 = vadd.f32 %v1948, %v1990
  %v2020 = vadd.f32 %v1949, %v1990
  %v2021 = vadd.f32 %v1950, %v1990
  %v2022 = vadd.f32 %v1951, %v1990
  %v2023 = vadd.f32 %v1952, %v1990
  %v2024 = vadd.f32 %v1953, %v1990
  %v2025 = vadd.f32 %v1954, %v1990
  %v2026 = vadd.f32 %v1955, %v1990
  %v2027 = vadd.f32 %v1956, %v1990
  %v2028 = vadd.f32 %v1957, %v1990
  %v2029 = vadd.f32 %v1958, %v1990
  %v2030 = vadd.f32 %v1959, %v1990
  %v2031 = vadd.f32 %v1960, %v1990
  %v2032 = vadd.f32 %v1961, %v1990
  %v2033 = vadd.f32 %v1962, %v1990
  %v2034 = vadd.f32 %v1963, %v1990
  %v2035 = vadd.f32 %v1964, %v1990
  %v2036 = vadd.f32 %v1965, %v1990
  %v2037 = vadd.f32 %v1966, %v1990
  %v2038 = vadd.f32 %v1967, %v1990
  %v2039 = vadd.f32 %v1968, %v1990
  %v2040 = vadd.f32 %v1969, %v1990
  %v2041 = vadd.f32 %v1970, %v1990
  %v2042 = vadd.f32 %v1971, %v1990
  %v2043 = vadd.f32 %v1972, %v1990
  %v2044 = vadd.f32 %v1973, %v1990
  %v2045 = vadd.f32 %v1974, %v1990
  %v2046 = vadd.f32 %v1975, %v1990
  %v2047 = vadd.f32 %v1976, %v1990
  %v2048 = vadd.f32 %v1977, %v1990
  %v2049 = vadd.f32 %v1978, %v1990
  %v2050 = vadd.f32 %v1979, %v1990
  %v2051 = vadd.f32 %v1980, %v1990
  %v2052 = vadd.f32 %v1981, %v1990
  %v2053 = vadd.f32 %v1982, %v1990
  %v2054 = vadd.f32 %v1983, %v1990
  %v2055 = vadd.f32 %v1984, %v1990
  %v2056 = vmax.f32 %v1992, 0.0
  %v2057 = vmax.f32 %v1993, 0.0
  %v2058 = vmax.f32 %v1994, 0.0
  %v2059 = vmax.f32 %v1995, 0.0
  %v2060 = vmax.f32 %v1996, 0.0
  %v2061 = vmax.f32 %v1997, 0.0
  %v2062 = vmax.f32 %v1998, 0.0
  %v2063 = vmax.f32 %v1999, 0.0
  %v2064 = vmax.f32 %v2000, 0.0
  %v2065 = vmax.f32 %v2001, 0.0
  %v2066 = vmax.f32 %v2002, 0.0
  %v2067 = vmax.f32 %v2003, 0.0
  %v2068 = vmax.f32 %v2004, 0.0
  %v2069 = vmax.f32 %v2005, 0.0
  %v2070 = vmax.f32 %v2006, 0.0
  %v2071 = vmax.f32 %v2007, 0.0
  %v2072 = vmax.f32 %v2008, 0.0
  %v2073 = vmax.f32 %v2009, 0.0
  %v2074 = vmax.f32 %v2010, 0.0
  %v2075 = vmax.f32 %v2011, 0.0
  %v2076 = vmax.f32 %v2012, 0.0
  %v2077 = vmax.f32 %v2013, 0.0
  %v2078 = vmax.f32 %v2014, 0.0
  %v2079 = vmax.f32 %v2015, 0.0
  %v2080 = vmax.f32 %v2016, 0.0
  %v2081 = vmax.f32 %v2017, 0.0
  %v2082 = vmax.f32 %v2018, 0.0
  %v2083 = vmax.f32 %v2019, 0.0
  %v2084 = vmax.f32 %v2020, 0.0
  %v2085 = vmax.f32 %v2021, 0.0
  %v2086 = vmax.f32 %v2022, 0.0
  %v2087 = vmax.f32 %v2023, 0.0
  %v2088 = vmax.f32 %v2024, 0.0
  %v2089 = vmax.f32 %v2025, 0.0
  %v2090 = vmax.f32 %v2026, 0.0
  %v2091 = vmax.f32 %v2027, 0.0
  %v2092 = vmax.f32 %v2028, 0.0
  %v2093 = vmax.f32 %v2029, 0.0
  %v2094 = vmax.f32 %v2030, 0.0
  %v2095 = vmax.f32 %v2031, 0.0
  %v2096 = vmax.f32 %v2032, 0.0
  %v2097 = vmax.f32 %v2033, 0.0
  %v2098 = vmax.f32 %v2034, 0.0
  %v2099 = vmax.f32 %v2035, 0.0
  %v2100 = vmax.f32 %v2036, 0.0
  %v2101 = vmax.f32 %v2037, 0.0
  %v2102 = vmax.f32 %v2038, 0.0
  %v2103 = vmax.f32 %v2039, 0.0
  %v2104 = vmax.f32 %v2040, 0.0
  %v2105 = vmax.f32 %v2041, 0.0
  %v2106 = vmax.f32 %v2042, 0.0
  %v2107 = vmax.f32 %v2043, 0.0
  %v2108 = vmax.f32 %v2044, 0.0
  %v2109 = vmax.f32 %v2045, 0.0
  %v2110 = vmax.f32 %v2046, 0.0
  %v2111 = vmax.f32 %v2047, 0.0
  %v2112 = vmax.f32 %v2048, 0.0
  %v2113 = vmax.f32 %v2049, 0.0
  %v2114 = vmax.f32 %v2050, 0.0
  %v2115 = vmax.f32 %v2051, 0.0
  %v2116 = vmax.f32 %v2052, 0.0
  %v2117 = vmax.f32 %v2053, 0.0
  %v2118 = vmax.f32 %v2054, 0.0
  %v2119 = vmax.f32 %v2055, 0.0
  %v2120 = vmax.f32 %v2056, %v2057
  %v2121 = vmax.f32 %v2064, %v2065
  %v2122 = vmax.f32 %v2120, %v2121
  %v2123 = vmax.f32 %v2058, %v2059
  %v2124 = vmax.f32 %v2066, %v2067
  %v2125 = vmax.f32 %v2123, %v2124
  %v2126 = vmax.f32 %v2060, %v2061
  %v2127 = vmax.f32 %v2068, %v2069
  %v2128 = vmax.f32 %v2126, %v2127
  %v2129 = vmax.f32 %v2062, %v2063
  %v2130 = vmax.f32 %v2070, %v2071
  %v2131 = vmax.f32 %v2129, %v2130
  %v2132 = vmax.f32 %v2072, %v2073
  %v2133 = vmax.f32 %v2080, %v2081
  %v2134 = vmax.f32 %v2132, %v2133
  %v2135 = vmax.f32 %v2074, %v2075
  %v2136 = vmax.f32 %v2082, %v2083
  %v2137 = vmax.f32 %v2135, %v2136
  %v2138 = vmax.f32 %v2076, %v2077
  %v2139 = vmax.f32 %v2084, %v2085
  %v2140 = vmax.f32 %v2138, %v2139
  %v2141 = vmax.f32 %v2078, %v2079
  %v2142 = vmax.f32 %v2086, %v2087
  %v2143 = vmax.f32 %v2141, %v2142
  %v2144 = vmax.f32 %v2088, %v2089
  %v2145 = vmax.f32 %v2096, %v2097
  %v2146 = vmax.f32 %v2144, %v2145
  %v2147 = vmax.f32 %v2090, %v2091
  %v2148 = vmax.f32 %v2098, %v2099
  %v2149 = vmax.f32 %v2147, %v2148
  %v2150 = vmax.f32 %v2092, %v2093
  %v2151 = vmax.f32 %v2100, %v2101
  %v2152 = vmax.f32 %v2150, %v2151
  %v2153 = vmax.f32 %v2094, %v2095
  %v2154 = vmax.f32 %v2102, %v2103
  %v2155 = vmax.f32 %v2153, %v2154
  %v2156 = vmax.f32 %v2104, %v2105
  %v2157 = vmax.f32 %v2112, %v2113
  %v2158 = vmax.f32 %v2156, %v2157
  %v2159 = vmax.f32 %v2106, %v2107
  %v2160 = vmax.f32 %v2114, %v2115
  %v2161 = vmax.f32 %v2159, %v2160
  %v2162 = vmax.f32 %v2108, %v2109
  %v2163 = vmax.f32 %v2116, %v2117
  %v2164 = vmax.f32 %v2162, %v2163
  %v2165 = vmax.f32 %v2110, %v2111
  %v2166 = vmax.f32 %v2118, %v2119
  %v2167 = vmax.f32 %v2165, %v2166
  %2169 = vrot.lane.b32.xlu0 %v2125, 32
  %v2170 = vpop.permute.xlu0 %2169
  %2173 = vrot.lane.b32.xlu0 %v2128, 64
  %v2174 = vpop.permute.xlu0 %2173
  %2177 = vrot.lane.b32.xlu0 %v2131, 96
  %v2178 = vpop.permute.xlu0 %2177
  %2181 = vrot.lane.b32.xlu0 %v2137, 32
  %v2182 = vpop.permute.xlu0 %2181
  %2185 = vrot.lane.b32.xlu0 %v2140, 64
  %v2186 = vpop.permute.xlu0 %2185
  %2189 = vrot.lane.b32.xlu0 %v2143, 96
  %v2190 = vpop.permute.xlu0 %2189
  %2193 = vrot.lane.b32.xlu0 %v2149, 32
  %v2194 = vpop.permute.xlu0 %2193
  %2197 = vrot.lane.b32.xlu0 %v2152, 64
  %v2198 = vpop.permute.xlu0 %2197
  %2201 = vrot.lane.b32.xlu0 %v2155, 96
  %v2202 = vpop.permute.xlu0 %2201
  %2205 = vrot.lane.b32.xlu0 %v2161, 32
  %v2206 = vpop.permute.xlu0 %2205
  %2209 = vrot.lane.b32.xlu0 %v2164, 64
  %v2210 = vpop.permute.xlu0 %2209
  %2213 = vrot.lane.b32.xlu0 %v2167, 96
  %v2214 = vpop.permute.xlu0 %2213
  %vm2216 = vcmask 261120
  %v2217 = vsel %vm2216, %v2122, %v2170
  %v2218 = vsel %vm386, %v2217, %v2174
  %vm2219 = vcmask 785408
  %v2220 = vsel %vm2219, %v2218, %v2178
  %v2221 = vsel %vm2216, %v2134, %v2182
  %v2222 = vsel %vm386, %v2221, %v2186
  %v2223 = vsel %vm2219, %v2222, %v2190
  %v2224 = vsel %vm2216, %v2146, %v2194
  %v2225 = vsel %vm386, %v2224, %v2198
  %v2226 = vsel %vm2219, %v2225, %v2202
  %v2227 = vsel %vm2216, %v2158, %v2206
  %v2228 = vsel %vm386, %v2227, %v2210
  %v2229 = vsel %vm2219, %v2228, %v2214
  %v2230 = vpack.c.bf16 %v2220, %v2220
  %v2231 = vpack.c.bf16 %v2223, %v2223
  %v2232 = vpack.c.bf16 %v2226, %v2226
  %v2233 = vpack.c.bf16 %v2229, %v2229
  %v2234 = vld [vmem:[%s3] sm:$0xff]
  %v2235 = vld [vmem:[%s3 + $0x8] sm:$0xff]
  %v2236 = vld [vmem:[%s3 + $0x10] sm:$0xff]
  %v2237 = vld [vmem:[%s3 + $0x18] sm:$0xff]
  %v2238 = vld [vmem:[%s3 + $0x20] sm:$0xff]
  %v2239 = vld [vmem:[%s3 + $0x28] sm:$0xff]
  %v2240 = vld [vmem:[%s3 + $0x30] sm:$0xff]
  %v2241 = vld [vmem:[%s3 + $0x38] sm:$0xff]
  %v2242 = vld [vmem:[%s3 + $0x40] sm:$0xff]
  %v2243 = vld [vmem:[%s3 + $0x48] sm:$0xff]
  %v2244 = vld [vmem:[%s3 + $0x50] sm:$0xff]
  %v2245 = vld [vmem:[%s3 + $0x58] sm:$0xff]
  %v2246 = vld [vmem:[%s3 + $0x60] sm:$0xff]
  %v2247 = vld [vmem:[%s3 + $0x68] sm:$0xff]
  %v2248 = vld [vmem:[%s3 + $0x70] sm:$0xff]
  %v2249 = vld [vmem:[%s3 + $0x78] sm:$0xff]
  %v2250 = vld [vmem:[%s3 + $0x80] sm:$0xff]
  %v2251 = vld [vmem:[%s3 + $0x88] sm:$0xff]
  %v2252 = vld [vmem:[%s3 + $0x90] sm:$0xff]
  %v2253 = vld [vmem:[%s3 + $0x98] sm:$0xff]
  %v2254 = vld [vmem:[%s3 + $0xa0] sm:$0xff]
  %v2255 = vld [vmem:[%s3 + $0xa8] sm:$0xff]
  %v2256 = vld [vmem:[%s3 + $0xb0] sm:$0xff]
  %v2257 = vld [vmem:[%s3 + $0xb8] sm:$0xff]
  %v2258 = vld [vmem:[%s3 + $0xc0] sm:$0xff]
  %v2259 = vld [vmem:[%s3 + $0xc8] sm:$0xff]
  %v2260 = vld [vmem:[%s3 + $0xd0] sm:$0xff]
  %v2261 = vld [vmem:[%s3 + $0xd8] sm:$0xff]
  %v2262 = vld [vmem:[%s3 + $0xe0] sm:$0xff]
  %v2263 = vld [vmem:[%s3 + $0xe8] sm:$0xff]
  %v2264 = vld [vmem:[%s3 + $0xf0] sm:$0xff]
  %v2265 = vld [vmem:[%s3 + $0xf8] sm:$0xff]
  %v2266 = vld [vmem:[%s3 + $0x100] sm:$0xff]
  %v2267 = vld [vmem:[%s3 + $0x108] sm:$0xff]
  %v2268 = vld [vmem:[%s3 + $0x110] sm:$0xff]
  %v2269 = vld [vmem:[%s3 + $0x118] sm:$0xff]
  %v2270 = vld [vmem:[%s3 + $0x120] sm:$0xff]
  %v2271 = vld [vmem:[%s3 + $0x128] sm:$0xff]
  %v2272 = vld [vmem:[%s3 + $0x130] sm:$0xff]
  %v2273 = vld [vmem:[%s3 + $0x138] sm:$0xff]
  %v2274 = vld [vmem:[%s3 + $0x140] sm:$0xff]
  %v2275 = vld [vmem:[%s3 + $0x148] sm:$0xff]
  %v2276 = vld [vmem:[%s3 + $0x150] sm:$0xff]
  %v2277 = vld [vmem:[%s3 + $0x158] sm:$0xff]
  %v2278 = vld [vmem:[%s3 + $0x160] sm:$0xff]
  %v2279 = vld [vmem:[%s3 + $0x168] sm:$0xff]
  %v2280 = vld [vmem:[%s3 + $0x170] sm:$0xff]
  %v2281 = vld [vmem:[%s3 + $0x178] sm:$0xff]
  %v2282 = vld [vmem:[%s3 + $0x180] sm:$0xff]
  %v2283 = vld [vmem:[%s3 + $0x188] sm:$0xff]
  %v2284 = vld [vmem:[%s3 + $0x190] sm:$0xff]
  %v2285 = vld [vmem:[%s3 + $0x198] sm:$0xff]
  %v2286 = vld [vmem:[%s3 + $0x1a0] sm:$0xff]
  %v2287 = vld [vmem:[%s3 + $0x1a8] sm:$0xff]
  %v2288 = vld [vmem:[%s3 + $0x1b0] sm:$0xff]
  %v2289 = vld [vmem:[%s3 + $0x1b8] sm:$0xff]
  %v2290 = vld [vmem:[%s3 + $0x1c0] sm:$0xff]
  %v2291 = vld [vmem:[%s3 + $0x1c8] sm:$0xff]
  %v2292 = vld [vmem:[%s3 + $0x1d0] sm:$0xff]
  %v2293 = vld [vmem:[%s3 + $0x1d8] sm:$0xff]
  %v2294 = vld [vmem:[%s3 + $0x1e0] sm:$0xff]
  %v2295 = vld [vmem:[%s3 + $0x1e8] sm:$0xff]
  %v2296 = vld [vmem:[%s3 + $0x1f0] sm:$0xff]
  %v2297 = vld [vmem:[%s3 + $0x1f8] sm:$0xff]
  %v2298 = vld [vmem:[%s4] sm:$0x3]
  %v2300 = vlaneseq
  %v2301 = vshrl.u32 %v2300, 7
  %v2302 = vsub.s32 0, %v2301
  %v2303 = vrot.slane %v2298, %v2302
  %v2304 = vlaneseq
  %v2305 = vshrl.u32 %v2304, 7
  %v2306 = vsub.s32 1, %v2305
  %v2307 = vrot.slane %v2298, %v2306
  %v2374 = vunpack.c.l.b16 %v2234
  %v2375 = vunpack.c.h.b16 %v2234
  %v2376 = vunpack.c.l.b16 %v2235
  %v2377 = vunpack.c.h.b16 %v2235
  %v2378 = vunpack.c.l.b16 %v2236
  %v2379 = vunpack.c.h.b16 %v2236
  %v2380 = vunpack.c.l.b16 %v2237
  %v2381 = vunpack.c.h.b16 %v2237
  %v2382 = vunpack.c.l.b16 %v2238
  %v2383 = vunpack.c.h.b16 %v2238
  %v2384 = vunpack.c.l.b16 %v2239
  %v2385 = vunpack.c.h.b16 %v2239
  %v2386 = vunpack.c.l.b16 %v2240
  %v2387 = vunpack.c.h.b16 %v2240
  %v2388 = vunpack.c.l.b16 %v2241
  %v2389 = vunpack.c.h.b16 %v2241
  %v2390 = vunpack.c.l.b16 %v2242
  %v2391 = vunpack.c.h.b16 %v2242
  %v2392 = vunpack.c.l.b16 %v2243
  %v2393 = vunpack.c.h.b16 %v2243
  %v2394 = vunpack.c.l.b16 %v2244
  %v2395 = vunpack.c.h.b16 %v2244
  %v2396 = vunpack.c.l.b16 %v2245
  %v2397 = vunpack.c.h.b16 %v2245
  %v2398 = vunpack.c.l.b16 %v2246
  %v2399 = vunpack.c.h.b16 %v2246
  %v2400 = vunpack.c.l.b16 %v2247
  %v2401 = vunpack.c.h.b16 %v2247
  %v2402 = vunpack.c.l.b16 %v2248
  %v2403 = vunpack.c.h.b16 %v2248
  %v2404 = vunpack.c.l.b16 %v2249
  %v2405 = vunpack.c.h.b16 %v2249
  %v2406 = vunpack.c.l.b16 %v2250
  %v2407 = vunpack.c.h.b16 %v2250
  %v2408 = vunpack.c.l.b16 %v2251
  %v2409 = vunpack.c.h.b16 %v2251
  %v2410 = vunpack.c.l.b16 %v2252
  %v2411 = vunpack.c.h.b16 %v2252
  %v2412 = vunpack.c.l.b16 %v2253
  %v2413 = vunpack.c.h.b16 %v2253
  %v2414 = vunpack.c.l.b16 %v2254
  %v2415 = vunpack.c.h.b16 %v2254
  %v2416 = vunpack.c.l.b16 %v2255
  %v2417 = vunpack.c.h.b16 %v2255
  %v2418 = vunpack.c.l.b16 %v2256
  %v2419 = vunpack.c.h.b16 %v2256
  %v2420 = vunpack.c.l.b16 %v2257
  %v2421 = vunpack.c.h.b16 %v2257
  %v2422 = vunpack.c.l.b16 %v2258
  %v2423 = vunpack.c.h.b16 %v2258
  %v2424 = vunpack.c.l.b16 %v2259
  %v2425 = vunpack.c.h.b16 %v2259
  %v2426 = vunpack.c.l.b16 %v2260
  %v2427 = vunpack.c.h.b16 %v2260
  %v2428 = vunpack.c.l.b16 %v2261
  %v2429 = vunpack.c.h.b16 %v2261
  %v2430 = vunpack.c.l.b16 %v2262
  %v2431 = vunpack.c.h.b16 %v2262
  %v2432 = vunpack.c.l.b16 %v2263
  %v2433 = vunpack.c.h.b16 %v2263
  %v2434 = vunpack.c.l.b16 %v2264
  %v2435 = vunpack.c.h.b16 %v2264
  %v2436 = vunpack.c.l.b16 %v2265
  %v2437 = vunpack.c.h.b16 %v2265
  %v2438 = vunpack.c.l.b16 %v2266
  %v2439 = vunpack.c.h.b16 %v2266
  %v2440 = vunpack.c.l.b16 %v2267
  %v2441 = vunpack.c.h.b16 %v2267
  %v2442 = vunpack.c.l.b16 %v2268
  %v2443 = vunpack.c.h.b16 %v2268
  %v2444 = vunpack.c.l.b16 %v2269
  %v2445 = vunpack.c.h.b16 %v2269
  %v2446 = vunpack.c.l.b16 %v2270
  %v2447 = vunpack.c.h.b16 %v2270
  %v2448 = vunpack.c.l.b16 %v2271
  %v2449 = vunpack.c.h.b16 %v2271
  %v2450 = vunpack.c.l.b16 %v2272
  %v2451 = vunpack.c.h.b16 %v2272
  %v2452 = vunpack.c.l.b16 %v2273
  %v2453 = vunpack.c.h.b16 %v2273
  %v2454 = vunpack.c.l.b16 %v2274
  %v2455 = vunpack.c.h.b16 %v2274
  %v2456 = vunpack.c.l.b16 %v2275
  %v2457 = vunpack.c.h.b16 %v2275
  %v2458 = vunpack.c.l.b16 %v2276
  %v2459 = vunpack.c.h.b16 %v2276
  %v2460 = vunpack.c.l.b16 %v2277
  %v2461 = vunpack.c.h.b16 %v2277
  %v2462 = vunpack.c.l.b16 %v2278
  %v2463 = vunpack.c.h.b16 %v2278
  %v2464 = vunpack.c.l.b16 %v2279
  %v2465 = vunpack.c.h.b16 %v2279
  %v2466 = vunpack.c.l.b16 %v2280
  %v2467 = vunpack.c.h.b16 %v2280
  %v2468 = vunpack.c.l.b16 %v2281
  %v2469 = vunpack.c.h.b16 %v2281
  %v2470 = vunpack.c.l.b16 %v2282
  %v2471 = vunpack.c.h.b16 %v2282
  %v2472 = vunpack.c.l.b16 %v2283
  %v2473 = vunpack.c.h.b16 %v2283
  %v2474 = vunpack.c.l.b16 %v2284
  %v2475 = vunpack.c.h.b16 %v2284
  %v2476 = vunpack.c.l.b16 %v2285
  %v2477 = vunpack.c.h.b16 %v2285
  %v2478 = vunpack.c.l.b16 %v2286
  %v2479 = vunpack.c.h.b16 %v2286
  %v2480 = vunpack.c.l.b16 %v2287
  %v2481 = vunpack.c.h.b16 %v2287
  %v2482 = vunpack.c.l.b16 %v2288
  %v2483 = vunpack.c.h.b16 %v2288
  %v2484 = vunpack.c.l.b16 %v2289
  %v2485 = vunpack.c.h.b16 %v2289
  %v2486 = vunpack.c.l.b16 %v2290
  %v2487 = vunpack.c.h.b16 %v2290
  %v2488 = vunpack.c.l.b16 %v2291
  %v2489 = vunpack.c.h.b16 %v2291
  %v2490 = vunpack.c.l.b16 %v2292
  %v2491 = vunpack.c.h.b16 %v2292
  %v2492 = vunpack.c.l.b16 %v2293
  %v2493 = vunpack.c.h.b16 %v2293
  %v2494 = vunpack.c.l.b16 %v2294
  %v2495 = vunpack.c.h.b16 %v2294
  %v2496 = vunpack.c.l.b16 %v2295
  %v2497 = vunpack.c.h.b16 %v2295
  %v2498 = vunpack.c.l.b16 %v2296
  %v2499 = vunpack.c.h.b16 %v2296
  %v2500 = vunpack.c.l.b16 %v2297
  %v2501 = vunpack.c.h.b16 %v2297
  %v2502 = vpack.c.b16 %v2376, %v2374
  %v2503 = vpack.c.b16 %v2377, %v2375
  %v2504 = vpack.c.b16 %v2380, %v2378
  %v2505 = vpack.c.b16 %v2381, %v2379
  %v2506 = vpack.c.b16 %v2384, %v2382
  %v2507 = vpack.c.b16 %v2385, %v2383
  %v2508 = vpack.c.b16 %v2388, %v2386
  %v2509 = vpack.c.b16 %v2389, %v2387
  %v2510 = vpack.c.b16 %v2392, %v2390
  %v2511 = vpack.c.b16 %v2393, %v2391
  %v2512 = vpack.c.b16 %v2396, %v2394
  %v2513 = vpack.c.b16 %v2397, %v2395
  %v2514 = vpack.c.b16 %v2400, %v2398
  %v2515 = vpack.c.b16 %v2401, %v2399
  %v2516 = vpack.c.b16 %v2404, %v2402
  %v2517 = vpack.c.b16 %v2405, %v2403
  %v2518 = vpack.c.b16 %v2408, %v2406
  %v2519 = vpack.c.b16 %v2409, %v2407
  %v2520 = vpack.c.b16 %v2412, %v2410
  %v2521 = vpack.c.b16 %v2413, %v2411
  %v2522 = vpack.c.b16 %v2416, %v2414
  %v2523 = vpack.c.b16 %v2417, %v2415
  %v2524 = vpack.c.b16 %v2420, %v2418
  %v2525 = vpack.c.b16 %v2421, %v2419
  %v2526 = vpack.c.b16 %v2424, %v2422
  %v2527 = vpack.c.b16 %v2425, %v2423
  %v2528 = vpack.c.b16 %v2428, %v2426
  %v2529 = vpack.c.b16 %v2429, %v2427
  %v2530 = vpack.c.b16 %v2432, %v2430
  %v2531 = vpack.c.b16 %v2433, %v2431
  %v2532 = vpack.c.b16 %v2436, %v2434
  %v2533 = vpack.c.b16 %v2437, %v2435
  %v2534 = vpack.c.b16 %v2440, %v2438
  %v2535 = vpack.c.b16 %v2441, %v2439
  %v2536 = vpack.c.b16 %v2444, %v2442
  %v2537 = vpack.c.b16 %v2445, %v2443
  %v2538 = vpack.c.b16 %v2448, %v2446
  %v2539 = vpack.c.b16 %v2449, %v2447
  %v2540 = vpack.c.b16 %v2452, %v2450
  %v2541 = vpack.c.b16 %v2453, %v2451
  %v2542 = vpack.c.b16 %v2456, %v2454
  %v2543 = vpack.c.b16 %v2457, %v2455
  %v2544 = vpack.c.b16 %v2460, %v2458
  %v2545 = vpack.c.b16 %v2461, %v2459
  %v2546 = vpack.c.b16 %v2464, %v2462
  %v2547 = vpack.c.b16 %v2465, %v2463
  %v2548 = vpack.c.b16 %v2468, %v2466
  %v2549 = vpack.c.b16 %v2469, %v2467
  %v2550 = vpack.c.b16 %v2472, %v2470
  %v2551 = vpack.c.b16 %v2473, %v2471
  %v2552 = vpack.c.b16 %v2476, %v2474
  %v2553 = vpack.c.b16 %v2477, %v2475
  %v2554 = vpack.c.b16 %v2480, %v2478
  %v2555 = vpack.c.b16 %v2481, %v2479
  %v2556 = vpack.c.b16 %v2484, %v2482
  %v2557 = vpack.c.b16 %v2485, %v2483
  %v2558 = vpack.c.b16 %v2488, %v2486
  %v2559 = vpack.c.b16 %v2489, %v2487
  %v2560 = vpack.c.b16 %v2492, %v2490
  %v2561 = vpack.c.b16 %v2493, %v2491
  %v2562 = vpack.c.b16 %v2496, %v2494
  %v2563 = vpack.c.b16 %v2497, %v2495
  %v2564 = vpack.c.b16 %v2500, %v2498
  %v2565 = vpack.c.b16 %v2501, %v2499
  %2630 = vmatprep.subr.bf16.mxu0 %v2503
  %2631 = vmatpush1.bf16.msra.mxu0 %v2502
  %2632 = vmatprep.subr.bf16.mxu0 %v2505
  %2633 = vmatpush1.bf16.msra.mxu0 %v2504
  %2634 = vmatprep.subr.bf16.mxu0 %v2507
  %2635 = vmatpush1.bf16.msra.mxu0 %v2506
  %2636 = vmatprep.subr.bf16.mxu0 %v2509
  %2637 = vmatpush1.bf16.msra.mxu0 %v2508
  %2638 = vmatprep.subr.bf16.mxu0 %v2511
  %2639 = vmatpush1.bf16.msra.mxu0 %v2510
  %2640 = vmatprep.subr.bf16.mxu0 %v2513
  %2641 = vmatpush1.bf16.msra.mxu0 %v2512
  %2642 = vmatprep.subr.bf16.mxu0 %v2515
  %2643 = vmatpush1.bf16.msra.mxu0 %v2514
  %2644 = vmatprep.subr.bf16.mxu0 %v2517
  %2645 = vmatpush1.bf16.msra.mxu0 %v2516
  %2646 = vmatprep.subr.bf16.mxu0 %v2519
  %2647 = vmatpush1.bf16.msra.mxu0 %v2518
  %2648 = vmatprep.subr.bf16.mxu0 %v2521
  %2649 = vmatpush1.bf16.msra.mxu0 %v2520
  %2650 = vmatprep.subr.bf16.mxu0 %v2523
  %2651 = vmatpush1.bf16.msra.mxu0 %v2522
  %2652 = vmatprep.subr.bf16.mxu0 %v2525
  %2653 = vmatpush1.bf16.msra.mxu0 %v2524
  %2654 = vmatprep.subr.bf16.mxu0 %v2527
  %2655 = vmatpush1.bf16.msra.mxu0 %v2526
  %2656 = vmatprep.subr.bf16.mxu0 %v2529
  %2657 = vmatpush1.bf16.msra.mxu0 %v2528
  %2658 = vmatprep.subr.bf16.mxu0 %v2531
  %2659 = vmatpush1.bf16.msra.mxu0 %v2530
  %2660 = vmatprep.subr.bf16.mxu0 %v2533
  %2661 = vmatpush1.bf16.msra.mxu0 %v2532
  %2662 = vmatprep.mubr.bf16.mxu0 %v2231
  %2663 = vmatmul.mubr.bf16.gmra.mrb[0].mxu0 %v2230
  %v2664 = vpop.f32.mrb[0].mxu0
  %v2665 = vadd.f32 %v2303, %v2664
  %v2666 = vpop.f32.mrb[0].mxu0
  %v2667 = vadd.f32 %v2307, %v2666
  %v2668 = vpop.f32.mrb[0].mxu0
  %v2669 = vpop.f32.mrb[0].mxu0
  %2670 = vdwg.mxu0
  %2671 = vmatprep.subr.bf16.mxu0 %v2535
  %2672 = vmatpush1.bf16.msra.mxu0 %v2534
  %2673 = vmatprep.subr.bf16.mxu0 %v2537
  %2674 = vmatpush1.bf16.msra.mxu0 %v2536
  %2675 = vmatprep.subr.bf16.mxu0 %v2539
  %2676 = vmatpush1.bf16.msra.mxu0 %v2538
  %2677 = vmatprep.subr.bf16.mxu0 %v2541
  %2678 = vmatpush1.bf16.msra.mxu0 %v2540
  %2679 = vmatprep.subr.bf16.mxu0 %v2543
  %2680 = vmatpush1.bf16.msra.mxu0 %v2542
  %2681 = vmatprep.subr.bf16.mxu0 %v2545
  %2682 = vmatpush1.bf16.msra.mxu0 %v2544
  %2683 = vmatprep.subr.bf16.mxu0 %v2547
  %2684 = vmatpush1.bf16.msra.mxu0 %v2546
  %2685 = vmatprep.subr.bf16.mxu0 %v2549
  %2686 = vmatpush1.bf16.msra.mxu0 %v2548
  %2687 = vmatprep.subr.bf16.mxu0 %v2551
  %2688 = vmatpush1.bf16.msra.mxu0 %v2550
  %2689 = vmatprep.subr.bf16.mxu0 %v2553
  %2690 = vmatpush1.bf16.msra.mxu0 %v2552
  %2691 = vmatprep.subr.bf16.mxu0 %v2555
  %2692 = vmatpush1.bf16.msra.mxu0 %v2554
  %2693 = vmatprep.subr.bf16.mxu0 %v2557
  %2694 = vmatpush1.bf16.msra.mxu0 %v2556
  %2695 = vmatprep.subr.bf16.mxu0 %v2559
  %2696 = vmatpush1.bf16.msra.mxu0 %v2558
  %2697 = vmatprep.subr.bf16.mxu0 %v2561
  %2698 = vmatpush1.bf16.msra.mxu0 %v2560
  %2699 = vmatprep.subr.bf16.mxu0 %v2563
  %2700 = vmatpush1.bf16.msra.mxu0 %v2562
  %2701 = vmatprep.subr.bf16.mxu0 %v2565
  %2702 = vmatpush1.bf16.msra.mxu0 %v2564
  %2703 = vmatprep.mubr.bf16.mxu0 %v2233
  %2704 = vmatmul.mubr.bf16.gmra.mrb[0].mxu0 %v2232
  %v2705 = vpop.f32.mrb[0].mxu0
  %v2706 = vadd.f32 %v2665, %v2705
  %v2707 = vpop.f32.mrb[0].mxu0
  %v2708 = vadd.f32 %v2667, %v2707
  %v2709 = vpop.f32.mrb[0].mxu0
  %v2710 = vpop.f32.mrb[0].mxu0
  %2711 = vdwg.mxu0
  %v2712 = vmax.f32 %v2706, 0.0
  %v2713 = vmax.f32 %v2708, 0.0
  %v2714 = vpack.c.bf16 %v2712, %v2712
  %v2715 = vpack.c.bf16 %v2713, %v2713
  %v2716 = vld [vmem:[%s5] sm:$0xff]
  %v2717 = vld [vmem:[%s5 + $0x8] sm:$0xff]
  %v2718 = vld [vmem:[%s5 + $0x10] sm:$0xff]
  %v2719 = vld [vmem:[%s5 + $0x18] sm:$0xff]
  %v2720 = vld [vmem:[%s5 + $0x20] sm:$0xff]
  %v2721 = vld [vmem:[%s5 + $0x28] sm:$0xff]
  %v2722 = vld [vmem:[%s5 + $0x30] sm:$0xff]
  %v2723 = vld [vmem:[%s5 + $0x38] sm:$0xff]
  %v2724 = vld [vmem:[%s5 + $0x40] sm:$0xff]
  %v2725 = vld [vmem:[%s5 + $0x48] sm:$0xff]
  %v2726 = vld [vmem:[%s5 + $0x50] sm:$0xff]
  %v2727 = vld [vmem:[%s5 + $0x58] sm:$0xff]
  %v2728 = vld [vmem:[%s5 + $0x60] sm:$0xff]
  %v2729 = vld [vmem:[%s5 + $0x68] sm:$0xff]
  %v2730 = vld [vmem:[%s5 + $0x70] sm:$0xff]
  %v2731 = vld [vmem:[%s5 + $0x78] sm:$0xff]
  %v2732 = vld [vmem:[%s5 + $0x80] sm:$0xff]
  %v2733 = vld [vmem:[%s5 + $0x88] sm:$0xff]
  %v2734 = vld [vmem:[%s5 + $0x90] sm:$0xff]
  %v2735 = vld [vmem:[%s5 + $0x98] sm:$0xff]
  %v2736 = vld [vmem:[%s5 + $0xa0] sm:$0xff]
  %v2737 = vld [vmem:[%s5 + $0xa8] sm:$0xff]
  %v2738 = vld [vmem:[%s5 + $0xb0] sm:$0xff]
  %v2739 = vld [vmem:[%s5 + $0xb8] sm:$0xff]
  %v2740 = vld [vmem:[%s5 + $0xc0] sm:$0xff]
  %v2741 = vld [vmem:[%s5 + $0xc8] sm:$0xff]
  %v2742 = vld [vmem:[%s5 + $0xd0] sm:$0xff]
  %v2743 = vld [vmem:[%s5 + $0xd8] sm:$0xff]
  %v2744 = vld [vmem:[%s5 + $0xe0] sm:$0xff]
  %v2745 = vld [vmem:[%s5 + $0xe8] sm:$0xff]
  %v2746 = vld [vmem:[%s5 + $0xf0] sm:$0xff]
  %v2747 = vld [vmem:[%s5 + $0xf8] sm:$0xff]
  %v2748 = vld [vmem:[%s6] sm:$0x3]
  %v2750 = vlaneseq
  %v2751 = vshrl.u32 %v2750, 7
  %v2752 = vsub.s32 0, %v2751
  %v2753 = vrot.slane %v2748, %v2752
  %v2754 = vlaneseq
  %v2755 = vshrl.u32 %v2754, 7
  %v2756 = vsub.s32 1, %v2755
  %v2757 = vrot.slane %v2748, %v2756
  %v2792 = vunpack.c.l.b16 %v2716
  %v2793 = vunpack.c.h.b16 %v2716
  %v2794 = vunpack.c.l.b16 %v2717
  %v2795 = vunpack.c.h.b16 %v2717
  %v2796 = vunpack.c.l.b16 %v2718
  %v2797 = vunpack.c.h.b16 %v2718
  %v2798 = vunpack.c.l.b16 %v2719
  %v2799 = vunpack.c.h.b16 %v2719
  %v2800 = vunpack.c.l.b16 %v2720
  %v2801 = vunpack.c.h.b16 %v2720
  %v2802 = vunpack.c.l.b16 %v2721
  %v2803 = vunpack.c.h.b16 %v2721
  %v2804 = vunpack.c.l.b16 %v2722
  %v2805 = vunpack.c.h.b16 %v2722
  %v2806 = vunpack.c.l.b16 %v2723
  %v2807 = vunpack.c.h.b16 %v2723
  %v2808 = vunpack.c.l.b16 %v2724
  %v2809 = vunpack.c.h.b16 %v2724
  %v2810 = vunpack.c.l.b16 %v2725
  %v2811 = vunpack.c.h.b16 %v2725
  %v2812 = vunpack.c.l.b16 %v2726
  %v2813 = vunpack.c.h.b16 %v2726
  %v2814 = vunpack.c.l.b16 %v2727
  %v2815 = vunpack.c.h.b16 %v2727
  %v2816 = vunpack.c.l.b16 %v2728
  %v2817 = vunpack.c.h.b16 %v2728
  %v2818 = vunpack.c.l.b16 %v2729
  %v2819 = vunpack.c.h.b16 %v2729
  %v2820 = vunpack.c.l.b16 %v2730
  %v2821 = vunpack.c.h.b16 %v2730
  %v2822 = vunpack.c.l.b16 %v2731
  %v2823 = vunpack.c.h.b16 %v2731
  %v2824 = vunpack.c.l.b16 %v2732
  %v2825 = vunpack.c.h.b16 %v2732
  %v2826 = vunpack.c.l.b16 %v2733
  %v2827 = vunpack.c.h.b16 %v2733
  %v2828 = vunpack.c.l.b16 %v2734
  %v2829 = vunpack.c.h.b16 %v2734
  %v2830 = vunpack.c.l.b16 %v2735
  %v2831 = vunpack.c.h.b16 %v2735
  %v2832 = vunpack.c.l.b16 %v2736
  %v2833 = vunpack.c.h.b16 %v2736
  %v2834 = vunpack.c.l.b16 %v2737
  %v2835 = vunpack.c.h.b16 %v2737
  %v2836 = vunpack.c.l.b16 %v2738
  %v2837 = vunpack.c.h.b16 %v2738
  %v2838 = vunpack.c.l.b16 %v2739
  %v2839 = vunpack.c.h.b16 %v2739
  %v2840 = vunpack.c.l.b16 %v2740
  %v2841 = vunpack.c.h.b16 %v2740
  %v2842 = vunpack.c.l.b16 %v2741
  %v2843 = vunpack.c.h.b16 %v2741
  %v2844 = vunpack.c.l.b16 %v2742
  %v2845 = vunpack.c.h.b16 %v2742
  %v2846 = vunpack.c.l.b16 %v2743
  %v2847 = vunpack.c.h.b16 %v2743
  %v2848 = vunpack.c.l.b16 %v2744
  %v2849 = vunpack.c.h.b16 %v2744
  %v2850 = vunpack.c.l.b16 %v2745
  %v2851 = vunpack.c.h.b16 %v2745
  %v2852 = vunpack.c.l.b16 %v2746
  %v2853 = vunpack.c.h.b16 %v2746
  %v2854 = vunpack.c.l.b16 %v2747
  %v2855 = vunpack.c.h.b16 %v2747
  %v2856 = vpack.c.b16 %v2794, %v2792
  %v2857 = vpack.c.b16 %v2795, %v2793
  %v2858 = vpack.c.b16 %v2798, %v2796
  %v2859 = vpack.c.b16 %v2799, %v2797
  %v2860 = vpack.c.b16 %v2802, %v2800
  %v2861 = vpack.c.b16 %v2803, %v2801
  %v2862 = vpack.c.b16 %v2806, %v2804
  %v2863 = vpack.c.b16 %v2807, %v2805
  %v2864 = vpack.c.b16 %v2810, %v2808
  %v2865 = vpack.c.b16 %v2811, %v2809
  %v2866 = vpack.c.b16 %v2814, %v2812
  %v2867 = vpack.c.b16 %v2815, %v2813
  %v2868 = vpack.c.b16 %v2818, %v2816
  %v2869 = vpack.c.b16 %v2819, %v2817
  %v2870 = vpack.c.b16 %v2822, %v2820
  %v2871 = vpack.c.b16 %v2823, %v2821
  %v2872 = vpack.c.b16 %v2826, %v2824
  %v2873 = vpack.c.b16 %v2827, %v2825
  %v2874 = vpack.c.b16 %v2830, %v2828
  %v2875 = vpack.c.b16 %v2831, %v2829
  %v2876 = vpack.c.b16 %v2834, %v2832
  %v2877 = vpack.c.b16 %v2835, %v2833
  %v2878 = vpack.c.b16 %v2838, %v2836
  %v2879 = vpack.c.b16 %v2839, %v2837
  %v2880 = vpack.c.b16 %v2842, %v2840
  %v2881 = vpack.c.b16 %v2843, %v2841
  %v2882 = vpack.c.b16 %v2846, %v2844
  %v2883 = vpack.c.b16 %v2847, %v2845
  %v2884 = vpack.c.b16 %v2850, %v2848
  %v2885 = vpack.c.b16 %v2851, %v2849
  %v2886 = vpack.c.b16 %v2854, %v2852
  %v2887 = vpack.c.b16 %v2855, %v2853
  %2920 = vmatprep.subr.bf16.mxu0 %v2857
  %2921 = vmatpush1.bf16.msra.mxu0 %v2856
  %2922 = vmatprep.subr.bf16.mxu0 %v2859
  %2923 = vmatpush1.bf16.msra.mxu0 %v2858
  %2924 = vmatprep.subr.bf16.mxu0 %v2861
  %2925 = vmatpush1.bf16.msra.mxu0 %v2860
  %2926 = vmatprep.subr.bf16.mxu0 %v2863
  %2927 = vmatpush1.bf16.msra.mxu0 %v2862
  %2928 = vmatprep.subr.bf16.mxu0 %v2865
  %2929 = vmatpush1.bf16.msra.mxu0 %v2864
  %2930 = vmatprep.subr.bf16.mxu0 %v2867
  %2931 = vmatpush1.bf16.msra.mxu0 %v2866
  %2932 = vmatprep.subr.bf16.mxu0 %v2869
  %2933 = vmatpush1.bf16.msra.mxu0 %v2868
  %2934 = vmatprep.subr.bf16.mxu0 %v2871
  %2935 = vmatpush1.bf16.msra.mxu0 %v2870
  %2936 = vmatprep.subr.bf16.mxu0 %v2873
  %2937 = vmatpush1.bf16.msra.mxu0 %v2872
  %2938 = vmatprep.subr.bf16.mxu0 %v2875
  %2939 = vmatpush1.bf16.msra.mxu0 %v2874
  %2940 = vmatprep.subr.bf16.mxu0 %v2877
  %2941 = vmatpush1.bf16.msra.mxu0 %v2876
  %2942 = vmatprep.subr.bf16.mxu0 %v2879
  %2943 = vmatpush1.bf16.msra.mxu0 %v2878
  %2944 = vmatprep.subr.bf16.mxu0 %v2881
  %2945 = vmatpush1.bf16.msra.mxu0 %v2880
  %2946 = vmatprep.subr.bf16.mxu0 %v2883
  %2947 = vmatpush1.bf16.msra.mxu0 %v2882
  %2948 = vmatprep.subr.bf16.mxu0 %v2885
  %2949 = vmatpush1.bf16.msra.mxu0 %v2884
  %2950 = vmatprep.subr.bf16.mxu0 %v2887
  %2951 = vmatpush1.bf16.msra.mxu0 %v2886
  %2952 = vmatprep.mubr.bf16.mxu0 %v2715
  %2953 = vmatmul.mubr.bf16.gmra.mrb[0].mxu0 %v2714
  %v2954 = vpop.f32.mrb[0].mxu0
  %v2955 = vadd.f32 %v2753, %v2954
  %v2956 = vpop.f32.mrb[0].mxu0
  %v2957 = vadd.f32 %v2757, %v2956
  %v2958 = vpop.f32.mrb[0].mxu0
  %v2959 = vpop.f32.mrb[0].mxu0
  %2960 = vdwg.mxu0
  %v2961 = vmax.f32 %v2955, 0.0
  %v2962 = vmax.f32 %v2957, 0.0
  %v2963 = vpack.c.bf16 %v2961, %v2961
  %v2964 = vpack.c.bf16 %v2962, %v2962
  %v2965 = vld [vmem:[%s7] sm:$0xf]
  %v2966 = vld [vmem:[%s7 + $0x4] sm:$0xf]
  %v2967 = vld [vmem:[%s7 + $0x8] sm:$0xf]
  %v2968 = vld [vmem:[%s7 + $0xc] sm:$0xf]
  %v2969 = vld [vmem:[%s7 + $0x10] sm:$0xf]
  %v2970 = vld [vmem:[%s7 + $0x14] sm:$0xf]
  %v2971 = vld [vmem:[%s7 + $0x18] sm:$0xf]
  %v2972 = vld [vmem:[%s7 + $0x1c] sm:$0xf]
  %v2973 = vld [vmem:[%s7 + $0x20] sm:$0xf]
  %v2974 = vld [vmem:[%s7 + $0x24] sm:$0xf]
  %v2975 = vld [vmem:[%s7 + $0x28] sm:$0xf]
  %v2976 = vld [vmem:[%s7 + $0x2c] sm:$0xf]
  %v2977 = vld [vmem:[%s7 + $0x30] sm:$0xf]
  %v2978 = vld [vmem:[%s7 + $0x34] sm:$0xf]
  %v2979 = vld [vmem:[%s7 + $0x38] sm:$0xf]
  %v2980 = vld [vmem:[%s7 + $0x3c] sm:$0xf]
  %v2981 = vld [vmem:[%s7 + $0x40] sm:$0xf]
  %v2982 = vld [vmem:[%s7 + $0x44] sm:$0xf]
  %v2983 = vld [vmem:[%s7 + $0x48] sm:$0xf]
  %v2984 = vld [vmem:[%s7 + $0x4c] sm:$0xf]
  %v2985 = vld [vmem:[%s7 + $0x50] sm:$0xf]
  %v2986 = vld [vmem:[%s7 + $0x54] sm:$0xf]
  %v2987 = vld [vmem:[%s7 + $0x58] sm:$0xf]
  %v2988 = vld [vmem:[%s7 + $0x5c] sm:$0xf]
  %v2989 = vld [vmem:[%s7 + $0x60] sm:$0xf]
  %v2990 = vld [vmem:[%s7 + $0x64] sm:$0xf]
  %v2991 = vld [vmem:[%s7 + $0x68] sm:$0xf]
  %v2992 = vld [vmem:[%s7 + $0x6c] sm:$0xf]
  %v2993 = vld [vmem:[%s7 + $0x70] sm:$0xf]
  %v2994 = vld [vmem:[%s7 + $0x74] sm:$0xf]
  %v2995 = vld [vmem:[%s7 + $0x78] sm:$0xf]
  %v2996 = vld [vmem:[%s7 + $0x7c] sm:$0xf]
  %v2997 = vld [vmem:[%s8] sm:$0x1]
  %v2999 = vlaneseq
  %v3000 = vshrl.u32 %v2999, 7
  %v3001 = vsub.s32 0, %v3000
  %v3002 = vrot.slane %v2997, %v3001
  %v3036 = vunpack.c.l.b16 %v2965
  %v3037 = vunpack.c.l.b16 %v2966
  %v3038 = vunpack.c.l.b16 %v2967
  %v3039 = vunpack.c.l.b16 %v2968
  %v3040 = vunpack.c.l.b16 %v2969
  %v3041 = vunpack.c.l.b16 %v2970
  %v3042 = vunpack.c.l.b16 %v2971
  %v3043 = vunpack.c.l.b16 %v2972
  %v3044 = vunpack.c.l.b16 %v2973
  %v3045 = vunpack.c.l.b16 %v2974
  %v3046 = vunpack.c.l.b16 %v2975
  %v3047 = vunpack.c.l.b16 %v2976
  %v3048 = vunpack.c.l.b16 %v2977
  %v3049 = vunpack.c.l.b16 %v2978
  %v3050 = vunpack.c.l.b16 %v2979
  %v3051 = vunpack.c.l.b16 %v2980
  %v3052 = vunpack.c.l.b16 %v2981
  %v3053 = vunpack.c.l.b16 %v2982
  %v3054 = vunpack.c.l.b16 %v2983
  %v3055 = vunpack.c.l.b16 %v2984
  %v3056 = vunpack.c.l.b16 %v2985
  %v3057 = vunpack.c.l.b16 %v2986
  %v3058 = vunpack.c.l.b16 %v2987
  %v3059 = vunpack.c.l.b16 %v2988
  %v3060 = vunpack.c.l.b16 %v2989
  %v3061 = vunpack.c.l.b16 %v2990
  %v3062 = vunpack.c.l.b16 %v2991
  %v3063 = vunpack.c.l.b16 %v2992
  %v3064 = vunpack.c.l.b16 %v2993
  %v3065 = vunpack.c.l.b16 %v2994
  %v3066 = vunpack.c.l.b16 %v2995
  %v3067 = vunpack.c.l.b16 %v2996
  %v3068 = vpack.c.b16 %v3037, %v3036
  %v3069 = vpack.c.b16 %v3039, %v3038
  %v3070 = vpack.c.b16 %v3041, %v3040
  %v3071 = vpack.c.b16 %v3043, %v3042
  %v3072 = vpack.c.b16 %v3045, %v3044
  %v3073 = vpack.c.b16 %v3047, %v3046
  %v3074 = vpack.c.b16 %v3049, %v3048
  %v3075 = vpack.c.b16 %v3051, %v3050
  %v3076 = vpack.c.b16 %v3053, %v3052
  %v3077 = vpack.c.b16 %v3055, %v3054
  %v3078 = vpack.c.b16 %v3057, %v3056
  %v3079 = vpack.c.b16 %v3059, %v3058
  %v3080 = vpack.c.b16 %v3061, %v3060
  %v3081 = vpack.c.b16 %v3063, %v3062
  %v3082 = vpack.c.b16 %v3065, %v3064
  %v3083 = vpack.c.b16 %v3067, %v3066
  %3100 = vmatprep.subr.bf16.mxu0 0
  %3101 = vmatpush1.bf16.msra.mxu0 %v3068
  %3102 = vmatprep.subr.bf16.mxu0 0
  %3103 = vmatpush1.bf16.msra.mxu0 %v3069
  %3104 = vmatprep.subr.bf16.mxu0 0
  %3105 = vmatpush1.bf16.msra.mxu0 %v3070
  %3106 = vmatprep.subr.bf16.mxu0 0
  %3107 = vmatpush1.bf16.msra.mxu0 %v3071
  %3108 = vmatprep.subr.bf16.mxu0 0
  %3109 = vmatpush1.bf16.msra.mxu0 %v3072
  %3110 = vmatprep.subr.bf16.mxu0 0
  %3111 = vmatpush1.bf16.msra.mxu0 %v3073
  %3112 = vmatprep.subr.bf16.mxu0 0
  %3113 = vmatpush1.bf16.msra.mxu0 %v3074
  %3114 = vmatprep.subr.bf16.mxu0 0
  %3115 = vmatpush1.bf16.msra.mxu0 %v3075
  %3116 = vmatprep.subr.bf16.mxu0 0
  %3117 = vmatpush1.bf16.msra.mxu0 %v3076
  %3118 = vmatprep.subr.bf16.mxu0 0
  %3119 = vmatpush1.bf16.msra.mxu0 %v3077
  %3120 = vmatprep.subr.bf16.mxu0 0
  %3121 = vmatpush1.bf16.msra.mxu0 %v3078
  %3122 = vmatprep.subr.bf16.mxu0 0
  %3123 = vmatpush1.bf16.msra.mxu0 %v3079
  %3124 = vmatprep.subr.bf16.mxu0 0
  %3125 = vmatpush1.bf16.msra.mxu0 %v3080
  %3126 = vmatprep.subr.bf16.mxu0 0
  %3127 = vmatpush1.bf16.msra.mxu0 %v3081
  %3128 = vmatprep.subr.bf16.mxu0 0
  %3129 = vmatpush1.bf16.msra.mxu0 %v3082
  %3130 = vmatprep.subr.bf16.mxu0 0
  %3131 = vmatpush1.bf16.msra.mxu0 %v3083
  %3132 = vmatprep.mubr.bf16.mxu0 %v2964
  %3133 = vmatmul.mubr.bf16.gmra.mrb[0].mxu0 %v2963
  %v3134 = vpop.f32.mrb[0].mxu0
  %v3135 = vadd.f32 %v3002, %v3134
  %v3136 = vpop.f32.mrb[0].mxu0
  %v3137 = vpop.f32.mrb[0].mxu0
  %v3138 = vpop.f32.mrb[0].mxu0
  %3139 = vdwg.mxu0
  %v3140 = vmax.f32 %v3135, 0.0
  %v3141 = vpack.c.bf16 %v3140, %v3140
  %v3142 = vld [vmem:[%s9] sm:$0xf]
  %v3143 = vld [vmem:[%s9 + $0x4] sm:$0xf]
  %v3144 = vld [vmem:[%s9 + $0x8] sm:$0xf]
  %v3145 = vld [vmem:[%s9 + $0xc] sm:$0xf]
  %v3146 = vld [vmem:[%s9 + $0x10] sm:$0xf]
  %v3147 = vld [vmem:[%s9 + $0x14] sm:$0xf]
  %v3148 = vld [vmem:[%s9 + $0x18] sm:$0xf]
  %v3149 = vld [vmem:[%s9 + $0x1c] sm:$0xf]
  %v3150 = vld [vmem:[%s9 + $0x20] sm:$0xf]
  %v3151 = vld [vmem:[%s9 + $0x24] sm:$0xf]
  %v3152 = vld [vmem:[%s9 + $0x28] sm:$0xf]
  %v3153 = vld [vmem:[%s9 + $0x2c] sm:$0xf]
  %v3154 = vld [vmem:[%s9 + $0x30] sm:$0xf]
  %v3155 = vld [vmem:[%s9 + $0x34] sm:$0xf]
  %v3156 = vld [vmem:[%s9 + $0x38] sm:$0xf]
  %v3157 = vld [vmem:[%s9 + $0x3c] sm:$0xf]
  %v3158 = vld [vmem:[%s10] sm:$0x1]
  %v3160 = vlaneseq
  %v3161 = vshrl.u32 %v3160, 7
  %v3162 = vsub.s32 0, %v3161
  %v3163 = vrot.slane %v3158, %v3162
  %v3181 = vunpack.c.l.b16 %v3142
  %v3182 = vunpack.c.l.b16 %v3143
  %v3183 = vunpack.c.l.b16 %v3144
  %v3184 = vunpack.c.l.b16 %v3145
  %v3185 = vunpack.c.l.b16 %v3146
  %v3186 = vunpack.c.l.b16 %v3147
  %v3187 = vunpack.c.l.b16 %v3148
  %v3188 = vunpack.c.l.b16 %v3149
  %v3189 = vunpack.c.l.b16 %v3150
  %v3190 = vunpack.c.l.b16 %v3151
  %v3191 = vunpack.c.l.b16 %v3152
  %v3192 = vunpack.c.l.b16 %v3153
  %v3193 = vunpack.c.l.b16 %v3154
  %v3194 = vunpack.c.l.b16 %v3155
  %v3195 = vunpack.c.l.b16 %v3156
  %v3196 = vunpack.c.l.b16 %v3157
  %v3197 = vpack.c.b16 %v3182, %v3181
  %v3198 = vpack.c.b16 %v3184, %v3183
  %v3199 = vpack.c.b16 %v3186, %v3185
  %v3200 = vpack.c.b16 %v3188, %v3187
  %v3201 = vpack.c.b16 %v3190, %v3189
  %v3202 = vpack.c.b16 %v3192, %v3191
  %v3203 = vpack.c.b16 %v3194, %v3193
  %v3204 = vpack.c.b16 %v3196, %v3195
  %3213 = vmatprep.subr.bf16.mxu0 0
  %3214 = vmatpush1.bf16.msra.mxu0 %v3197
  %3215 = vmatprep.subr.bf16.mxu0 0
  %3216 = vmatpush1.bf16.msra.mxu0 %v3198
  %3217 = vmatprep.subr.bf16.mxu0 0
  %3218 = vmatpush1.bf16.msra.mxu0 %v3199
  %3219 = vmatprep.subr.bf16.mxu0 0
  %3220 = vmatpush1.bf16.msra.mxu0 %v3200
  %3221 = vmatprep.subr.bf16.mxu0 0
  %3222 = vmatpush1.bf16.msra.mxu0 %v3201
  %3223 = vmatprep.subr.bf16.mxu0 0
  %3224 = vmatpush1.bf16.msra.mxu0 %v3202
  %3225 = vmatprep.subr.bf16.mxu0 0
  %3226 = vmatpush1.bf16.msra.mxu0 %v3203
  %3227 = vmatprep.subr.bf16.mxu0 0
  %3228 = vmatpush1.bf16.msra.mxu0 %v3204
  %3229 = vmatprep.subr.bf16.mxu0 0
  %3230 = vmatpush1.bf16.msra.mxu0 0
  %3231 = vmatprep.subr.bf16.mxu0 0
  %3232 = vmatpush1.bf16.msra.mxu0 0
  %3233 = vmatprep.subr.bf16.mxu0 0
  %3234 = vmatpush1.bf16.msra.mxu0 0
  %3235 = vmatprep.subr.bf16.mxu0 0
  %3236 = vmatpush1.bf16.msra.mxu0 0
  %3237 = vmatprep.subr.bf16.mxu0 0
  %3238 = vmatpush1.bf16.msra.mxu0 0
  %3239 = vmatprep.subr.bf16.mxu0 0
  %3240 = vmatpush1.bf16.msra.mxu0 0
  %3241 = vmatprep.subr.bf16.mxu0 0
  %3242 = vmatpush1.bf16.msra.mxu0 0
  %3243 = vmatprep.subr.bf16.mxu0 0
  %3244 = vmatpush1.bf16.msra.mxu0 0
  %3245 = vmatprep.mubr.bf16.mxu0 0
  %3246 = vmatmul.mubr.bf16.gmra.mrb[0].mxu0 %v3141
  %v3247 = vpop.f32.mrb[0].mxu0
  %v3248 = vadd.f32 %v3163, %v3247
  %v3249 = vpop.f32.mrb[0].mxu0
  %v3250 = vpop.f32.mrb[0].mxu0
  %v3251 = vpop.f32.mrb[0].mxu0
  %3252 = vdwg.mxu0
  %vm3253 = vcmask 15360
  %3254 = vst.msk [vmem:[%s11] sm:$0xff] %vm3253, %v3248
  // Predicated region
  $region46: #{fused_forward.1} parent=0 // pred_check
    _
  $region47: #{fused_forward.1} parent=0 // pred_check_branch
    %3256 = sbr.rel (0) target = $region49
  $region48: #{fused_forward.1} parent=0 // pred_region
    _
  $region49: #{fused_forward.1} parent=0 // pred_fallthru
    _
  // Predicated region
  $region50: #{fused_forward.1} parent=0 // pred_check
    _
  $region51: #{fused_forward.1} parent=0 // pred_check_branch
    %3258 = sbr.rel (0) target = $region53
  $region52: #{fused_forward.1} parent=0 // pred_region
    _
  $region53: #{fused_forward.1} parent=0 // pred_fallthru
    _

</llo_original>
